<compile_context>
chip_gen: v6e
topology: v6e:2x2x1
jax: 0.10.0
libtpu: 0.0.40
codegen_flags: <defaults>
</compile_context>

<pallas_src>
import functools
import math

import jax
import jax.numpy as jnp
import numpy as np
from jax.experimental import pallas as pl
from jax.experimental.pallas import tpu as pltpu


# ------------------------------ fused kernel --------------------------------

def _resident(nd):
    """Index map for a weight that stays resident across all grid steps."""
    return lambda b: (0,) * nd


def _decoder_layer_kernel(*refs, H, eps, has_pos, mm_dtype):
    """One grid step == one batch element of the full decoder layer."""
    if has_pos:
        (embed_ref, mem_ref, src_ref, pos_ref,
         sa_w, sa_b, ca_w, ca_b,
         ff_w1, ff_b1, ff_w2, ff_b2, ln_ref, y_ref) = refs
    else:
        (embed_ref, mem_ref, src_ref,
         sa_w, sa_b, ca_w, ca_b,
         ff_w1, ff_b1, ff_w2, ff_b2, ln_ref, y_ref) = refs
        pos_ref = None

    f32 = jnp.float32
    L, D = y_ref.shape
    dh = D // H

    def cast(x):
        return x.astype(mm_dtype)

    tgt = embed_ref[...].astype(f32)          # (L, D) learned queries (shared over batch)
    mem = mem_ref[...].astype(f32)            # (S, D)
    src = src_ref[...].astype(f32)            # (S, D)  (== module's `out` argument)
    pos = pos_ref[...].astype(f32) if has_pos else None

    def with_pos(x):
        return x + pos if has_pos else x

    def layer_norm(x, i):
        g = ln_ref[2 * i:2 * i + 1, :]        # (1, D)
        b = ln_ref[2 * i + 1:2 * i + 2, :]    # (1, D)
        mu = jnp.mean(x, axis=-1, keepdims=True)
        var = jnp.mean(jnp.square(x - mu), axis=-1, keepdims=True)
        return (x - mu) * jax.lax.rsqrt(var + eps) * g + b

    def mha(q_in, k_in, v_in, w_ref, b_ref):
        """w_ref: (4, D, D) = [Wq*scale, Wk, Wv, Wo] (in, out); b_ref: (4, D)."""
        # Full-width, lane-dense projections (MXU accumulates across all heads).
        q = jnp.dot(cast(q_in), cast(w_ref[0]), preferred_element_type=f32) + b_ref[0:1, :]
        k = jnp.dot(cast(k_in), cast(w_ref[1]), preferred_element_type=f32) + b_ref[1:2, :]
        v = jnp.dot(cast(v_in), cast(w_ref[2]), preferred_element_type=f32) + b_ref[2:3, :]
        ctx_heads = []
        for h in range(H):                    # small static unroll; per-head score/context only
            sl = slice(h * dh, (h + 1) * dh)
            qh, kh, vh = q[:, sl], k[:, sl], v[:, sl]
            s = jax.lax.dot_general(qh, kh, (((1,), (1,)), ((), ())),
                                    preferred_element_type=f32)      # (L, S)
            s = s - jnp.max(s, axis=-1, keepdims=True)
            p = jnp.exp(s)
            p = p * pl.reciprocal(jnp.sum(p, axis=-1, keepdims=True), approx=True)
            ctx_heads.append(jnp.dot(p, vh, preferred_element_type=f32))  # (L, dh)
        ctx = jnp.concatenate(ctx_heads, axis=-1)                          # (L, D)
        # Single fused output projection (no scratch bounce, no per-head adds).
        return jnp.dot(cast(ctx), cast(w_ref[3]), preferred_element_type=f32) + b_ref[3:4, :]

    # --- "self-attention" block: q = tgt+pos, k = memory+pos, v = memory ----
    t2 = mha(with_pos(tgt), with_pos(mem), mem, sa_w, sa_b)
    tgt = layer_norm(tgt + t2, 0)

    # --- cross-attention block: q = tgt+pos, k = out+pos, v = out -----------
    t2 = mha(with_pos(tgt), with_pos(src), src, ca_w, ca_b)
    tgt = layer_norm(tgt + t2, 1)

    # --- feed-forward: linear1 -> relu -> linear2 (dropout = identity) ------
    h1 = jnp.maximum(
        jnp.dot(cast(tgt), cast(ff_w1[...]), preferred_element_type=f32) + ff_b1[...], 0.0)
    t2 = jnp.dot(cast(h1), cast(ff_w2[...]), preferred_element_type=f32) + ff_b2[...]
    tgt = layer_norm(tgt + t2, 2)

    y_ref[...] = tgt.astype(y_ref.dtype)


# --------------------------- parameter preparation ---------------------------

def prepare_params(raw, nhead):
    """Pack PyTorch-layout parameters once for the fused kernel:
       * per-attention weight pack (4, D, D) = [Wq*scale, Wk, Wv, Wo], all (in, out)
       * per-attention bias pack   (4, D)    = [bq*scale, bk, bv, bo]
       * FF weights as (in, out), biases as (1, F)/(1, D) rows
       * all six LayerNorm vectors in one (6, D) slab."""
    D = raw["embed"].shape[1]
    dh = D // nhead
    scale = 1.0 / math.sqrt(dh)

    def pack_attn(in_w, in_b, out_w, out_b):
        w = jnp.stack([in_w[:D].T * scale,        # Wq  (scale folded in)
                       in_w[D:2 * D].T,           # Wk
                       in_w[2 * D:].T,            # Wv
                       out_w.T])                  # Wo
        b = jnp.stack([in_b[:D] * scale, in_b[D:2 * D], in_b[2 * D:], out_b])
        return w, b

    sa_w, sa_b = pack_attn(raw["sa_in_w"], raw["sa_in_b"],
                           raw["sa_out_w"], raw["sa_out_b"])
    ca_w, ca_b = pack_attn(raw["ca_in_w"], raw["ca_in_b"],
                           raw["ca_out_w"], raw["ca_out_b"])
    Fd = raw["ff1_w"].shape[1]
    ln = jnp.stack([raw["ln1_g"], raw["ln1_b"], raw["ln2_g"], raw["ln2_b"],
                    raw["ln3_g"], raw["ln3_b"]])
    return dict(embed=raw["embed"], sa_w=sa_w, sa_b=sa_b, ca_w=ca_w, ca_b=ca_b,
                ff_w1=raw["ff1_w"], ff_b1=raw["ff1_b"].reshape(1, Fd),
                ff_w2=raw["ff2_w"], ff_b2=raw["ff2_b"].reshape(1, D), ln=ln)


# ------------------------------ forward wrapper ------------------------------

def decoder_layer_forward(params, out, memory_list, layer_idx, nhead, pos=None,
                          mm_dtype=jnp.float32):
    """Matches TransformerDecoderLayer.forward (normalize_before=False, eval)."""
    memory = memory_list[layer_idx % len(memory_list)]
    S, B, D = memory.shape
    embed = params["embed"]                     # (L, D)
    L = embed.shape[0]
    assert L == S, "pos is added to both queries and keys -> L must equal S"
    has_pos = pos is not None

    def bm(x):                                  # (T, B, D) -> (B, T, D)
        return jnp.transpose(x, (1, 0, 2))

    args = [embed, bm(memory), bm(out)]
    in_specs = [
        pl.BlockSpec((L, D), lambda b: (0, 0)),              # embed: resident
        pl.BlockSpec((None, S, D), lambda b: (b, 0, 0)),      # memory per-batch
        pl.BlockSpec((None, S, D), lambda b: (b, 0, 0)),      # `out` per-batch
    ]
    if has_pos:
        args.append(bm(pos))
        in_specs.append(pl.BlockSpec((None, S, D), lambda b: (b, 0, 0)))

    weight_args = [params["sa_w"], params["sa_b"], params["ca_w"], params["ca_b"],
                   params["ff_w1"], params["ff_b1"], params["ff_w2"], params["ff_b2"],
                   params["ln"]]
    args += weight_args
    in_specs += [pl.BlockSpec(w.shape, _resident(w.ndim)) for w in weight_args]

    kernel = functools.partial(_decoder_layer_kernel, H=nhead, eps=1e-5,
                               has_pos=has_pos, mm_dtype=mm_dtype)

    # Advisory cost estimate so XLA schedules the wrapper transposes sensibly.
    Fd = params["ff_w1"].shape[1]
    attn_flops = 8 * L * D * D + 4 * L * S * D              # per batch, per attention
    flops = B * (2 * attn_flops + 4 * L * D * Fd)
    transcendentals = B * (2 * nhead * L * S + 3 * L)
    bytes_accessed = 4 * (L * D + (3 if has_pos else 2) * B * S * D
                          + 2 * (4 * D * D + 4 * D)
                          + 2 * D * Fd + Fd + D + 6 * D
                          + B * L * D)
    cost = pl.CostEstimate(flops=flops, transcendentals=transcendentals,
                           bytes_accessed=bytes_accessed)

    y = pl.pallas_call(
        kernel,
        out_shape=jax.ShapeDtypeStruct((B, L, D), jnp.float32),
        grid=(B,),
        in_specs=in_specs,
        out_specs=pl.BlockSpec((None, L, D), lambda b: (b, 0, 0)),
        compiler_params=pltpu.CompilerParams(dimension_semantics=("parallel",)),
        cost_estimate=cost,
    )(*args)

    return jnp.transpose(y, (1, 0, 2))          # back to (L, B, D)


# ----------------------------- parameter init --------------------------------

def init_params(key, hidden_dim, feature_size, dim_feedforward):
    num_queries = feature_size[0] * feature_size[1]
    D = hidden_dim
    ks = jax.random.split(key, 11)

    def u(k, shape, scale=0.1):
        return jax.random.uniform(k, shape, jnp.float32, -scale, scale)

    return dict(
        embed=jax.random.normal(ks[0], (num_queries, D), jnp.float32),
        sa_in_w=u(ks[1], (3 * D, D)), sa_in_b=u(ks[2], (3 * D,)),
        sa_out_w=u(ks[3], (D, D)), sa_out_b=jnp.zeros((D,), jnp.float32),
        ca_in_w=u(ks[4], (3 * D, D)), ca_in_b=u(ks[5], (3 * D,)),
        ca_out_w=u(ks[6], (D, D)), ca_out_b=jnp.zeros((D,), jnp.float32),
        ff1_w=u(ks[7], (D, dim_feedforward)),   # stored as (in, out) == W1^T
        ff1_b=u(ks[8], (dim_feedforward,)),
        ff2_w=u(ks[9], (dim_feedforward, D)),   # stored as (in, out) == W2^T
        ff2_b=u(ks[10], (D,)),
        ln1_g=jnp.ones((D,), jnp.float32), ln1_b=jnp.zeros((D,), jnp.float32),
        ln2_g=jnp.ones((D,), jnp.float32), ln2_b=jnp.zeros((D,), jnp.float32),
        ln3_g=jnp.ones((D,), jnp.float32), ln3_b=jnp.zeros((D,), jnp.float32),
    )


# --------------------------- pure-JAX reference ------------------------------

def _with_pos(x, pos):
    return x if pos is None else x + pos


def _ref_mha(query, key, value, in_w, in_b, out_w, out_b, nhead):
    L, B, D = query.shape
    S = key.shape[0]
    dh = D // nhead
    Wq, Wk, Wv = in_w[:D], in_w[D:2 * D], in_w[2 * D:]
    bq, bk, bv = in_b[:D], in_b[D:2 * D], in_b[2 * D:]
    q = (query @ Wq.T + bq).reshape(L, B * nhead, dh).transpose(1, 0, 2)
    k = (key @ Wk.T + bk).reshape(S, B * nhead, dh).transpose(1, 0, 2)
    v = (value @ Wv.T + bv).reshape(S, B * nhead, dh).transpose(1, 0, 2)
    s = jnp.einsum("bld,bsd->bls", q, k) / math.sqrt(dh)
    p = jax.nn.softmax(s, axis=-1)
    o = jnp.einsum("bls,bsd->bld", p, v).transpose(1, 0, 2).reshape(L * B, D)
    return (o @ out_w.T + out_b).reshape(L, B, D)


def _ref_ln(x, g, b, eps=1e-5):
    m = x.mean(-1, keepdims=True)
    v = ((x - m) ** 2).mean(-1, keepdims=True)
    return (x - m) * jax.lax.rsqrt(v + eps) * g + b


def _ref_forward(params, out, memory_list, layer_idx, nhead, pos=None):
    memory = memory_list[layer_idx % len(memory_list)]
    S, B, D = memory.shape
    tgt = jnp.broadcast_to(params["embed"][:, None, :],
                           (params["embed"].shape[0], B, D))
    tgt2 = _ref_mha(_with_pos(tgt, pos), _with_pos(memory, pos), memory,
                    params["sa_in_w"], params["sa_in_b"],
                    params["sa_out_w"], params["sa_out_b"], nhead)
    tgt = _ref_ln(tgt + tgt2, params["ln1_g"], params["ln1_b"])
    tgt2 = _ref_mha(_with_pos(tgt, pos), _with_pos(out, pos), out,
                    params["ca_in_w"], params["ca_in_b"],
                    params["ca_out_w"], params["ca_out_b"], nhead)
    tgt = _ref_ln(tgt + tgt2, params["ln2_g"], params["ln2_b"])
    h = jax.nn.relu(tgt.reshape(-1, D) @ params["ff1_w"] + params["ff1_b"])
    tgt2 = (h @ params["ff2_w"] + params["ff2_b"]).reshape(tgt.shape)
    return _ref_ln(tgt + tgt2, params["ln3_g"], params["ln3_b"])


# --------------------------------- main --------------------------------------

if __name__ == "__main__":
    hidden_dim, nhead, dim_feedforward = 32, 4, 64
    feature_size = (4, 4)            # num_queries = 16
    B = 2
    S = 16                           # memory / `out` sequence length (== num_queries)

    key = jax.random.PRNGKey(0)
    kp, km1, km2, ko, kpos = jax.random.split(key, 5)
    raw_params = init_params(kp, hidden_dim, feature_size, dim_feedforward)
    params = prepare_params(raw_params, nhead)      # packed once

    memory_list = [
        jax.random.normal(km1, (S, B, hidden_dim), jnp.float32),
        jax.random.normal(km2, (S, B, hidden_dim), jnp.float32),
    ]
    out = jax.random.normal(ko, (S, B, hidden_dim), jnp.float32)
    pos = 0.1 * jax.random.normal(kpos, (S, B, hidden_dim), jnp.float32)
    layer_idx = 3

    fwd = jax.jit(decoder_layer_forward,
                  static_argnames=("layer_idx", "nhead", "mm_dtype"))

    # with positional embedding (the model's normal path)
    y = jax.block_until_ready(fwd(params, out, memory_list,
                                  layer_idx=layer_idx, nhead=nhead, pos=pos))
    y_ref = _ref_forward(raw_params, out, memory_list, layer_idx, nhead, pos=pos)
    assert y.shape == (feature_size[0] * feature_size[1], B, hidden_dim)
    np.testing.assert_allclose(np.asarray(y), np.asarray(y_ref), rtol=2e-2, atol=2e-2)

    # pos=None path compiles a specialized kernel without the pos input
    y2 = jax.block_until_ready(fwd(params, out, memory_list,
                                   layer_idx=layer_idx, nhead=nhead, pos=None))
    y2_ref = _ref_forward(raw_params, out, memory_list, layer_idx, nhead, pos=None)
    np.testing.assert_allclose(np.asarray(y2), np.asarray(y2_ref), rtol=2e-2, atol=2e-2)

    print("KERNEL_OK")
</pallas_src>

<mosaic_0001>
module attributes {stable_mosaic.version = 11 : i64} {
  func.func @_decoder_layer_kernel(%arg0: i32, %arg1: memref<16x32xf32, #tpu.memory_space<vmem>>, %arg2: memref<1x16x32xf32, #tpu.memory_space<vmem>>, %arg3: memref<1x16x32xf32, #tpu.memory_space<vmem>>, %arg4: memref<1x16x32xf32, #tpu.memory_space<vmem>>, %arg5: memref<4x32x32xf32, #tpu.memory_space<vmem>>, %arg6: memref<4x32xf32, #tpu.memory_space<vmem>>, %arg7: memref<4x32x32xf32, #tpu.memory_space<vmem>>, %arg8: memref<4x32xf32, #tpu.memory_space<vmem>>, %arg9: memref<32x64xf32, #tpu.memory_space<vmem>>, %arg10: memref<1x64xf32, #tpu.memory_space<vmem>>, %arg11: memref<64x32xf32, #tpu.memory_space<vmem>>, %arg12: memref<1x32xf32, #tpu.memory_space<vmem>>, %arg13: memref<6x32xf32, #tpu.memory_space<vmem>>, %arg14: memref<1x16x32xf32, #tpu.memory_space<vmem>>) attributes {dimension_semantics = [#tpu.dimension_semantics<parallel>], iteration_bounds = array<i64: 2>, scalar_prefetch = 0 : i64, scratch_operands = 0 : i64, tpu.core_type = #tpu.core_type<tc>, window_params = [{pipeline_mode = #tpu.pipeline_mode<synchronous>, transform_indices = @transform_0, window_bounds = array<i64: 16, 32>}, {transform_indices = @transform_1, window_bounds = array<i64: 1, 16, 32>}, {transform_indices = @transform_2, window_bounds = array<i64: 1, 16, 32>}, {transform_indices = @transform_3, window_bounds = array<i64: 1, 16, 32>}, {pipeline_mode = #tpu.pipeline_mode<synchronous>, transform_indices = @transform_4, window_bounds = array<i64: 4, 32, 32>}, {pipeline_mode = #tpu.pipeline_mode<synchronous>, transform_indices = @transform_5, window_bounds = array<i64: 4, 32>}, {pipeline_mode = #tpu.pipeline_mode<synchronous>, transform_indices = @transform_6, window_bounds = array<i64: 4, 32, 32>}, {pipeline_mode = #tpu.pipeline_mode<synchronous>, transform_indices = @transform_7, window_bounds = array<i64: 4, 32>}, {pipeline_mode = #tpu.pipeline_mode<synchronous>, transform_indices = @transform_8, window_bounds = array<i64: 32, 64>}, {pipeline_mode = #tpu.pipeline_mode<synchronous>, transform_indices = @transform_9, window_bounds = array<i64: 1, 64>}, {pipeline_mode = #tpu.pipeline_mode<synchronous>, transform_indices = @transform_10, window_bounds = array<i64: 64, 32>}, {pipeline_mode = #tpu.pipeline_mode<synchronous>, transform_indices = @transform_11, window_bounds = array<i64: 1, 32>}, {pipeline_mode = #tpu.pipeline_mode<synchronous>, transform_indices = @transform_12, window_bounds = array<i64: 6, 32>}, {transform_indices = @transform_13, window_bounds = array<i64: 1, 16, 32>}]} {
    %c0 = arith.constant 0 : index
    %c0_0 = arith.constant 0 : index
    %0 = vector.load %arg1[%c0, %c0_0] : memref<16x32xf32, #tpu.memory_space<vmem>>, vector<16x32xf32>
    %c0_1 = arith.constant 0 : index
    %c0_2 = arith.constant 0 : index
    %c0_3 = arith.constant 0 : index
    %1 = vector.load %arg2[%c0_1, %c0_2, %c0_3] : memref<1x16x32xf32, #tpu.memory_space<vmem>>, vector<1x16x32xf32>
    %2 = vector.shape_cast %1 : vector<1x16x32xf32> to vector<16x32xf32>
    %c0_4 = arith.constant 0 : index
    %c0_5 = arith.constant 0 : index
    %c0_6 = arith.constant 0 : index
    %3 = vector.load %arg3[%c0_4, %c0_5, %c0_6] : memref<1x16x32xf32, #tpu.memory_space<vmem>>, vector<1x16x32xf32>
    %4 = vector.shape_cast %3 : vector<1x16x32xf32> to vector<16x32xf32>
    %c0_7 = arith.constant 0 : index
    %c0_8 = arith.constant 0 : index
    %c0_9 = arith.constant 0 : index
    %5 = vector.load %arg4[%c0_7, %c0_8, %c0_9] : memref<1x16x32xf32, #tpu.memory_space<vmem>>, vector<1x16x32xf32>
    %6 = vector.shape_cast %5 : vector<1x16x32xf32> to vector<16x32xf32>
    %7 = arith.addf %0, %6 : vector<16x32xf32>
    %8 = arith.addf %2, %6 : vector<16x32xf32>
    %c0_10 = arith.constant 0 : index
    %c0_11 = arith.constant 0 : index
    %c0_12 = arith.constant 0 : index
    %9 = vector.load %arg5[%c0_10, %c0_11, %c0_12] : memref<4x32x32xf32, #tpu.memory_space<vmem>>, vector<1x32x32xf32>
    %10 = vector.shape_cast %9 : vector<1x32x32xf32> to vector<32x32xf32>
    %cst = arith.constant dense<0.000000e+00> : vector<16x32xf32>
    %11 = tpu.matmul %7, %10, %cst {dimension_numbers = #tpu.dot_dimension_numbers<[1], [0], [0], [1], [0, 0, 1, 1], [], []>} : vector<16x32xf32>, vector<32x32xf32>, vector<16x32xf32> -> vector<16x32xf32>
    %c0_13 = arith.constant 0 : index
    %c0_14 = arith.constant 0 : index
    %12 = vector.load %arg6[%c0_13, %c0_14] : memref<4x32xf32, #tpu.memory_space<vmem>>, vector<1x32xf32>
    %13 = vector.broadcast %12 : vector<1x32xf32> to vector<16x32xf32>
    %14 = arith.addf %11, %13 : vector<16x32xf32>
    %c1 = arith.constant 1 : index
    %c0_15 = arith.constant 0 : index
    %c0_16 = arith.constant 0 : index
    %15 = vector.load %arg5[%c1, %c0_15, %c0_16] : memref<4x32x32xf32, #tpu.memory_space<vmem>>, vector<1x32x32xf32>
    %16 = vector.shape_cast %15 : vector<1x32x32xf32> to vector<32x32xf32>
    %cst_17 = arith.constant dense<0.000000e+00> : vector<16x32xf32>
    %17 = tpu.matmul %8, %16, %cst_17 {dimension_numbers = #tpu.dot_dimension_numbers<[1], [0], [0], [1], [0, 0, 1, 1], [], []>} : vector<16x32xf32>, vector<32x32xf32>, vector<16x32xf32> -> vector<16x32xf32>
    %c1_18 = arith.constant 1 : index
    %c0_19 = arith.constant 0 : index
    %18 = vector.load %arg6[%c1_18, %c0_19] : memref<4x32xf32, #tpu.memory_space<vmem>>, vector<1x32xf32>
    %19 = vector.broadcast %18 : vector<1x32xf32> to vector<16x32xf32>
    %20 = arith.addf %17, %19 : vector<16x32xf32>
    %c2 = arith.constant 2 : index
    %c0_20 = arith.constant 0 : index
    %c0_21 = arith.constant 0 : index
    %21 = vector.load %arg5[%c2, %c0_20, %c0_21] : memref<4x32x32xf32, #tpu.memory_space<vmem>>, vector<1x32x32xf32>
    %22 = vector.shape_cast %21 : vector<1x32x32xf32> to vector<32x32xf32>
    %cst_22 = arith.constant dense<0.000000e+00> : vector<16x32xf32>
    %23 = tpu.matmul %2, %22, %cst_22 {dimension_numbers = #tpu.dot_dimension_numbers<[1], [0], [0], [1], [0, 0, 1, 1], [], []>} : vector<16x32xf32>, vector<32x32xf32>, vector<16x32xf32> -> vector<16x32xf32>
    %c2_23 = arith.constant 2 : index
    %c0_24 = arith.constant 0 : index
    %24 = vector.load %arg6[%c2_23, %c0_24] : memref<4x32xf32, #tpu.memory_space<vmem>>, vector<1x32xf32>
    %25 = vector.broadcast %24 : vector<1x32xf32> to vector<16x32xf32>
    %26 = arith.addf %23, %25 : vector<16x32xf32>
    %27 = vector.extract_strided_slice %14 {offsets = [0, 0], sizes = [16, 8], strides = [1, 1]} : vector<16x32xf32> to vector<16x8xf32>
    %28 = vector.extract_strided_slice %20 {offsets = [0, 0], sizes = [16, 8], strides = [1, 1]} : vector<16x32xf32> to vector<16x8xf32>
    %29 = vector.extract_strided_slice %26 {offsets = [0, 0], sizes = [16, 8], strides = [1, 1]} : vector<16x32xf32> to vector<16x8xf32>
    %cst_25 = arith.constant dense<0.000000e+00> : vector<16x16xf32>
    %30 = tpu.matmul %27, %28, %cst_25 {dimension_numbers = #tpu.dot_dimension_numbers<[1], [1], [0], [0], [0, 0, 1, 0], [], []>} : vector<16x8xf32>, vector<16x8xf32>, vector<16x16xf32> -> vector<16x16xf32>
    %cst_26 = arith.constant dense<0xFF800000> : vector<16xf32>
    %31 = vector.multi_reduction <maximumf>, %30, %cst_26 [1] : vector<16x16xf32> to vector<16xf32>
    %32 = vector.shape_cast %31 : vector<16xf32> to vector<16x1xf32>
    %33 = vector.broadcast %32 : vector<16x1xf32> to vector<16x16xf32>
    %34 = arith.subf %30, %33 : vector<16x16xf32>
    %35 = math.exp %34 : vector<16x16xf32>
    %cst_27 = arith.constant dense<0.000000e+00> : vector<16xf32>
    %36 = vector.multi_reduction <add>, %35, %cst_27 [1] : vector<16x16xf32> to vector<16xf32>
    %37 = vector.shape_cast %36 : vector<16xf32> to vector<16x1xf32>
    %38 = tpu.reciprocal %37 {approx = true} : vector<16x1xf32> -> vector<16x1xf32>
    %39 = vector.broadcast %38 : vector<16x1xf32> to vector<16x16xf32>
    %40 = arith.mulf %35, %39 : vector<16x16xf32>
    %cst_28 = arith.constant dense<0.000000e+00> : vector<16x8xf32>
    %41 = tpu.matmul %40, %29, %cst_28 {dimension_numbers = #tpu.dot_dimension_numbers<[1], [0], [0], [1], [0, 0, 1, 1], [], []>} : vector<16x16xf32>, vector<16x8xf32>, vector<16x8xf32> -> vector<16x8xf32>
    %42 = vector.extract_strided_slice %14 {offsets = [0, 8], sizes = [16, 8], strides = [1, 1]} : vector<16x32xf32> to vector<16x8xf32>
    %43 = vector.extract_strided_slice %20 {offsets = [0, 8], sizes = [16, 8], strides = [1, 1]} : vector<16x32xf32> to vector<16x8xf32>
    %44 = vector.extract_strided_slice %26 {offsets = [0, 8], sizes = [16, 8], strides = [1, 1]} : vector<16x32xf32> to vector<16x8xf32>
    %cst_29 = arith.constant dense<0.000000e+00> : vector<16x16xf32>
    %45 = tpu.matmul %42, %43, %cst_29 {dimension_numbers = #tpu.dot_dimension_numbers<[1], [1], [0], [0], [0, 0, 1, 0], [], []>} : vector<16x8xf32>, vector<16x8xf32>, vector<16x16xf32> -> vector<16x16xf32>
    %cst_30 = arith.constant dense<0xFF800000> : vector<16xf32>
    %46 = vector.multi_reduction <maximumf>, %45, %cst_30 [1] : vector<16x16xf32> to vector<16xf32>
    %47 = vector.shape_cast %46 : vector<16xf32> to vector<16x1xf32>
    %48 = vector.broadcast %47 : vector<16x1xf32> to vector<16x16xf32>
    %49 = arith.subf %45, %48 : vector<16x16xf32>
    %50 = math.exp %49 : vector<16x16xf32>
    %cst_31 = arith.constant dense<0.000000e+00> : vector<16xf32>
    %51 = vector.multi_reduction <add>, %50, %cst_31 [1] : vector<16x16xf32> to vector<16xf32>
    %52 = vector.shape_cast %51 : vector<16xf32> to vector<16x1xf32>
    %53 = tpu.reciprocal %52 {approx = true} : vector<16x1xf32> -> vector<16x1xf32>
    %54 = vector.broadcast %53 : vector<16x1xf32> to vector<16x16xf32>
    %55 = arith.mulf %50, %54 : vector<16x16xf32>
    %cst_32 = arith.constant dense<0.000000e+00> : vector<16x8xf32>
    %56 = tpu.matmul %55, %44, %cst_32 {dimension_numbers = #tpu.dot_dimension_numbers<[1], [0], [0], [1], [0, 0, 1, 1], [], []>} : vector<16x16xf32>, vector<16x8xf32>, vector<16x8xf32> -> vector<16x8xf32>
    %57 = vector.extract_strided_slice %14 {offsets = [0, 16], sizes = [16, 8], strides = [1, 1]} : vector<16x32xf32> to vector<16x8xf32>
    %58 = vector.extract_strided_slice %20 {offsets = [0, 16], sizes = [16, 8], strides = [1, 1]} : vector<16x32xf32> to vector<16x8xf32>
    %59 = vector.extract_strided_slice %26 {offsets = [0, 16], sizes = [16, 8], strides = [1, 1]} : vector<16x32xf32> to vector<16x8xf32>
    %cst_33 = arith.constant dense<0.000000e+00> : vector<16x16xf32>
    %60 = tpu.matmul %57, %58, %cst_33 {dimension_numbers = #tpu.dot_dimension_numbers<[1], [1], [0], [0], [0, 0, 1, 0], [], []>} : vector<16x8xf32>, vector<16x8xf32>, vector<16x16xf32> -> vector<16x16xf32>
    %cst_34 = arith.constant dense<0xFF800000> : vector<16xf32>
    %61 = vector.multi_reduction <maximumf>, %60, %cst_34 [1] : vector<16x16xf32> to vector<16xf32>
    %62 = vector.shape_cast %61 : vector<16xf32> to vector<16x1xf32>
    %63 = vector.broadcast %62 : vector<16x1xf32> to vector<16x16xf32>
    %64 = arith.subf %60, %63 : vector<16x16xf32>
    %65 = math.exp %64 : vector<16x16xf32>
    %cst_35 = arith.constant dense<0.000000e+00> : vector<16xf32>
    %66 = vector.multi_reduction <add>, %65, %cst_35 [1] : vector<16x16xf32> to vector<16xf32>
    %67 = vector.shape_cast %66 : vector<16xf32> to vector<16x1xf32>
    %68 = tpu.reciprocal %67 {approx = true} : vector<16x1xf32> -> vector<16x1xf32>
    %69 = vector.broadcast %68 : vector<16x1xf32> to vector<16x16xf32>
    %70 = arith.mulf %65, %69 : vector<16x16xf32>
    %cst_36 = arith.constant dense<0.000000e+00> : vector<16x8xf32>
    %71 = tpu.matmul %70, %59, %cst_36 {dimension_numbers = #tpu.dot_dimension_numbers<[1], [0], [0], [1], [0, 0, 1, 1], [], []>} : vector<16x16xf32>, vector<16x8xf32>, vector<16x8xf32> -> vector<16x8xf32>
    %72 = vector.extract_strided_slice %14 {offsets = [0, 24], sizes = [16, 8], strides = [1, 1]} : vector<16x32xf32> to vector<16x8xf32>
    %73 = vector.extract_strided_slice %20 {offsets = [0, 24], sizes = [16, 8], strides = [1, 1]} : vector<16x32xf32> to vector<16x8xf32>
    %74 = vector.extract_strided_slice %26 {offsets = [0, 24], sizes = [16, 8], strides = [1, 1]} : vector<16x32xf32> to vector<16x8xf32>
    %cst_37 = arith.constant dense<0.000000e+00> : vector<16x16xf32>
    %75 = tpu.matmul %72, %73, %cst_37 {dimension_numbers = #tpu.dot_dimension_numbers<[1], [1], [0], [0], [0, 0, 1, 0], [], []>} : vector<16x8xf32>, vector<16x8xf32>, vector<16x16xf32> -> vector<16x16xf32>
    %cst_38 = arith.constant dense<0xFF800000> : vector<16xf32>
    %76 = vector.multi_reduction <maximumf>, %75, %cst_38 [1] : vector<16x16xf32> to vector<16xf32>
    %77 = vector.shape_cast %76 : vector<16xf32> to vector<16x1xf32>
    %78 = vector.broadcast %77 : vector<16x1xf32> to vector<16x16xf32>
    %79 = arith.subf %75, %78 : vector<16x16xf32>
    %80 = math.exp %79 : vector<16x16xf32>
    %cst_39 = arith.constant dense<0.000000e+00> : vector<16xf32>
    %81 = vector.multi_reduction <add>, %80, %cst_39 [1] : vector<16x16xf32> to vector<16xf32>
    %82 = vector.shape_cast %81 : vector<16xf32> to vector<16x1xf32>
    %83 = tpu.reciprocal %82 {approx = true} : vector<16x1xf32> -> vector<16x1xf32>
    %84 = vector.broadcast %83 : vector<16x1xf32> to vector<16x16xf32>
    %85 = arith.mulf %80, %84 : vector<16x16xf32>
    %cst_40 = arith.constant dense<0.000000e+00> : vector<16x8xf32>
    %86 = tpu.matmul %85, %74, %cst_40 {dimension_numbers = #tpu.dot_dimension_numbers<[1], [0], [0], [1], [0, 0, 1, 1], [], []>} : vector<16x16xf32>, vector<16x8xf32>, vector<16x8xf32> -> vector<16x8xf32>
    %87 = tpu.concatenate %41, %56, %71, %86 in 1 : vector<16x8xf32>, vector<16x8xf32>, vector<16x8xf32>, vector<16x8xf32> -> vector<16x32xf32>
    %c3 = arith.constant 3 : index
    %c0_41 = arith.constant 0 : index
    %c0_42 = arith.constant 0 : index
    %88 = vector.load %arg5[%c3, %c0_41, %c0_42] : memref<4x32x32xf32, #tpu.memory_space<vmem>>, vector<1x32x32xf32>
    %89 = vector.shape_cast %88 : vector<1x32x32xf32> to vector<32x32xf32>
    %cst_43 = arith.constant dense<0.000000e+00> : vector<16x32xf32>
    %90 = tpu.matmul %87, %89, %cst_43 {dimension_numbers = #tpu.dot_dimension_numbers<[1], [0], [0], [1], [0, 0, 1, 1], [], []>} : vector<16x32xf32>, vector<32x32xf32>, vector<16x32xf32> -> vector<16x32xf32>
    %c3_44 = arith.constant 3 : index
    %c0_45 = arith.constant 0 : index
    %91 = vector.load %arg6[%c3_44, %c0_45] : memref<4x32xf32, #tpu.memory_space<vmem>>, vector<1x32xf32>
    %92 = vector.broadcast %91 : vector<1x32xf32> to vector<16x32xf32>
    %93 = arith.addf %90, %92 : vector<16x32xf32>
    %94 = arith.addf %0, %93 : vector<16x32xf32>
    %c0_46 = arith.constant 0 : index
    %c0_47 = arith.constant 0 : index
    %95 = vector.load %arg13[%c0_46, %c0_47] : memref<6x32xf32, #tpu.memory_space<vmem>>, vector<1x32xf32>
    %c1_48 = arith.constant 1 : index
    %c0_49 = arith.constant 0 : index
    %96 = vector.load %arg13[%c1_48, %c0_49] : memref<6x32xf32, #tpu.memory_space<vmem>>, vector<1x32xf32>
    %cst_50 = arith.constant dense<0.000000e+00> : vector<16xf32>
    %97 = vector.multi_reduction <add>, %94, %cst_50 [1] : vector<16x32xf32> to vector<16xf32>
    %98 = vector.shape_cast %97 : vector<16xf32> to vector<16x1xf32>
    %cst_51 = arith.constant 3.200000e+01 : f32
    %99 = vector.broadcast %cst_51 : f32 to vector<16x1xf32>
    %100 = arith.divf %98, %99 : vector<16x1xf32>
    %101 = vector.broadcast %100 : vector<16x1xf32> to vector<16x32xf32>
    %102 = arith.subf %94, %101 : vector<16x32xf32>
    %103 = arith.mulf %102, %102 : vector<16x32xf32>
    %cst_52 = arith.constant dense<0.000000e+00> : vector<16xf32>
    %104 = vector.multi_reduction <add>, %103, %cst_52 [1] : vector<16x32xf32> to vector<16xf32>
    %105 = vector.shape_cast %104 : vector<16xf32> to vector<16x1xf32>
    %cst_53 = arith.constant 3.200000e+01 : f32
    %106 = vector.broadcast %cst_53 : f32 to vector<16x1xf32>
    %107 = arith.divf %105, %106 : vector<16x1xf32>
    %108 = vector.broadcast %100 : vector<16x1xf32> to vector<16x32xf32>
    %109 = arith.subf %94, %108 : vector<16x32xf32>
    %cst_54 = arith.constant 9.99999974E-6 : f32
    %110 = vector.broadcast %cst_54 : f32 to vector<16x1xf32>
    %111 = arith.addf %107, %110 : vector<16x1xf32>
    %112 = math.rsqrt %111 : vector<16x1xf32>
    %113 = vector.broadcast %112 : vector<16x1xf32> to vector<16x32xf32>
    %114 = arith.mulf %109, %113 : vector<16x32xf32>
    %115 = vector.broadcast %95 : vector<1x32xf32> to vector<16x32xf32>
    %116 = arith.mulf %114, %115 : vector<16x32xf32>
    %117 = vector.broadcast %96 : vector<1x32xf32> to vector<16x32xf32>
    %118 = arith.addf %116, %117 : vector<16x32xf32>
    %119 = arith.addf %118, %6 : vector<16x32xf32>
    %120 = arith.addf %4, %6 : vector<16x32xf32>
    %c0_55 = arith.constant 0 : index
    %c0_56 = arith.constant 0 : index
    %c0_57 = arith.constant 0 : index
    %121 = vector.load %arg7[%c0_55, %c0_56, %c0_57] : memref<4x32x32xf32, #tpu.memory_space<vmem>>, vector<1x32x32xf32>
    %122 = vector.shape_cast %121 : vector<1x32x32xf32> to vector<32x32xf32>
    %cst_58 = arith.constant dense<0.000000e+00> : vector<16x32xf32>
    %123 = tpu.matmul %119, %122, %cst_58 {dimension_numbers = #tpu.dot_dimension_numbers<[1], [0], [0], [1], [0, 0, 1, 1], [], []>} : vector<16x32xf32>, vector<32x32xf32>, vector<16x32xf32> -> vector<16x32xf32>
    %c0_59 = arith.constant 0 : index
    %c0_60 = arith.constant 0 : index
    %124 = vector.load %arg8[%c0_59, %c0_60] : memref<4x32xf32, #tpu.memory_space<vmem>>, vector<1x32xf32>
    %125 = vector.broadcast %124 : vector<1x32xf32> to vector<16x32xf32>
    %126 = arith.addf %123, %125 : vector<16x32xf32>
    %c1_61 = arith.constant 1 : index
    %c0_62 = arith.constant 0 : index
    %c0_63 = arith.constant 0 : index
    %127 = vector.load %arg7[%c1_61, %c0_62, %c0_63] : memref<4x32x32xf32, #tpu.memory_space<vmem>>, vector<1x32x32xf32>
    %128 = vector.shape_cast %127 : vector<1x32x32xf32> to vector<32x32xf32>
    %cst_64 = arith.constant dense<0.000000e+00> : vector<16x32xf32>
    %129 = tpu.matmul %120, %128, %cst_64 {dimension_numbers = #tpu.dot_dimension_numbers<[1], [0], [0], [1], [0, 0, 1, 1], [], []>} : vector<16x32xf32>, vector<32x32xf32>, vector<16x32xf32> -> vector<16x32xf32>
    %c1_65 = arith.constant 1 : index
    %c0_66 = arith.constant 0 : index
    %130 = vector.load %arg8[%c1_65, %c0_66] : memref<4x32xf32, #tpu.memory_space<vmem>>, vector<1x32xf32>
    %131 = vector.broadcast %130 : vector<1x32xf32> to vector<16x32xf32>
    %132 = arith.addf %129, %131 : vector<16x32xf32>
    %c2_67 = arith.constant 2 : index
    %c0_68 = arith.constant 0 : index
    %c0_69 = arith.constant 0 : index
    %133 = vector.load %arg7[%c2_67, %c0_68, %c0_69] : memref<4x32x32xf32, #tpu.memory_space<vmem>>, vector<1x32x32xf32>
    %134 = vector.shape_cast %133 : vector<1x32x32xf32> to vector<32x32xf32>
    %cst_70 = arith.constant dense<0.000000e+00> : vector<16x32xf32>
    %135 = tpu.matmul %4, %134, %cst_70 {dimension_numbers = #tpu.dot_dimension_numbers<[1], [0], [0], [1], [0, 0, 1, 1], [], []>} : vector<16x32xf32>, vector<32x32xf32>, vector<16x32xf32> -> vector<16x32xf32>
    %c2_71 = arith.constant 2 : index
    %c0_72 = arith.constant 0 : index
    %136 = vector.load %arg8[%c2_71, %c0_72] : memref<4x32xf32, #tpu.memory_space<vmem>>, vector<1x32xf32>
    %137 = vector.broadcast %136 : vector<1x32xf32> to vector<16x32xf32>
    %138 = arith.addf %135, %137 : vector<16x32xf32>
    %139 = vector.extract_strided_slice %126 {offsets = [0, 0], sizes = [16, 8], strides = [1, 1]} : vector<16x32xf32> to vector<16x8xf32>
    %140 = vector.extract_strided_slice %132 {offsets = [0, 0], sizes = [16, 8], strides = [1, 1]} : vector<16x32xf32> to vector<16x8xf32>
    %141 = vector.extract_strided_slice %138 {offsets = [0, 0], sizes = [16, 8], strides = [1, 1]} : vector<16x32xf32> to vector<16x8xf32>
    %cst_73 = arith.constant dense<0.000000e+00> : vector<16x16xf32>
    %142 = tpu.matmul %139, %140, %cst_73 {dimension_numbers = #tpu.dot_dimension_numbers<[1], [1], [0], [0], [0, 0, 1, 0], [], []>} : vector<16x8xf32>, vector<16x8xf32>, vector<16x16xf32> -> vector<16x16xf32>
    %cst_74 = arith.constant dense<0xFF800000> : vector<16xf32>
    %143 = vector.multi_reduction <maximumf>, %142, %cst_74 [1] : vector<16x16xf32> to vector<16xf32>
    %144 = vector.shape_cast %143 : vector<16xf32> to vector<16x1xf32>
    %145 = vector.broadcast %144 : vector<16x1xf32> to vector<16x16xf32>
    %146 = arith.subf %142, %145 : vector<16x16xf32>
    %147 = math.exp %146 : vector<16x16xf32>
    %cst_75 = arith.constant dense<0.000000e+00> : vector<16xf32>
    %148 = vector.multi_reduction <add>, %147, %cst_75 [1] : vector<16x16xf32> to vector<16xf32>
    %149 = vector.shape_cast %148 : vector<16xf32> to vector<16x1xf32>
    %150 = tpu.reciprocal %149 {approx = true} : vector<16x1xf32> -> vector<16x1xf32>
    %151 = vector.broadcast %150 : vector<16x1xf32> to vector<16x16xf32>
    %152 = arith.mulf %147, %151 : vector<16x16xf32>
    %cst_76 = arith.constant dense<0.000000e+00> : vector<16x8xf32>
    %153 = tpu.matmul %152, %141, %cst_76 {dimension_numbers = #tpu.dot_dimension_numbers<[1], [0], [0], [1], [0, 0, 1, 1], [], []>} : vector<16x16xf32>, vector<16x8xf32>, vector<16x8xf32> -> vector<16x8xf32>
    %154 = vector.extract_strided_slice %126 {offsets = [0, 8], sizes = [16, 8], strides = [1, 1]} : vector<16x32xf32> to vector<16x8xf32>
    %155 = vector.extract_strided_slice %132 {offsets = [0, 8], sizes = [16, 8], strides = [1, 1]} : vector<16x32xf32> to vector<16x8xf32>
    %156 = vector.extract_strided_slice %138 {offsets = [0, 8], sizes = [16, 8], strides = [1, 1]} : vector<16x32xf32> to vector<16x8xf32>
    %cst_77 = arith.constant dense<0.000000e+00> : vector<16x16xf32>
    %157 = tpu.matmul %154, %155, %cst_77 {dimension_numbers = #tpu.dot_dimension_numbers<[1], [1], [0], [0], [0, 0, 1, 0], [], []>} : vector<16x8xf32>, vector<16x8xf32>, vector<16x16xf32> -> vector<16x16xf32>
    %cst_78 = arith.constant dense<0xFF800000> : vector<16xf32>
    %158 = vector.multi_reduction <maximumf>, %157, %cst_78 [1] : vector<16x16xf32> to vector<16xf32>
    %159 = vector.shape_cast %158 : vector<16xf32> to vector<16x1xf32>
    %160 = vector.broadcast %159 : vector<16x1xf32> to vector<16x16xf32>
    %161 = arith.subf %157, %160 : vector<16x16xf32>
    %162 = math.exp %161 : vector<16x16xf32>
    %cst_79 = arith.constant dense<0.000000e+00> : vector<16xf32>
    %163 = vector.multi_reduction <add>, %162, %cst_79 [1] : vector<16x16xf32> to vector<16xf32>
    %164 = vector.shape_cast %163 : vector<16xf32> to vector<16x1xf32>
    %165 = tpu.reciprocal %164 {approx = true} : vector<16x1xf32> -> vector<16x1xf32>
    %166 = vector.broadcast %165 : vector<16x1xf32> to vector<16x16xf32>
    %167 = arith.mulf %162, %166 : vector<16x16xf32>
    %cst_80 = arith.constant dense<0.000000e+00> : vector<16x8xf32>
    %168 = tpu.matmul %167, %156, %cst_80 {dimension_numbers = #tpu.dot_dimension_numbers<[1], [0], [0], [1], [0, 0, 1, 1], [], []>} : vector<16x16xf32>, vector<16x8xf32>, vector<16x8xf32> -> vector<16x8xf32>
    %169 = vector.extract_strided_slice %126 {offsets = [0, 16], sizes = [16, 8], strides = [1, 1]} : vector<16x32xf32> to vector<16x8xf32>
    %170 = vector.extract_strided_slice %132 {offsets = [0, 16], sizes = [16, 8], strides = [1, 1]} : vector<16x32xf32> to vector<16x8xf32>
    %171 = vector.extract_strided_slice %138 {offsets = [0, 16], sizes = [16, 8], strides = [1, 1]} : vector<16x32xf32> to vector<16x8xf32>
    %cst_81 = arith.constant dense<0.000000e+00> : vector<16x16xf32>
    %172 = tpu.matmul %169, %170, %cst_81 {dimension_numbers = #tpu.dot_dimension_numbers<[1], [1], [0], [0], [0, 0, 1, 0], [], []>} : vector<16x8xf32>, vector<16x8xf32>, vector<16x16xf32> -> vector<16x16xf32>
    %cst_82 = arith.constant dense<0xFF800000> : vector<16xf32>
    %173 = vector.multi_reduction <maximumf>, %172, %cst_82 [1] : vector<16x16xf32> to vector<16xf32>
    %174 = vector.shape_cast %173 : vector<16xf32> to vector<16x1xf32>
    %175 = vector.broadcast %174 : vector<16x1xf32> to vector<16x16xf32>
    %176 = arith.subf %172, %175 : vector<16x16xf32>
    %177 = math.exp %176 : vector<16x16xf32>
    %cst_83 = arith.constant dense<0.000000e+00> : vector<16xf32>
    %178 = vector.multi_reduction <add>, %177, %cst_83 [1] : vector<16x16xf32> to vector<16xf32>
    %179 = vector.shape_cast %178 : vector<16xf32> to vector<16x1xf32>
    %180 = tpu.reciprocal %179 {approx = true} : vector<16x1xf32> -> vector<16x1xf32>
    %181 = vector.broadcast %180 : vector<16x1xf32> to vector<16x16xf32>
    %182 = arith.mulf %177, %181 : vector<16x16xf32>
    %cst_84 = arith.constant dense<0.000000e+00> : vector<16x8xf32>
    %183 = tpu.matmul %182, %171, %cst_84 {dimension_numbers = #tpu.dot_dimension_numbers<[1], [0], [0], [1], [0, 0, 1, 1], [], []>} : vector<16x16xf32>, vector<16x8xf32>, vector<16x8xf32> -> vector<16x8xf32>
    %184 = vector.extract_strided_slice %126 {offsets = [0, 24], sizes = [16, 8], strides = [1, 1]} : vector<16x32xf32> to vector<16x8xf32>
    %185 = vector.extract_strided_slice %132 {offsets = [0, 24], sizes = [16, 8], strides = [1, 1]} : vector<16x32xf32> to vector<16x8xf32>
    %186 = vector.extract_strided_slice %138 {offsets = [0, 24], sizes = [16, 8], strides = [1, 1]} : vector<16x32xf32> to vector<16x8xf32>
    %cst_85 = arith.constant dense<0.000000e+00> : vector<16x16xf32>
    %187 = tpu.matmul %184, %185, %cst_85 {dimension_numbers = #tpu.dot_dimension_numbers<[1], [1], [0], [0], [0, 0, 1, 0], [], []>} : vector<16x8xf32>, vector<16x8xf32>, vector<16x16xf32> -> vector<16x16xf32>
    %cst_86 = arith.constant dense<0xFF800000> : vector<16xf32>
    %188 = vector.multi_reduction <maximumf>, %187, %cst_86 [1] : vector<16x16xf32> to vector<16xf32>
    %189 = vector.shape_cast %188 : vector<16xf32> to vector<16x1xf32>
    %190 = vector.broadcast %189 : vector<16x1xf32> to vector<16x16xf32>
    %191 = arith.subf %187, %190 : vector<16x16xf32>
    %192 = math.exp %191 : vector<16x16xf32>
    %cst_87 = arith.constant dense<0.000000e+00> : vector<16xf32>
    %193 = vector.multi_reduction <add>, %192, %cst_87 [1] : vector<16x16xf32> to vector<16xf32>
    %194 = vector.shape_cast %193 : vector<16xf32> to vector<16x1xf32>
    %195 = tpu.reciprocal %194 {approx = true} : vector<16x1xf32> -> vector<16x1xf32>
    %196 = vector.broadcast %195 : vector<16x1xf32> to vector<16x16xf32>
    %197 = arith.mulf %192, %196 : vector<16x16xf32>
    %cst_88 = arith.constant dense<0.000000e+00> : vector<16x8xf32>
    %198 = tpu.matmul %197, %186, %cst_88 {dimension_numbers = #tpu.dot_dimension_numbers<[1], [0], [0], [1], [0, 0, 1, 1], [], []>} : vector<16x16xf32>, vector<16x8xf32>, vector<16x8xf32> -> vector<16x8xf32>
    %199 = tpu.concatenate %153, %168, %183, %198 in 1 : vector<16x8xf32>, vector<16x8xf32>, vector<16x8xf32>, vector<16x8xf32> -> vector<16x32xf32>
    %c3_89 = arith.constant 3 : index
    %c0_90 = arith.constant 0 : index
    %c0_91 = arith.constant 0 : index
    %200 = vector.load %arg7[%c3_89, %c0_90, %c0_91] : memref<4x32x32xf32, #tpu.memory_space<vmem>>, vector<1x32x32xf32>
    %201 = vector.shape_cast %200 : vector<1x32x32xf32> to vector<32x32xf32>
    %cst_92 = arith.constant dense<0.000000e+00> : vector<16x32xf32>
    %202 = tpu.matmul %199, %201, %cst_92 {dimension_numbers = #tpu.dot_dimension_numbers<[1], [0], [0], [1], [0, 0, 1, 1], [], []>} : vector<16x32xf32>, vector<32x32xf32>, vector<16x32xf32> -> vector<16x32xf32>
    %c3_93 = arith.constant 3 : index
    %c0_94 = arith.constant 0 : index
    %203 = vector.load %arg8[%c3_93, %c0_94] : memref<4x32xf32, #tpu.memory_space<vmem>>, vector<1x32xf32>
    %204 = vector.broadcast %203 : vector<1x32xf32> to vector<16x32xf32>
    %205 = arith.addf %202, %204 : vector<16x32xf32>
    %206 = arith.addf %118, %205 : vector<16x32xf32>
    %c2_95 = arith.constant 2 : index
    %c0_96 = arith.constant 0 : index
    %207 = vector.load %arg13[%c2_95, %c0_96] : memref<6x32xf32, #tpu.memory_space<vmem>>, vector<1x32xf32>
    %c3_97 = arith.constant 3 : index
    %c0_98 = arith.constant 0 : index
    %208 = vector.load %arg13[%c3_97, %c0_98] : memref<6x32xf32, #tpu.memory_space<vmem>>, vector<1x32xf32>
    %cst_99 = arith.constant dense<0.000000e+00> : vector<16xf32>
    %209 = vector.multi_reduction <add>, %206, %cst_99 [1] : vector<16x32xf32> to vector<16xf32>
    %210 = vector.shape_cast %209 : vector<16xf32> to vector<16x1xf32>
    %cst_100 = arith.constant 3.200000e+01 : f32
    %211 = vector.broadcast %cst_100 : f32 to vector<16x1xf32>
    %212 = arith.divf %210, %211 : vector<16x1xf32>
    %213 = vector.broadcast %212 : vector<16x1xf32> to vector<16x32xf32>
    %214 = arith.subf %206, %213 : vector<16x32xf32>
    %215 = arith.mulf %214, %214 : vector<16x32xf32>
    %cst_101 = arith.constant dense<0.000000e+00> : vector<16xf32>
    %216 = vector.multi_reduction <add>, %215, %cst_101 [1] : vector<16x32xf32> to vector<16xf32>
    %217 = vector.shape_cast %216 : vector<16xf32> to vector<16x1xf32>
    %cst_102 = arith.constant 3.200000e+01 : f32
    %218 = vector.broadcast %cst_102 : f32 to vector<16x1xf32>
    %219 = arith.divf %217, %218 : vector<16x1xf32>
    %220 = vector.broadcast %212 : vector<16x1xf32> to vector<16x32xf32>
    %221 = arith.subf %206, %220 : vector<16x32xf32>
    %cst_103 = arith.constant 9.99999974E-6 : f32
    %222 = vector.broadcast %cst_103 : f32 to vector<16x1xf32>
    %223 = arith.addf %219, %222 : vector<16x1xf32>
    %224 = math.rsqrt %223 : vector<16x1xf32>
    %225 = vector.broadcast %224 : vector<16x1xf32> to vector<16x32xf32>
    %226 = arith.mulf %221, %225 : vector<16x32xf32>
    %227 = vector.broadcast %207 : vector<1x32xf32> to vector<16x32xf32>
    %228 = arith.mulf %226, %227 : vector<16x32xf32>
    %229 = vector.broadcast %208 : vector<1x32xf32> to vector<16x32xf32>
    %230 = arith.addf %228, %229 : vector<16x32xf32>
    %c0_104 = arith.constant 0 : index
    %c0_105 = arith.constant 0 : index
    %231 = vector.load %arg9[%c0_104, %c0_105] : memref<32x64xf32, #tpu.memory_space<vmem>>, vector<32x64xf32>
    %cst_106 = arith.constant dense<0.000000e+00> : vector<16x64xf32>
    %232 = tpu.matmul %230, %231, %cst_106 {dimension_numbers = #tpu.dot_dimension_numbers<[1], [0], [0], [1], [0, 0, 1, 1], [], []>} : vector<16x32xf32>, vector<32x64xf32>, vector<16x64xf32> -> vector<16x64xf32>
    %c0_107 = arith.constant 0 : index
    %c0_108 = arith.constant 0 : index
    %233 = vector.load %arg10[%c0_107, %c0_108] : memref<1x64xf32, #tpu.memory_space<vmem>>, vector<1x64xf32>
    %234 = vector.broadcast %233 : vector<1x64xf32> to vector<16x64xf32>
    %235 = arith.addf %232, %234 : vector<16x64xf32>
    %cst_109 = arith.constant 0.000000e+00 : f32
    %236 = vector.broadcast %cst_109 : f32 to vector<16x64xf32>
    %237 = arith.maximumf %235, %236 : vector<16x64xf32>
    %c0_110 = arith.constant 0 : index
    %c0_111 = arith.constant 0 : index
    %238 = vector.load %arg11[%c0_110, %c0_111] : memref<64x32xf32, #tpu.memory_space<vmem>>, vector<64x32xf32>
    %cst_112 = arith.constant dense<0.000000e+00> : vector<16x32xf32>
    %239 = tpu.matmul %237, %238, %cst_112 {dimension_numbers = #tpu.dot_dimension_numbers<[1], [0], [0], [1], [0, 0, 1, 1], [], []>} : vector<16x64xf32>, vector<64x32xf32>, vector<16x32xf32> -> vector<16x32xf32>
    %c0_113 = arith.constant 0 : index
    %c0_114 = arith.constant 0 : index
    %240 = vector.load %arg12[%c0_113, %c0_114] : memref<1x32xf32, #tpu.memory_space<vmem>>, vector<1x32xf32>
    %241 = vector.broadcast %240 : vector<1x32xf32> to vector<16x32xf32>
    %242 = arith.addf %239, %241 : vector<16x32xf32>
    %243 = arith.addf %230, %242 : vector<16x32xf32>
    %c4 = arith.constant 4 : index
    %c0_115 = arith.constant 0 : index
    %244 = vector.load %arg13[%c4, %c0_115] : memref<6x32xf32, #tpu.memory_space<vmem>>, vector<1x32xf32>
    %c5 = arith.constant 5 : index
    %c0_116 = arith.constant 0 : index
    %245 = vector.load %arg13[%c5, %c0_116] : memref<6x32xf32, #tpu.memory_space<vmem>>, vector<1x32xf32>
    %cst_117 = arith.constant dense<0.000000e+00> : vector<16xf32>
    %246 = vector.multi_reduction <add>, %243, %cst_117 [1] : vector<16x32xf32> to vector<16xf32>
    %247 = vector.shape_cast %246 : vector<16xf32> to vector<16x1xf32>
    %cst_118 = arith.constant 3.200000e+01 : f32
    %248 = vector.broadcast %cst_118 : f32 to vector<16x1xf32>
    %249 = arith.divf %247, %248 : vector<16x1xf32>
    %250 = vector.broadcast %249 : vector<16x1xf32> to vector<16x32xf32>
    %251 = arith.subf %243, %250 : vector<16x32xf32>
    %252 = arith.mulf %251, %251 : vector<16x32xf32>
    %cst_119 = arith.constant dense<0.000000e+00> : vector<16xf32>
    %253 = vector.multi_reduction <add>, %252, %cst_119 [1] : vector<16x32xf32> to vector<16xf32>
    %254 = vector.shape_cast %253 : vector<16xf32> to vector<16x1xf32>
    %cst_120 = arith.constant 3.200000e+01 : f32
    %255 = vector.broadcast %cst_120 : f32 to vector<16x1xf32>
    %256 = arith.divf %254, %255 : vector<16x1xf32>
    %257 = vector.broadcast %249 : vector<16x1xf32> to vector<16x32xf32>
    %258 = arith.subf %243, %257 : vector<16x32xf32>
    %cst_121 = arith.constant 9.99999974E-6 : f32
    %259 = vector.broadcast %cst_121 : f32 to vector<16x1xf32>
    %260 = arith.addf %256, %259 : vector<16x1xf32>
    %261 = math.rsqrt %260 : vector<16x1xf32>
    %262 = vector.broadcast %261 : vector<16x1xf32> to vector<16x32xf32>
    %263 = arith.mulf %258, %262 : vector<16x32xf32>
    %264 = vector.broadcast %244 : vector<1x32xf32> to vector<16x32xf32>
    %265 = arith.mulf %263, %264 : vector<16x32xf32>
    %266 = vector.broadcast %245 : vector<1x32xf32> to vector<16x32xf32>
    %267 = arith.addf %265, %266 : vector<16x32xf32>
    %c0_122 = arith.constant 0 : index
    %c0_123 = arith.constant 0 : index
    %c0_124 = arith.constant 0 : index
    %268 = vector.load %arg14[%c0_122, %c0_123, %c0_124] : memref<1x16x32xf32, #tpu.memory_space<vmem>>, vector<1x16x32xf32>
    %269 = vector.shape_cast %268 : vector<1x16x32xf32> to vector<16x32xf32>
    %270 = vector.shape_cast %267 : vector<16x32xf32> to vector<1x16x32xf32>
    tpu.vector_store %arg14[%c0_122, %c0_123, %c0_124], %270 {strides = array<i32>} : memref<1x16x32xf32, #tpu.memory_space<vmem>>, vector<1x16x32xf32>,
    return
  }
  func.func @transform_0(%arg0: i32) -> (i32, i32) {
    %c0_i32 = arith.constant 0 : i32
    %c0_i32_0 = arith.constant 0 : i32
    %c0_i32_1 = arith.constant 0 : i32
    return %c0_i32, %c0_i32_0 : i32, i32
  }
  func.func @transform_1(%arg0: i32) -> (i32, i32, i32) {
    %c0_i32 = arith.constant 0 : i32
    %c0_i32_0 = arith.constant 0 : i32
    %c0_i32_1 = arith.constant 0 : i32
    return %arg0, %c0_i32, %c0_i32_0 : i32, i32, i32
  }
  func.func @transform_2(%arg0: i32) -> (i32, i32, i32) {
    %c0_i32 = arith.constant 0 : i32
    %c0_i32_0 = arith.constant 0 : i32
    %c0_i32_1 = arith.constant 0 : i32
    return %arg0, %c0_i32, %c0_i32_0 : i32, i32, i32
  }
  func.func @transform_3(%arg0: i32) -> (i32, i32, i32) {
    %c0_i32 = arith.constant 0 : i32
    %c0_i32_0 = arith.constant 0 : i32
    %c0_i32_1 = arith.constant 0 : i32
    return %arg0, %c0_i32, %c0_i32_0 : i32, i32, i32
  }
  func.func @transform_4(%arg0: i32) -> (i32, i32, i32) {
    %c0_i32 = arith.constant 0 : i32
    %c0_i32_0 = arith.constant 0 : i32
    %c0_i32_1 = arith.constant 0 : i32
    %c0_i32_2 = arith.constant 0 : i32
    return %c0_i32, %c0_i32_0, %c0_i32_1 : i32, i32, i32
  }
  func.func @transform_5(%arg0: i32) -> (i32, i32) {
    %c0_i32 = arith.constant 0 : i32
    %c0_i32_0 = arith.constant 0 : i32
    %c0_i32_1 = arith.constant 0 : i32
    return %c0_i32, %c0_i32_0 : i32, i32
  }
  func.func @transform_6(%arg0: i32) -> (i32, i32, i32) {
    %c0_i32 = arith.constant 0 : i32
    %c0_i32_0 = arith.constant 0 : i32
    %c0_i32_1 = arith.constant 0 : i32
    %c0_i32_2 = arith.constant 0 : i32
    return %c0_i32, %c0_i32_0, %c0_i32_1 : i32, i32, i32
  }
  func.func @transform_7(%arg0: i32) -> (i32, i32) {
    %c0_i32 = arith.constant 0 : i32
    %c0_i32_0 = arith.constant 0 : i32
    %c0_i32_1 = arith.constant 0 : i32
    return %c0_i32, %c0_i32_0 : i32, i32
  }
  func.func @transform_8(%arg0: i32) -> (i32, i32) {
    %c0_i32 = arith.constant 0 : i32
    %c0_i32_0 = arith.constant 0 : i32
    %c0_i32_1 = arith.constant 0 : i32
    return %c0_i32, %c0_i32_0 : i32, i32
  }
  func.func @transform_9(%arg0: i32) -> (i32, i32) {
    %c0_i32 = arith.constant 0 : i32
    %c0_i32_0 = arith.constant 0 : i32
    %c0_i32_1 = arith.constant 0 : i32
    return %c0_i32, %c0_i32_0 : i32, i32
  }
  func.func @transform_10(%arg0: i32) -> (i32, i32) {
    %c0_i32 = arith.constant 0 : i32
    %c0_i32_0 = arith.constant 0 : i32
    %c0_i32_1 = arith.constant 0 : i32
    return %c0_i32, %c0_i32_0 : i32, i32
  }
  func.func @transform_11(%arg0: i32) -> (i32, i32) {
    %c0_i32 = arith.constant 0 : i32
    %c0_i32_0 = arith.constant 0 : i32
    %c0_i32_1 = arith.constant 0 : i32
    return %c0_i32, %c0_i32_0 : i32, i32
  }
  func.func @transform_12(%arg0: i32) -> (i32, i32) {
    %c0_i32 = arith.constant 0 : i32
    %c0_i32_0 = arith.constant 0 : i32
    %c0_i32_1 = arith.constant 0 : i32
    return %c0_i32, %c0_i32_0 : i32, i32
  }
  func.func @transform_13(%arg0: i32) -> (i32, i32, i32) {
    %c0_i32 = arith.constant 0 : i32
    %c0_i32_0 = arith.constant 0 : i32
    %c0_i32_1 = arith.constant 0 : i32
    return %arg0, %c0_i32, %c0_i32_0 : i32, i32, i32
  }
}

</mosaic_0001>

<llo_original>
// kernel: decoder_layer_forward.1
$region0: #{decoder_layer_forward.1}
  #allocation0 [shape = 'u32[]', space=smem, size = 0x4, offset = 0x4, fixed_abs, tag = 'smem constant byte address 0x4 - core index']
  #allocation1 [shape = 'u32[144,128]{1,0:T(1,128)}', space=vmem, size = 0x12000, scoped, tag = 'internal scratch']
  %s0 = inlined_call_operand.hbm [shape: f32[16,32], index: 0, kind: input, shape index: {}]
  %s1 = inlined_call_operand.vmem [shape: f32[2,16,32], index: 1, kind: input, shape index: {}]
  %s2 = inlined_call_operand.vmem [shape: f32[2,16,32], index: 2, kind: input, shape index: {}]
  %s3 = inlined_call_operand.vmem [shape: f32[2,16,32], index: 3, kind: input, shape index: {}]
  %s4 = inlined_call_operand.vmem [shape: f32[4,32,32], index: 4, kind: input, shape index: {}]
  %s5 = inlined_call_operand.vmem [shape: f32[4,32], index: 5, kind: input, shape index: {}]
  %s6 = inlined_call_operand.vmem [shape: f32[4,32,32], index: 6, kind: input, shape index: {}]
  %s7 = inlined_call_operand.hbm [shape: f32[4,32], index: 7, kind: input, shape index: {}]
  %s8 = inlined_call_operand.vmem [shape: f32[32,64], index: 8, kind: input, shape index: {}]
  %s9 = inlined_call_operand.vmem [shape: f32[1,64], index: 9, kind: input, shape index: {}]
  %s10 = inlined_call_operand.vmem [shape: f32[64,32], index: 10, kind: input, shape index: {}]
  %s11 = inlined_call_operand.vmem [shape: f32[1,32], index: 11, kind: input, shape index: {}]
  %s12 = inlined_call_operand.vmem [shape: f32[6,32], index: 12, kind: input, shape index: {}]
  %s13 = inlined_call_operand.vmem [shape: f32[2,16,32], index: 13, kind: output, shape index: {}]
  %s14 = sld [smem:[#allocation0]]
  $region93: #{decoder_layer_forward.1} parent=0
    _
  %s16 = ssub.s32 1, %s14
  %s17 = scalar_select 0, %s16, %s14
  $region1: #{decoder_layer_forward.1} parent=0
    #allocation2 [shape = 'u8[8192]{0}', space=vmem, size = 0x2000, scoped, tag = 'input window, operand 0, single buffered']
    #allocation3 [shape = 's32[2]{0}', space=sflag, size = 0x8, scoped, tag = 'scoped memory for decoder_layer_forward.1']
    #allocation4 [shape = 'u8[2048]{0}', space=vmem, size = 0x800, scoped, tag = 'input window, operand 7, single buffered']
    #allocation5 [shape = 's32[1]{0}', space=sflag, size = 0x4, scoped, tag = 'scoped memory for decoder_layer_forward.1']
    %18 = vsyncpa [#allocation3], 0
    %19 = vsyncpa [#allocation5], 0
    loop: start=0, step=1, limit=4
    $region2: #{decoder_layer_forward.1} parent=1 // loop_pre_header
      _
    $region3: #{decoder_layer_forward.1} parent=1 // loop_header
      %s21 = sphi 0, %s25
      %p22 = scmp.ge.s32.totalorder %s21, 4
      %s29 = sphi 0, %s29
      %s31 = sphi 0, %s29
      %s32 = sphi 0, %s31
      %s46 = sphi 0, %s32
      %s52 = sphi 0, %s54
      %s55 = sphi 0, %s52
      %s56 = sphi 0, %s55
      %s72 = sphi 0, %s56
      %s78 = sphi 0, %s80
      %s81 = sphi 0, %s78
      %s82 = sphi 0, %s81
      %s98 = sphi 0, %s82
      %s104 = sphi 0, %s106
      %s107 = sphi 0, %s104
      %s108 = sphi 0, %s107
      %s124 = sphi 0, %s108
      %s128 = sphi 0, %s128
      %s130 = sphi 0, %s128
      %s131 = sphi 0, %s130
      %s145 = sphi 0, %s131
      %s149 = sphi 0, %s149
      %s151 = sphi 0, %s149
      %s152 = sphi 0, %s151
      %s166 = sphi 0, %s152
      %s170 = sphi 0, %s170
      %s172 = sphi 0, %s170
      %s173 = sphi 0, %s172
      %s187 = sphi 0, %s173
      %s191 = sphi 0, %s191
      %s193 = sphi 0, %s191
      %s194 = sphi 0, %s193
      %s208 = sphi 0, %s194
      %s212 = sphi 0, %s212
      %s214 = sphi 0, %s212
      %s215 = sphi 0, %s214
      %s229 = sphi 0, %s215
      %s233 = sphi 0, %s233
      %s235 = sphi 0, %s233
      %s236 = sphi 0, %s235
      %s250 = sphi 0, %s236
      %s254 = sphi 0, %s254
      %s256 = sphi 0, %s254
      %s257 = sphi 0, %s256
      %s271 = sphi 0, %s257
      %s275 = sphi 0, %s275
      %s277 = sphi 0, %s275
      %s278 = sphi 0, %s277
      %s292 = sphi 0, %s278
      %s296 = sphi 0, %s296
      %s298 = sphi 0, %s296
      %s299 = sphi 0, %s298
      %s313 = sphi 0, %s299
      %s319 = sphi 0, %s321
      %s322 = sphi 0, %s319
      %s323 = sphi 0, %s322
      %s339 = sphi 0, %s323
    $region4: #{decoder_layer_forward.1} parent=1 // loop_header_branch
      %24 = sbr.rel (%p22) target = $region8
    $region5: #{decoder_layer_forward.1} parent=1 // loop_body
      %s26 = ssub.s32 %s21, 1
      %s27 = ssub.s32 %s21, 2
      %s28 = sadd.s32 %s21, 1
      %s30 = sadd.s32 %s29, 1
      %p33 = scmp.eq.s32.totalorder %s21, 1
      %p34 = scmp.ne.s32.totalorder %s29, %s31
      %p35 = scmp.eq.s32.totalorder %s21, 0
      %p36 = por %p34, %p35
      %p37 = scmp.ne.s32.totalorder %s29, %s31
      %p38 = scmp.eq.s32.totalorder %s26, 1
      %p39 = por %p37, %p38
      %p40 = scmp.ne.s32.totalorder %s31, %s32
      %p41 = scmp.eq.s32.totalorder %s26, 0
      %p42 = por %p40, %p41
      %p43 = scmp.ne.s32.totalorder %s31, %s32
      %p44 = scmp.eq.s32.totalorder %s27, 1
      %p45 = por %p43, %p44
      %p47 = scmp.ne.s32.totalorder %s32, %s46
      %p48 = scmp.eq.s32.totalorder %s27, 0
      %p49 = por %p47, %p48
      %s50 = ssub.s32 %s21, %s28
      %p51 = scmp.eq.s32.totalorder %s50, 0
      %s53 = sadd.s32 %s52, 1
      %s54 = scalar_select %p51, %s52, %s53
      %p57 = pneg %p51
      %p58 = scmp.eq.s32.totalorder %s21, 1
      %p59 = por %p57, %p58
      %p60 = scmp.ne.s32.totalorder %s52, %s55
      %p61 = scmp.eq.s32.totalorder %s21, 0
      %p62 = por %p60, %p61
      %p63 = scmp.ne.s32.totalorder %s52, %s55
      %p64 = scmp.eq.s32.totalorder %s26, 1
      %p65 = por %p63, %p64
      %p66 = scmp.ne.s32.totalorder %s55, %s56
      %p67 = scmp.eq.s32.totalorder %s26, 0
      %p68 = por %p66, %p67
      %p69 = scmp.ne.s32.totalorder %s55, %s56
      %p70 = scmp.eq.s32.totalorder %s27, 1
      %p71 = por %p69, %p70
      %p73 = scmp.ne.s32.totalorder %s56, %s72
      %p74 = scmp.eq.s32.totalorder %s27, 0
      %p75 = por %p73, %p74
      %s76 = ssub.s32 %s21, %s28
      %p77 = scmp.eq.s32.totalorder %s76, 0
      %s79 = sadd.s32 %s78, 1
      %s80 = scalar_select %p77, %s78, %s79
      %p83 = pneg %p77
      %p84 = scmp.eq.s32.totalorder %s21, 1
      %p85 = por %p83, %p84
      %p86 = scmp.ne.s32.totalorder %s78, %s81
      %p87 = scmp.eq.s32.totalorder %s21, 0
      %p88 = por %p86, %p87
      %p89 = scmp.ne.s32.totalorder %s78, %s81
      %p90 = scmp.eq.s32.totalorder %s26, 1
      %p91 = por %p89, %p90
      %p92 = scmp.ne.s32.totalorder %s81, %s82
      %p93 = scmp.eq.s32.totalorder %s26, 0
      %p94 = por %p92, %p93
      %p95 = scmp.ne.s32.totalorder %s81, %s82
      %p96 = scmp.eq.s32.totalorder %s27, 1
      %p97 = por %p95, %p96
      %p99 = scmp.ne.s32.totalorder %s82, %s98
      %p100 = scmp.eq.s32.totalorder %s27, 0
      %p101 = por %p99, %p100
      %s102 = ssub.s32 %s21, %s28
      %p103 = scmp.eq.s32.totalorder %s102, 0
      %s105 = sadd.s32 %s104, 1
      %s106 = scalar_select %p103, %s104, %s105
      %p109 = pneg %p103
      %p110 = scmp.eq.s32.totalorder %s21, 1
      %p111 = por %p109, %p110
      %p112 = scmp.ne.s32.totalorder %s104, %s107
      %p113 = scmp.eq.s32.totalorder %s21, 0
      %p114 = por %p112, %p113
      %p115 = scmp.ne.s32.totalorder %s104, %s107
      %p116 = scmp.eq.s32.totalorder %s26, 1
      %p117 = por %p115, %p116
      %p118 = scmp.ne.s32.totalorder %s107, %s108
      %p119 = scmp.eq.s32.totalorder %s26, 0
      %p120 = por %p118, %p119
      %p121 = scmp.ne.s32.totalorder %s107, %s108
      %p122 = scmp.eq.s32.totalorder %s27, 1
      %p123 = por %p121, %p122
      %p125 = scmp.ne.s32.totalorder %s108, %s124
      %p126 = scmp.eq.s32.totalorder %s27, 0
      %p127 = por %p125, %p126
      %s129 = sadd.s32 %s128, 1
      %p132 = scmp.eq.s32.totalorder %s21, 1
      %p133 = scmp.ne.s32.totalorder %s128, %s130
      %p134 = scmp.eq.s32.totalorder %s21, 0
      %p135 = por %p133, %p134
      %p136 = scmp.ne.s32.totalorder %s128, %s130
      %p137 = scmp.eq.s32.totalorder %s26, 1
      %p138 = por %p136, %p137
      %p139 = scmp.ne.s32.totalorder %s130, %s131
      %p140 = scmp.eq.s32.totalorder %s26, 0
      %p141 = por %p139, %p140
      %p142 = scmp.ne.s32.totalorder %s130, %s131
      %p143 = scmp.eq.s32.totalorder %s27, 1
      %p144 = por %p142, %p143
      %p146 = scmp.ne.s32.totalorder %s131, %s145
      %p147 = scmp.eq.s32.totalorder %s27, 0
      %p148 = por %p146, %p147
      %s150 = sadd.s32 %s149, 1
      %p153 = scmp.eq.s32.totalorder %s21, 1
      %p154 = scmp.ne.s32.totalorder %s149, %s151
      %p155 = scmp.eq.s32.totalorder %s21, 0
      %p156 = por %p154, %p155
      %p157 = scmp.ne.s32.totalorder %s149, %s151
      %p158 = scmp.eq.s32.totalorder %s26, 1
      %p159 = por %p157, %p158
      %p160 = scmp.ne.s32.totalorder %s151, %s152
      %p161 = scmp.eq.s32.totalorder %s26, 0
      %p162 = por %p160, %p161
      %p163 = scmp.ne.s32.totalorder %s151, %s152
      %p164 = scmp.eq.s32.totalorder %s27, 1
      %p165 = por %p163, %p164
      %p167 = scmp.ne.s32.totalorder %s152, %s166
      %p168 = scmp.eq.s32.totalorder %s27, 0
      %p169 = por %p167, %p168
      %s171 = sadd.s32 %s170, 1
      %p174 = scmp.eq.s32.totalorder %s21, 1
      %p175 = scmp.ne.s32.totalorder %s170, %s172
      %p176 = scmp.eq.s32.totalorder %s21, 0
      %p177 = por %p175, %p176
      %p178 = scmp.ne.s32.totalorder %s170, %s172
      %p179 = scmp.eq.s32.totalorder %s26, 1
      %p180 = por %p178, %p179
      %p181 = scmp.ne.s32.totalorder %s172, %s173
      %p182 = scmp.eq.s32.totalorder %s26, 0
      %p183 = por %p181, %p182
      %p184 = scmp.ne.s32.totalorder %s172, %s173
      %p185 = scmp.eq.s32.totalorder %s27, 1
      %p186 = por %p184, %p185
      %p188 = scmp.ne.s32.totalorder %s173, %s187
      %p189 = scmp.eq.s32.totalorder %s27, 0
      %p190 = por %p188, %p189
      %s192 = sadd.s32 %s191, 1
      %p195 = scmp.eq.s32.totalorder %s21, 1
      %p196 = scmp.ne.s32.totalorder %s191, %s193
      %p197 = scmp.eq.s32.totalorder %s21, 0
      %p198 = por %p196, %p197
      %p199 = scmp.ne.s32.totalorder %s191, %s193
      %p200 = scmp.eq.s32.totalorder %s26, 1
      %p201 = por %p199, %p200
      %p202 = scmp.ne.s32.totalorder %s193, %s194
      %p203 = scmp.eq.s32.totalorder %s26, 0
      %p204 = por %p202, %p203
      %p205 = scmp.ne.s32.totalorder %s193, %s194
      %p206 = scmp.eq.s32.totalorder %s27, 1
      %p207 = por %p205, %p206
      %p209 = scmp.ne.s32.totalorder %s194, %s208
      %p210 = scmp.eq.s32.totalorder %s27, 0
      %p211 = por %p209, %p210
      %s213 = sadd.s32 %s212, 1
      %p216 = scmp.eq.s32.totalorder %s21, 1
      %p217 = scmp.ne.s32.totalorder %s212, %s214
      %p218 = scmp.eq.s32.totalorder %s21, 0
      %p219 = por %p217, %p218
      %p220 = scmp.ne.s32.totalorder %s212, %s214
      %p221 = scmp.eq.s32.totalorder %s26, 1
      %p222 = por %p220, %p221
      %p223 = scmp.ne.s32.totalorder %s214, %s215
      %p224 = scmp.eq.s32.totalorder %s26, 0
      %p225 = por %p223, %p224
      %p226 = scmp.ne.s32.totalorder %s214, %s215
      %p227 = scmp.eq.s32.totalorder %s27, 1
      %p228 = por %p226, %p227
      %p230 = scmp.ne.s32.totalorder %s215, %s229
      %p231 = scmp.eq.s32.totalorder %s27, 0
      %p232 = por %p230, %p231
      %s234 = sadd.s32 %s233, 1
      %p237 = scmp.eq.s32.totalorder %s21, 1
      %p238 = scmp.ne.s32.totalorder %s233, %s235
      %p239 = scmp.eq.s32.totalorder %s21, 0
      %p240 = por %p238, %p239
      %p241 = scmp.ne.s32.totalorder %s233, %s235
      %p242 = scmp.eq.s32.totalorder %s26, 1
      %p243 = por %p241, %p242
      %p244 = scmp.ne.s32.totalorder %s235, %s236
      %p245 = scmp.eq.s32.totalorder %s26, 0
      %p246 = por %p244, %p245
      %p247 = scmp.ne.s32.totalorder %s235, %s236
      %p248 = scmp.eq.s32.totalorder %s27, 1
      %p249 = por %p247, %p248
      %p251 = scmp.ne.s32.totalorder %s236, %s250
      %p252 = scmp.eq.s32.totalorder %s27, 0
      %p253 = por %p251, %p252
      %s255 = sadd.s32 %s254, 1
      %p258 = scmp.eq.s32.totalorder %s21, 1
      %p259 = scmp.ne.s32.totalorder %s254, %s256
      %p260 = scmp.eq.s32.totalorder %s21, 0
      %p261 = por %p259, %p260
      %p262 = scmp.ne.s32.totalorder %s254, %s256
      %p263 = scmp.eq.s32.totalorder %s26, 1
      %p264 = por %p262, %p263
      %p265 = scmp.ne.s32.totalorder %s256, %s257
      %p266 = scmp.eq.s32.totalorder %s26, 0
      %p267 = por %p265, %p266
      %p268 = scmp.ne.s32.totalorder %s256, %s257
      %p269 = scmp.eq.s32.totalorder %s27, 1
      %p270 = por %p268, %p269
      %p272 = scmp.ne.s32.totalorder %s257, %s271
      %p273 = scmp.eq.s32.totalorder %s27, 0
      %p274 = por %p272, %p273
      %s276 = sadd.s32 %s275, 1
      %p279 = scmp.eq.s32.totalorder %s21, 1
      %p280 = scmp.ne.s32.totalorder %s275, %s277
      %p281 = scmp.eq.s32.totalorder %s21, 0
      %p282 = por %p280, %p281
      %p283 = scmp.ne.s32.totalorder %s275, %s277
      %p284 = scmp.eq.s32.totalorder %s26, 1
      %p285 = por %p283, %p284
      %p286 = scmp.ne.s32.totalorder %s277, %s278
      %p287 = scmp.eq.s32.totalorder %s26, 0
      %p288 = por %p286, %p287
      %p289 = scmp.ne.s32.totalorder %s277, %s278
      %p290 = scmp.eq.s32.totalorder %s27, 1
      %p291 = por %p289, %p290
      %p293 = scmp.ne.s32.totalorder %s278, %s292
      %p294 = scmp.eq.s32.totalorder %s27, 0
      %p295 = por %p293, %p294
      %s297 = sadd.s32 %s296, 1
      %p300 = scmp.eq.s32.totalorder %s21, 1
      %p301 = scmp.ne.s32.totalorder %s296, %s298
      %p302 = scmp.eq.s32.totalorder %s21, 0
      %p303 = por %p301, %p302
      %p304 = scmp.ne.s32.totalorder %s296, %s298
      %p305 = scmp.eq.s32.totalorder %s26, 1
      %p306 = por %p304, %p305
      %p307 = scmp.ne.s32.totalorder %s298, %s299
      %p308 = scmp.eq.s32.totalorder %s26, 0
      %p309 = por %p307, %p308
      %p310 = scmp.ne.s32.totalorder %s298, %s299
      %p311 = scmp.eq.s32.totalorder %s27, 1
      %p312 = por %p310, %p311
      %p314 = scmp.ne.s32.totalorder %s299, %s313
      %p315 = scmp.eq.s32.totalorder %s27, 0
      %p316 = por %p314, %p315
      %s317 = ssub.s32 %s21, %s28
      %p318 = scmp.eq.s32.totalorder %s317, 0
      %s320 = sadd.s32 %s319, 1
      %s321 = scalar_select %p318, %s319, %s320
      %p324 = pneg %p318
      %p325 = scmp.eq.s32.totalorder %s21, 1
      %p326 = por %p324, %p325
      %p327 = scmp.ne.s32.totalorder %s319, %s322
      %p328 = scmp.eq.s32.totalorder %s21, 0
      %p329 = por %p327, %p328
      %p330 = scmp.ne.s32.totalorder %s319, %s322
      %p331 = scmp.eq.s32.totalorder %s26, 1
      %p332 = por %p330, %p331
      %p333 = scmp.ne.s32.totalorder %s322, %s323
      %p334 = scmp.eq.s32.totalorder %s26, 0
      %p335 = por %p333, %p334
      %p336 = scmp.ne.s32.totalorder %s322, %s323
      %p337 = scmp.eq.s32.totalorder %s27, 1
      %p338 = por %p336, %p337
      %p340 = scmp.ne.s32.totalorder %s323, %s339
      %p341 = scmp.eq.s32.totalorder %s27, 0
      %p342 = por %p340, %p341
      %p343 = scmp.le.s32.totalorder 1, %s21
      %p344 = scmp.lt.s32.totalorder %s21, 3
      %p345 = pnand %p343, %p344
      %p346 = pneg %p345
      // Predicated region
      $region9: #{decoder_layer_forward.1} parent=5 // pred_check
        _
      $region10: #{decoder_layer_forward.1} parent=5 // pred_check_branch
        %348 = sbr.rel (%p345) target = $region12
      $region11: #{decoder_layer_forward.1} parent=5 // pred_region
        %s349 = ssub.s32 %s21, 1
        // Predicated region
        $region13: #{decoder_layer_forward.1} parent=11 // pred_check
          %p350 = pneg %p42
        $region14: #{decoder_layer_forward.1} parent=11 // pred_check_branch
          %352 = sbr.rel (%p350) target = $region16
        $region15: #{decoder_layer_forward.1} parent=11 // pred_region
          %s354 = ssub.s32 256, 256
          %355 = vsyncadd [#allocation3], %s354
          %s356 = sshll.u32 [#allocation2], 4
          %s357 = int_to_ptr.vmem [resolvable:$true] %s356
          %362 = dma.hbm_to_vmem [thread:$0]  %s0, 256, %s357, [#allocation3], 128, 128, 8
        $region16: #{decoder_layer_forward.1} parent=11 // pred_fallthru
          _
        // Predicated region
        $region17: #{decoder_layer_forward.1} parent=11 // pred_check
          %p363 = pneg %p141
        $region18: #{decoder_layer_forward.1} parent=11 // pred_check_branch
          %365 = sbr.rel (%p363) target = $region20
        $region19: #{decoder_layer_forward.1} parent=11 // pred_region
          _
        $region20: #{decoder_layer_forward.1} parent=11 // pred_fallthru
          _
        // Predicated region
        $region21: #{decoder_layer_forward.1} parent=11 // pred_check
          %p366 = pneg %p162
        $region22: #{decoder_layer_forward.1} parent=11 // pred_check_branch
          %368 = sbr.rel (%p366) target = $region24
        $region23: #{decoder_layer_forward.1} parent=11 // pred_region
          _
        $region24: #{decoder_layer_forward.1} parent=11 // pred_fallthru
          _
        // Predicated region
        $region25: #{decoder_layer_forward.1} parent=11 // pred_check
          %p369 = pneg %p183
        $region26: #{decoder_layer_forward.1} parent=11 // pred_check_branch
          %371 = sbr.rel (%p369) target = $region28
        $region27: #{decoder_layer_forward.1} parent=11 // pred_region
          _
        $region28: #{decoder_layer_forward.1} parent=11 // pred_fallthru
          _
        // Predicated region
        $region29: #{decoder_layer_forward.1} parent=11 // pred_check
          %p372 = pneg %p204
        $region30: #{decoder_layer_forward.1} parent=11 // pred_check_branch
          %374 = sbr.rel (%p372) target = $region32
        $region31: #{decoder_layer_forward.1} parent=11 // pred_region
          %s376 = ssub.s32 64, 64
          %377 = vsyncadd [#allocation5], %s376
          %s379 = sshll.u32 [#allocation4], 4
          %s380 = int_to_ptr.vmem [resolvable:$true] %s379
          %382 = dma.hbm_to_vmem [thread:$0]  %s7, 64, %s380, [#allocation5]
        $region32: #{decoder_layer_forward.1} parent=11 // pred_fallthru
          _
        // Predicated region
        $region33: #{decoder_layer_forward.1} parent=11 // pred_check
          %p383 = pneg %p225
        $region34: #{decoder_layer_forward.1} parent=11 // pred_check_branch
          %385 = sbr.rel (%p383) target = $region36
        $region35: #{decoder_layer_forward.1} parent=11 // pred_region
          _
        $region36: #{decoder_layer_forward.1} parent=11 // pred_fallthru
          _
        // Predicated region
        $region37: #{decoder_layer_forward.1} parent=11 // pred_check
          %p386 = pneg %p246
        $region38: #{decoder_layer_forward.1} parent=11 // pred_check_branch
          %388 = sbr.rel (%p386) target = $region40
        $region39: #{decoder_layer_forward.1} parent=11 // pred_region
          _
        $region40: #{decoder_layer_forward.1} parent=11 // pred_fallthru
          _
        // Predicated region
        $region41: #{decoder_layer_forward.1} parent=11 // pred_check
          %p389 = pneg %p267
        $region42: #{decoder_layer_forward.1} parent=11 // pred_check_branch
          %391 = sbr.rel (%p389) target = $region44
        $region43: #{decoder_layer_forward.1} parent=11 // pred_region
          _
        $region44: #{decoder_layer_forward.1} parent=11 // pred_fallthru
          _
        // Predicated region
        $region45: #{decoder_layer_forward.1} parent=11 // pred_check
          %p392 = pneg %p288
        $region46: #{decoder_layer_forward.1} parent=11 // pred_check_branch
          %394 = sbr.rel (%p392) target = $region48
        $region47: #{decoder_layer_forward.1} parent=11 // pred_region
          _
        $region48: #{decoder_layer_forward.1} parent=11 // pred_fallthru
          _
        // Predicated region
        $region49: #{decoder_layer_forward.1} parent=11 // pred_check
          %p395 = pneg %p309
        $region50: #{decoder_layer_forward.1} parent=11 // pred_check_branch
          %397 = sbr.rel (%p395) target = $region52
        $region51: #{decoder_layer_forward.1} parent=11 // pred_region
          _
        $region52: #{decoder_layer_forward.1} parent=11 // pred_fallthru
          _
      $region12: #{decoder_layer_forward.1} parent=5 // pred_fallthru
        _
      %p398 = scmp.lt.s32.totalorder %s21, 2
      // Predicated region
      $region53: #{decoder_layer_forward.1} parent=5 // pred_check
        %p399 = pneg %p398
      $region54: #{decoder_layer_forward.1} parent=5 // pred_check_branch
        %401 = sbr.rel (%p399) target = $region56
      $region55: #{decoder_layer_forward.1} parent=5 // pred_region
        // Predicated region
        $region57: #{decoder_layer_forward.1} parent=55 // pred_check
          %p402 = pneg %p62
        $region58: #{decoder_layer_forward.1} parent=55 // pred_check_branch
          %404 = sbr.rel (%p402) target = $region60
        $region59: #{decoder_layer_forward.1} parent=55 // pred_region
          %p405 = scmp.lt.s32.totalorder %s21, 1
          %s406 = scalar_select %p405, %s21, 1
          %s407 = smul.addr %s406, 2
          %s408 = smul.addr %s407, 8
          %s409 = scalar_lea.vmem %s1, %s408
        $region60: #{decoder_layer_forward.1} parent=55 // pred_fallthru
          _
        // Predicated region
        $region61: #{decoder_layer_forward.1} parent=55 // pred_check
          %p410 = pneg %p88
        $region62: #{decoder_layer_forward.1} parent=55 // pred_check_branch
          %412 = sbr.rel (%p410) target = $region64
        $region63: #{decoder_layer_forward.1} parent=55 // pred_region
          %p413 = scmp.lt.s32.totalorder %s21, 1
          %s414 = scalar_select %p413, %s21, 1
          %s415 = smul.addr %s414, 2
          %s416 = smul.addr %s415, 8
          %s417 = scalar_lea.vmem %s2, %s416
        $region64: #{decoder_layer_forward.1} parent=55 // pred_fallthru
          _
        // Predicated region
        $region65: #{decoder_layer_forward.1} parent=55 // pred_check
          %p418 = pneg %p114
        $region66: #{decoder_layer_forward.1} parent=55 // pred_check_branch
          %420 = sbr.rel (%p418) target = $region68
        $region67: #{decoder_layer_forward.1} parent=55 // pred_region
          %p421 = scmp.lt.s32.totalorder %s21, 1
          %s422 = scalar_select %p421, %s21, 1
          %s423 = smul.addr %s422, 2
          %s424 = smul.addr %s423, 8
          %s425 = scalar_lea.vmem %s3, %s424
        $region68: #{decoder_layer_forward.1} parent=55 // pred_fallthru
          _
      $region56: #{decoder_layer_forward.1} parent=5 // pred_fallthru
        _
      %p426 = scmp.le.s32.totalorder 1, %s21
      %p427 = scmp.lt.s32.totalorder %s21, 3
      %p428 = pnand %p426, %p427
      %p429 = pneg %p428
      // Predicated region
      $region69: #{decoder_layer_forward.1} parent=5 // pred_check
        _
      $region70: #{decoder_layer_forward.1} parent=5 // pred_check_branch
        %431 = sbr.rel (%p428) target = $region72
      $region71: #{decoder_layer_forward.1} parent=5 // pred_region
        %s432 = ssub.s32 %s21, 1
        // Predicated region
        $region73: #{decoder_layer_forward.1} parent=71 // pred_check
          %p433 = pneg %p42
        $region74: #{decoder_layer_forward.1} parent=71 // pred_check_branch
          %435 = sbr.rel (%p433) target = $region76
        $region75: #{decoder_layer_forward.1} parent=71 // pred_region
          %436 = dma.done [#allocation3], 256
        $region76: #{decoder_layer_forward.1} parent=71 // pred_fallthru
          _
        // Predicated region
        $region77: #{decoder_layer_forward.1} parent=71 // pred_check
          %p437 = pneg %p204
        $region78: #{decoder_layer_forward.1} parent=71 // pred_check_branch
          %439 = sbr.rel (%p437) target = $region80
        $region79: #{decoder_layer_forward.1} parent=71 // pred_region
          %440 = dma.done [#allocation5], 64
        $region80: #{decoder_layer_forward.1} parent=71 // pred_fallthru
          _
        %p441 = pneg %p42
        %p442 = pneg %p39
        %p443 = scmp.lt.s32.totalorder %s26, 1
        %s444 = scalar_select %p443, %s26, 1
        %s445 = smul.addr %s444, 2
        %s446 = smul.addr %s445, 8
        %s447 = scalar_lea.vmem %s1, %s446
        %p448 = pneg %p68
        %p449 = pneg %p65
        %p450 = scmp.lt.s32.totalorder %s26, 1
        %s451 = scalar_select %p450, %s26, 1
        %s452 = smul.addr %s451, 2
        %s453 = smul.addr %s452, 8
        %s454 = scalar_lea.vmem %s2, %s453
        %p455 = pneg %p94
        %p456 = pneg %p91
        %p457 = scmp.lt.s32.totalorder %s26, 1
        %s458 = scalar_select %p457, %s26, 1
        %s459 = smul.addr %s458, 2
        %s460 = smul.addr %s459, 8
        %s461 = scalar_lea.vmem %s3, %s460
        %p462 = pneg %p120
        %p463 = pneg %p117
        %p464 = pneg %p141
        %p465 = pneg %p138
        %p466 = pneg %p162
        %p467 = pneg %p159
        %p468 = pneg %p183
        %p469 = pneg %p180
        %p470 = pneg %p204
        %p471 = pneg %p201
        %p472 = pneg %p225
        %p473 = pneg %p222
        %p474 = pneg %p246
        %p475 = pneg %p243
        %p476 = pneg %p267
        %p477 = pneg %p264
        %p478 = pneg %p288
        %p479 = pneg %p285
        %p480 = pneg %p309
        %p481 = pneg %p306
        %p482 = pneg %p335
        %p483 = pneg %p332
        %p484 = scmp.lt.s32.totalorder %s26, 1
        %s485 = scalar_select %p484, %s26, 1
        %s486 = smul.addr %s485, 2
        %s487 = smul.addr %s486, 8
        %s488 = scalar_lea.vmem %s13, %s487
        %p489 = scmp.lt.s32.totalorder %s26, 1
        %s490 = scalar_select %p489, %s26, 1
        %s491 = smul.addr %s490, 2
        %s492 = smul.addr %s491, 8
        %s493 = scalar_lea.vmem %s1, %s492
        %p494 = scmp.lt.s32.totalorder %s26, 1
        %s495 = scalar_select %p494, %s26, 1
        %s496 = smul.addr %s495, 2
        %s497 = smul.addr %s496, 8
        %s498 = scalar_lea.vmem %s2, %s497
        %p499 = scmp.lt.s32.totalorder %s26, 1
        %s500 = scalar_select %p499, %s26, 1
        %s501 = smul.addr %s500, 2
        %s502 = smul.addr %s501, 8
        %s503 = scalar_lea.vmem %s3, %s502
        %p504 = scmp.lt.s32.totalorder %s26, 1
        %s505 = scalar_select %p504, %s26, 1
        %s506 = smul.addr %s505, 2
        %s507 = smul.addr %s506, 8
        %s508 = scalar_lea.vmem %s13, %s507
        %v509 = vld [vmem:[#allocation2] sm:$0xff]
        %v510 = vld [vmem:[#allocation2 + $0x8] sm:$0xff]
        %v511 = vld [vmem:[%s493] sm:$0xff]
        %v512 = vld [vmem:[%s493 + $0x8] sm:$0xff]
        %v513 = vld [vmem:[%s498] sm:$0xff]
        %v514 = vld [vmem:[%s498 + $0x8] sm:$0xff]
        %v515 = vld [vmem:[%s503] sm:$0xff]
        %v516 = vld [vmem:[%s503 + $0x8] sm:$0xff]
        %v517 = vadd.f32 %v509, %v515
        %v518 = vadd.f32 %v510, %v516
        %v519 = vadd.f32 %v511, %v515
        %v520 = vadd.f32 %v512, %v516
        %v521 = vld [vmem:[%s4] sm:$0xff]
        %v522 = vld [vmem:[%s4 + $0x8] sm:$0xff]
        %v523 = vld [vmem:[%s4 + $0x10] sm:$0xff]
        %v524 = vld [vmem:[%s4 + $0x18] sm:$0xff]
        %v525 = vld [vmem:[%s5] sm:$0x1]
        %v526 = vlaneseq
        %v527 = vshrl.u32 %v526, 7
        %v528 = vsub.s32 0, %v527
        %v529 = vrot.slane %v525, %v528
        %vm530 = vcmask 261120
        %v532 = vsel %vm530, %v517, 0
        %v535 = vsel %vm530, %v518, 0
        %537 = vmatprep.subr.mxu0 0.0
        %538 = vmatpush1.msra.mxu0 0.0
        %539 = vmatprep.subr.mxu0 0.0
        %540 = vmatpush1.msra.mxu0 0.0
        %541 = vmatprep.subr.mxu0 0.0
        %542 = vmatpush1.msra.mxu0 0.0
        %543 = vmatprep.subr.mxu0 0.0
        %544 = vmatpush1.msra.mxu0 0.0
        %545 = vmatprep.subr.mxu0 0.0
        %546 = vmatpush1.msra.mxu0 0.0
        %547 = vmatprep.subr.mxu0 0.0
        %548 = vmatpush1.msra.mxu0 0.0
        %549 = vmatprep.subr.mxu0 0.0
        %550 = vmatpush1.msra.mxu0 0.0
        %551 = vmatprep.subr.mxu0 0.0
        %552 = vmatpush1.msra.mxu0 0.0
        %553 = vmatprep.subr.mxu0 0.0
        %554 = vmatpush1.msra.mxu0 0.0
        %555 = vmatprep.subr.mxu0 0.0
        %556 = vmatpush1.msra.mxu0 0.0
        %557 = vmatprep.subr.mxu0 0.0
        %558 = vmatpush1.msra.mxu0 0.0
        %559 = vmatprep.subr.mxu0 0.0
        %560 = vmatpush1.msra.mxu0 0.0
        %561 = vmatprep.subr.mxu0 0.0
        %562 = vmatpush1.msra.mxu0 %v524
        %563 = vmatprep.subr.mxu0 0.0
        %564 = vmatpush1.msra.mxu0 %v523
        %565 = vmatprep.subr.mxu0 0.0
        %566 = vmatpush1.msra.mxu0 %v522
        %567 = vmatprep.subr.mxu0 0.0
        %568 = vmatpush1.msra.mxu0 %v521
        %569 = vmatprep.subr.mxu0 0.0
        %570 = vmatpush2.msra.mxu0 0.0
        %571 = vmatprep.subr.mxu0 0.0
        %572 = vmatpush2.msra.mxu0 0.0
        %573 = vmatprep.subr.mxu0 0.0
        %574 = vmatpush2.msra.mxu0 0.0
        %575 = vmatprep.subr.mxu0 0.0
        %576 = vmatpush2.msra.mxu0 0.0
        %577 = vmatprep.subr.mxu0 0.0
        %578 = vmatpush2.msra.mxu0 0.0
        %579 = vmatprep.subr.mxu0 0.0
        %580 = vmatpush2.msra.mxu0 0.0
        %581 = vmatprep.subr.mxu0 0.0
        %582 = vmatpush2.msra.mxu0 0.0
        %583 = vmatprep.subr.mxu0 0.0
        %584 = vmatpush2.msra.mxu0 0.0
        %585 = vmatprep.subr.mxu0 0.0
        %586 = vmatpush2.msra.mxu0 0.0
        %587 = vmatprep.subr.mxu0 0.0
        %588 = vmatpush2.msra.mxu0 0.0
        %589 = vmatprep.subr.mxu0 0.0
        %590 = vmatpush2.msra.mxu0 0.0
        %591 = vmatprep.subr.mxu0 0.0
        %592 = vmatpush2.msra.mxu0 0.0
        %593 = vmatprep.subr.mxu0 0.0
        %594 = vmatpush2.msra.mxu0 0.0
        %595 = vmatprep.subr.mxu0 0.0
        %596 = vmatpush2.msra.mxu0 0.0
        %597 = vmatprep.subr.mxu0 0.0
        %598 = vmatpush2.msra.mxu0 0.0
        %599 = vmatprep.subr.mxu0 0.0
        %600 = vmatpush2.msra.mxu0 0.0
        %601 = vmatprep.mubr.f32.mxu0 0.0
        %602 = vmatmul.mubr.f32.gmra.mxu0 %v532
        %v603 = vpop.f32.mrf.mxu0
        %v604 = vadd.f32 %v529, %v603
        %v605 = vpop.f32.mrf.mxu0
        %606 = vmatprep.mubr.f32.mxu0 0.0
        %607 = vmatmul.mubr.f32.gmra.mxu0 %v535
        %v608 = vpop.f32.mrf.mxu0
        %v609 = vadd.f32 %v529, %v608
        %v610 = vpop.f32.mrf.mxu0
        %611 = vdwg.mxu0
        %s612 = scalar_lea.vmem %s4, 32
        %v613 = vld [vmem:[%s612] sm:$0xff]
        %v614 = vld [vmem:[%s612 + $0x8] sm:$0xff]
        %v615 = vld [vmem:[%s612 + $0x10] sm:$0xff]
        %v616 = vld [vmem:[%s612 + $0x18] sm:$0xff]
        %v617 = vld [vmem:[%s5 + $0x1] sm:$0x1]
        %v618 = vlaneseq
        %v619 = vshrl.u32 %v618, 7
        %v620 = vsub.s32 0, %v619
        %v621 = vrot.slane %v617, %v620
        %v623 = vsel %vm530, %v519, 0
        %v626 = vsel %vm530, %v520, 0
        %628 = vmatprep.subr.mxu0 0.0
        %629 = vmatpush1.msra.mxu0 0.0
        %630 = vmatprep.subr.mxu0 0.0
        %631 = vmatpush1.msra.mxu0 0.0
        %632 = vmatprep.subr.mxu0 0.0
        %633 = vmatpush1.msra.mxu0 0.0
        %634 = vmatprep.subr.mxu0 0.0
        %635 = vmatpush1.msra.mxu0 0.0
        %636 = vmatprep.subr.mxu0 0.0
        %637 = vmatpush1.msra.mxu0 0.0
        %638 = vmatprep.subr.mxu0 0.0
        %639 = vmatpush1.msra.mxu0 0.0
        %640 = vmatprep.subr.mxu0 0.0
        %641 = vmatpush1.msra.mxu0 0.0
        %642 = vmatprep.subr.mxu0 0.0
        %643 = vmatpush1.msra.mxu0 0.0
        %644 = vmatprep.subr.mxu0 0.0
        %645 = vmatpush1.msra.mxu0 0.0
        %646 = vmatprep.subr.mxu0 0.0
        %647 = vmatpush1.msra.mxu0 0.0
        %648 = vmatprep.subr.mxu0 0.0
        %649 = vmatpush1.msra.mxu0 0.0
        %650 = vmatprep.subr.mxu0 0.0
        %651 = vmatpush1.msra.mxu0 0.0
        %652 = vmatprep.subr.mxu0 0.0
        %653 = vmatpush1.msra.mxu0 %v616
        %654 = vmatprep.subr.mxu0 0.0
        %655 = vmatpush1.msra.mxu0 %v615
        %656 = vmatprep.subr.mxu0 0.0
        %657 = vmatpush1.msra.mxu0 %v614
        %658 = vmatprep.subr.mxu0 0.0
        %659 = vmatpush1.msra.mxu0 %v613
        %660 = vmatprep.subr.mxu0 0.0
        %661 = vmatpush2.msra.mxu0 0.0
        %662 = vmatprep.subr.mxu0 0.0
        %663 = vmatpush2.msra.mxu0 0.0
        %664 = vmatprep.subr.mxu0 0.0
        %665 = vmatpush2.msra.mxu0 0.0
        %666 = vmatprep.subr.mxu0 0.0
        %667 = vmatpush2.msra.mxu0 0.0
        %668 = vmatprep.subr.mxu0 0.0
        %669 = vmatpush2.msra.mxu0 0.0
        %670 = vmatprep.subr.mxu0 0.0
        %671 = vmatpush2.msra.mxu0 0.0
        %672 = vmatprep.subr.mxu0 0.0
        %673 = vmatpush2.msra.mxu0 0.0
        %674 = vmatprep.subr.mxu0 0.0
        %675 = vmatpush2.msra.mxu0 0.0
        %676 = vmatprep.subr.mxu0 0.0
        %677 = vmatpush2.msra.mxu0 0.0
        %678 = vmatprep.subr.mxu0 0.0
        %679 = vmatpush2.msra.mxu0 0.0
        %680 = vmatprep.subr.mxu0 0.0
        %681 = vmatpush2.msra.mxu0 0.0
        %682 = vmatprep.subr.mxu0 0.0
        %683 = vmatpush2.msra.mxu0 0.0
        %684 = vmatprep.subr.mxu0 0.0
        %685 = vmatpush2.msra.mxu0 0.0
        %686 = vmatprep.subr.mxu0 0.0
        %687 = vmatpush2.msra.mxu0 0.0
        %688 = vmatprep.subr.mxu0 0.0
        %689 = vmatpush2.msra.mxu0 0.0
        %690 = vmatprep.subr.mxu0 0.0
        %691 = vmatpush2.msra.mxu0 0.0
        %692 = vmatprep.mubr.f32.mxu0 0.0
        %693 = vmatmul.mubr.f32.gmra.mxu0 %v623
        %v694 = vpop.f32.mrf.mxu0
        %v695 = vadd.f32 %v621, %v694
        %v696 = vpop.f32.mrf.mxu0
        %697 = vmatprep.mubr.f32.mxu0 0.0
        %698 = vmatmul.mubr.f32.gmra.mxu0 %v626
        %v699 = vpop.f32.mrf.mxu0
        %v700 = vadd.f32 %v621, %v699
        %v701 = vpop.f32.mrf.mxu0
        %702 = vdwg.mxu0
        %s703 = scalar_lea.vmem %s4, 64
        %v704 = vld [vmem:[%s703] sm:$0xff]
        %v705 = vld [vmem:[%s703 + $0x8] sm:$0xff]
        %v706 = vld [vmem:[%s703 + $0x10] sm:$0xff]
        %v707 = vld [vmem:[%s703 + $0x18] sm:$0xff]
        %v708 = vld [vmem:[%s5 + $0x2] sm:$0x1]
        %v709 = vlaneseq
        %v710 = vshrl.u32 %v709, 7
        %v711 = vsub.s32 0, %v710
        %v712 = vrot.slane %v708, %v711
        %v714 = vsel %vm530, %v511, 0
        %v717 = vsel %vm530, %v512, 0
        %719 = vmatprep.subr.mxu0 0.0
        %720 = vmatpush1.msra.mxu0 0.0
        %721 = vmatprep.subr.mxu0 0.0
        %722 = vmatpush1.msra.mxu0 0.0
        %723 = vmatprep.subr.mxu0 0.0
        %724 = vmatpush1.msra.mxu0 0.0
        %725 = vmatprep.subr.mxu0 0.0
        %726 = vmatpush1.msra.mxu0 0.0
        %727 = vmatprep.subr.mxu0 0.0
        %728 = vmatpush1.msra.mxu0 0.0
        %729 = vmatprep.subr.mxu0 0.0
        %730 = vmatpush1.msra.mxu0 0.0
        %731 = vmatprep.subr.mxu0 0.0
        %732 = vmatpush1.msra.mxu0 0.0
        %733 = vmatprep.subr.mxu0 0.0
        %734 = vmatpush1.msra.mxu0 0.0
        %735 = vmatprep.subr.mxu0 0.0
        %736 = vmatpush1.msra.mxu0 0.0
        %737 = vmatprep.subr.mxu0 0.0
        %738 = vmatpush1.msra.mxu0 0.0
        %739 = vmatprep.subr.mxu0 0.0
        %740 = vmatpush1.msra.mxu0 0.0
        %741 = vmatprep.subr.mxu0 0.0
        %742 = vmatpush1.msra.mxu0 0.0
        %743 = vmatprep.subr.mxu0 0.0
        %744 = vmatpush1.msra.mxu0 %v707
        %745 = vmatprep.subr.mxu0 0.0
        %746 = vmatpush1.msra.mxu0 %v706
        %747 = vmatprep.subr.mxu0 0.0
        %748 = vmatpush1.msra.mxu0 %v705
        %749 = vmatprep.subr.mxu0 0.0
        %750 = vmatpush1.msra.mxu0 %v704
        %751 = vmatprep.subr.mxu0 0.0
        %752 = vmatpush2.msra.mxu0 0.0
        %753 = vmatprep.subr.mxu0 0.0
        %754 = vmatpush2.msra.mxu0 0.0
        %755 = vmatprep.subr.mxu0 0.0
        %756 = vmatpush2.msra.mxu0 0.0
        %757 = vmatprep.subr.mxu0 0.0
        %758 = vmatpush2.msra.mxu0 0.0
        %759 = vmatprep.subr.mxu0 0.0
        %760 = vmatpush2.msra.mxu0 0.0
        %761 = vmatprep.subr.mxu0 0.0
        %762 = vmatpush2.msra.mxu0 0.0
        %763 = vmatprep.subr.mxu0 0.0
        %764 = vmatpush2.msra.mxu0 0.0
        %765 = vmatprep.subr.mxu0 0.0
        %766 = vmatpush2.msra.mxu0 0.0
        %767 = vmatprep.subr.mxu0 0.0
        %768 = vmatpush2.msra.mxu0 0.0
        %769 = vmatprep.subr.mxu0 0.0
        %770 = vmatpush2.msra.mxu0 0.0
        %771 = vmatprep.subr.mxu0 0.0
        %772 = vmatpush2.msra.mxu0 0.0
        %773 = vmatprep.subr.mxu0 0.0
        %774 = vmatpush2.msra.mxu0 0.0
        %775 = vmatprep.subr.mxu0 0.0
        %776 = vmatpush2.msra.mxu0 0.0
        %777 = vmatprep.subr.mxu0 0.0
        %778 = vmatpush2.msra.mxu0 0.0
        %779 = vmatprep.subr.mxu0 0.0
        %780 = vmatpush2.msra.mxu0 0.0
        %781 = vmatprep.subr.mxu0 0.0
        %782 = vmatpush2.msra.mxu0 0.0
        %783 = vmatprep.mubr.f32.mxu0 0.0
        %784 = vmatmul.mubr.f32.gmra.mxu0 %v714
        %v785 = vpop.f32.mrf.mxu0
        %v786 = vadd.f32 %v712, %v785
        %v787 = vpop.f32.mrf.mxu0
        %788 = vmatprep.mubr.f32.mxu0 0.0
        %789 = vmatmul.mubr.f32.gmra.mxu0 %v717
        %v790 = vpop.f32.mrf.mxu0
        %v791 = vadd.f32 %v712, %v790
        %v792 = vpop.f32.mrf.mxu0
        %793 = vdwg.mxu0
        %vm794 = vcmask 64512
        %v796 = vsel %vm794, %v604, 0
        %v799 = vsel %vm794, %v609, 0
        %v802 = vsel %vm794, %v695, 0
        %v805 = vsel %vm794, %v700, 0
        %807 = vmatprep.subr.mxu0 0.0
        %808 = vmatpush1.xpose.msra.mxu0 0.0
        %809 = vmatprep.subr.mxu0 0.0
        %810 = vmatpush1.xpose.msra.mxu0 0.0
        %811 = vmatprep.subr.mxu0 0.0
        %812 = vmatpush1.xpose.msra.mxu0 0.0
        %813 = vmatprep.subr.mxu0 0.0
        %814 = vmatpush1.xpose.msra.mxu0 0.0
        %815 = vmatprep.subr.mxu0 0.0
        %816 = vmatpush1.xpose.msra.mxu0 0.0
        %817 = vmatprep.subr.mxu0 0.0
        %818 = vmatpush1.xpose.msra.mxu0 0.0
        %819 = vmatprep.subr.mxu0 0.0
        %820 = vmatpush1.xpose.msra.mxu0 0.0
        %821 = vmatprep.subr.mxu0 0.0
        %822 = vmatpush1.xpose.msra.mxu0 0.0
        %823 = vmatprep.subr.mxu0 0.0
        %824 = vmatpush1.xpose.msra.mxu0 0.0
        %825 = vmatprep.subr.mxu0 0.0
        %826 = vmatpush1.xpose.msra.mxu0 0.0
        %827 = vmatprep.subr.mxu0 0.0
        %828 = vmatpush1.xpose.msra.mxu0 0.0
        %829 = vmatprep.subr.mxu0 0.0
        %830 = vmatpush1.xpose.msra.mxu0 0.0
        %831 = vmatprep.subr.mxu0 0.0
        %832 = vmatpush1.xpose.msra.mxu0 0.0
        %833 = vmatprep.subr.mxu0 0.0
        %834 = vmatpush1.xpose.msra.mxu0 0.0
        %835 = vmatprep.subr.mxu0 0.0
        %836 = vmatpush1.xpose.msra.mxu0 %v805
        %837 = vmatprep.subr.mxu0 0.0
        %838 = vmatpush1.xpose.msra.mxu0 %v802
        %839 = vmatprep.subr.mxu0 0.0
        %840 = vmatpush2.xpose.msra.mxu0 0.0
        %841 = vmatprep.subr.mxu0 0.0
        %842 = vmatpush2.xpose.msra.mxu0 0.0
        %843 = vmatprep.subr.mxu0 0.0
        %844 = vmatpush2.xpose.msra.mxu0 0.0
        %845 = vmatprep.subr.mxu0 0.0
        %846 = vmatpush2.xpose.msra.mxu0 0.0
        %847 = vmatprep.subr.mxu0 0.0
        %848 = vmatpush2.xpose.msra.mxu0 0.0
        %849 = vmatprep.subr.mxu0 0.0
        %850 = vmatpush2.xpose.msra.mxu0 0.0
        %851 = vmatprep.subr.mxu0 0.0
        %852 = vmatpush2.xpose.msra.mxu0 0.0
        %853 = vmatprep.subr.mxu0 0.0
        %854 = vmatpush2.xpose.msra.mxu0 0.0
        %855 = vmatprep.subr.mxu0 0.0
        %856 = vmatpush2.xpose.msra.mxu0 0.0
        %857 = vmatprep.subr.mxu0 0.0
        %858 = vmatpush2.xpose.msra.mxu0 0.0
        %859 = vmatprep.subr.mxu0 0.0
        %860 = vmatpush2.xpose.msra.mxu0 0.0
        %861 = vmatprep.subr.mxu0 0.0
        %862 = vmatpush2.xpose.msra.mxu0 0.0
        %863 = vmatprep.subr.mxu0 0.0
        %864 = vmatpush2.xpose.msra.mxu0 0.0
        %865 = vmatprep.subr.mxu0 0.0
        %866 = vmatpush2.xpose.msra.mxu0 0.0
        %867 = vmatprep.subr.mxu0 0.0
        %868 = vmatpush2.xpose.msra.mxu0 0.0
        %869 = vmatprep.subr.mxu0 0.0
        %870 = vmatpush2.xpose.msra.mxu0 0.0
        %871 = vmatprep.mubr.f32.mxu0 0.0
        %872 = vmatmul.mubr.f32.gmra.mxu0 %v796
        %v873 = vpop.f32.mrf.mxu0
        %v874 = vadd.f32 0.0, %v873
        %v875 = vpop.f32.mrf.mxu0
        %876 = vmatprep.mubr.f32.mxu0 0.0
        %877 = vmatmul.mubr.f32.gmra.mxu0 %v799
        %v878 = vpop.f32.mrf.mxu0
        %v879 = vadd.f32 0.0, %v878
        %v880 = vpop.f32.mrf.mxu0
        %881 = vdwg.mxu0
        %vm882 = vcmask 130048
        %v883 = vsel %vm882, %v874, -inf
        %884 = vmax.xlane.f32.xlu0 %v883
        %v885 = vpop.xlane.xlu0 %884
        %v886 = vsel %vm882, %v879, -inf
        %887 = vmax.xlane.f32.xlu0 %v886
        %v888 = vpop.xlane.xlu0 %887
        %v889 = vsub.f32 %v874, %v885
        %v890 = vsub.f32 %v879, %v888
        %v891 = vmul.f32 %v889, 1.442695
        %v892 = vpow.pop %v891
        %v893 = vmul.f32 %v890, 1.442695
        %v894 = vpow.pop %v893
        %v895 = vsel %vm882, %v892, 0.0
        %896 = vadd.xlane.f32.xlu0 %v895
        %v897 = vpop.xlane.xlu0 %896
        %v898 = vsel %vm882, %v894, 0.0
        %899 = vadd.xlane.f32.xlu0 %v898
        %v900 = vpop.xlane.xlu0 %899
        %v901 = vrcp.pop %v897
        %v902 = vrcp.pop %v900
        %v903 = vmul.f32 %v892, %v901
        %v904 = vmul.f32 %v894, %v902
        %v906 = vsel %vm882, %v903, 0
        %v909 = vsel %vm882, %v904, 0
        %911 = vmatprep.subr.mxu0 0.0
        %912 = vmatpush1.msra.mxu0 0.0
        %913 = vmatprep.subr.mxu0 0.0
        %914 = vmatpush1.msra.mxu0 0.0
        %915 = vmatprep.subr.mxu0 0.0
        %916 = vmatpush1.msra.mxu0 0.0
        %917 = vmatprep.subr.mxu0 0.0
        %918 = vmatpush1.msra.mxu0 0.0
        %919 = vmatprep.subr.mxu0 0.0
        %920 = vmatpush1.msra.mxu0 0.0
        %921 = vmatprep.subr.mxu0 0.0
        %922 = vmatpush1.msra.mxu0 0.0
        %923 = vmatprep.subr.mxu0 0.0
        %924 = vmatpush1.msra.mxu0 0.0
        %925 = vmatprep.subr.mxu0 0.0
        %926 = vmatpush1.msra.mxu0 0.0
        %927 = vmatprep.subr.mxu0 0.0
        %928 = vmatpush1.msra.mxu0 0.0
        %929 = vmatprep.subr.mxu0 0.0
        %930 = vmatpush1.msra.mxu0 0.0
        %931 = vmatprep.subr.mxu0 0.0
        %932 = vmatpush1.msra.mxu0 0.0
        %933 = vmatprep.subr.mxu0 0.0
        %934 = vmatpush1.msra.mxu0 0.0
        %935 = vmatprep.subr.mxu0 0.0
        %936 = vmatpush1.msra.mxu0 0.0
        %937 = vmatprep.subr.mxu0 0.0
        %938 = vmatpush1.msra.mxu0 0.0
        %939 = vmatprep.subr.mxu0 0.0
        %940 = vmatpush1.msra.mxu0 %v791
        %941 = vmatprep.subr.mxu0 0.0
        %942 = vmatpush1.msra.mxu0 %v786
        %943 = vmatprep.subr.mxu0 0.0
        %944 = vmatpush2.msra.mxu0 0.0
        %945 = vmatprep.subr.mxu0 0.0
        %946 = vmatpush2.msra.mxu0 0.0
        %947 = vmatprep.subr.mxu0 0.0
        %948 = vmatpush2.msra.mxu0 0.0
        %949 = vmatprep.subr.mxu0 0.0
        %950 = vmatpush2.msra.mxu0 0.0
        %951 = vmatprep.subr.mxu0 0.0
        %952 = vmatpush2.msra.mxu0 0.0
        %953 = vmatprep.subr.mxu0 0.0
        %954 = vmatpush2.msra.mxu0 0.0
        %955 = vmatprep.subr.mxu0 0.0
        %956 = vmatpush2.msra.mxu0 0.0
        %957 = vmatprep.subr.mxu0 0.0
        %958 = vmatpush2.msra.mxu0 0.0
        %959 = vmatprep.subr.mxu0 0.0
        %960 = vmatpush2.msra.mxu0 0.0
        %961 = vmatprep.subr.mxu0 0.0
        %962 = vmatpush2.msra.mxu0 0.0
        %963 = vmatprep.subr.mxu0 0.0
        %964 = vmatpush2.msra.mxu0 0.0
        %965 = vmatprep.subr.mxu0 0.0
        %966 = vmatpush2.msra.mxu0 0.0
        %967 = vmatprep.subr.mxu0 0.0
        %968 = vmatpush2.msra.mxu0 0.0
        %969 = vmatprep.subr.mxu0 0.0
        %970 = vmatpush2.msra.mxu0 0.0
        %971 = vmatprep.subr.mxu0 0.0
        %972 = vmatpush2.msra.mxu0 0.0
        %973 = vmatprep.subr.mxu0 0.0
        %974 = vmatpush2.msra.mxu0 0.0
        %975 = vmatprep.mubr.f32.mxu0 0.0
        %976 = vmatmul.mubr.f32.gmra.mxu0 %v906
        %v977 = vpop.f32.mrf.mxu0
        %v978 = vadd.f32 0.0, %v977
        %v979 = vpop.f32.mrf.mxu0
        %980 = vmatprep.mubr.f32.mxu0 0.0
        %981 = vmatmul.mubr.f32.gmra.mxu0 %v909
        %v982 = vpop.f32.mrf.mxu0
        %v983 = vadd.f32 0.0, %v982
        %v984 = vpop.f32.mrf.mxu0
        %985 = vdwg.mxu0
        %986 = vrot.lane.b32.xlu0 %v604, 120
        %v987 = vpop.permute.xlu0 %986
        %988 = vrot.lane.b32.xlu0 %v609, 120
        %v989 = vpop.permute.xlu0 %988
        %990 = vrot.lane.b32.xlu0 %v695, 120
        %v991 = vpop.permute.xlu0 %990
        %992 = vrot.lane.b32.xlu0 %v700, 120
        %v993 = vpop.permute.xlu0 %992
        %v994 = vsel %vm794, %v987, 0
        %v996 = vsel %vm794, %v989, 0
        %v998 = vsel %vm794, %v991, 0
        %v1000 = vsel %vm794, %v993, 0
        %1002 = vmatprep.subr.mxu0 0.0
        %1003 = vmatpush1.xpose.msra.mxu0 0.0
        %1004 = vmatprep.subr.mxu0 0.0
        %1005 = vmatpush1.xpose.msra.mxu0 0.0
        %1006 = vmatprep.subr.mxu0 0.0
        %1007 = vmatpush1.xpose.msra.mxu0 0.0
        %1008 = vmatprep.subr.mxu0 0.0
        %1009 = vmatpush1.xpose.msra.mxu0 0.0
        %1010 = vmatprep.subr.mxu0 0.0
        %1011 = vmatpush1.xpose.msra.mxu0 0.0
        %1012 = vmatprep.subr.mxu0 0.0
        %1013 = vmatpush1.xpose.msra.mxu0 0.0
        %1014 = vmatprep.subr.mxu0 0.0
        %1015 = vmatpush1.xpose.msra.mxu0 0.0
        %1016 = vmatprep.subr.mxu0 0.0
        %1017 = vmatpush1.xpose.msra.mxu0 0.0
        %1018 = vmatprep.subr.mxu0 0.0
        %1019 = vmatpush1.xpose.msra.mxu0 0.0
        %1020 = vmatprep.subr.mxu0 0.0
        %1021 = vmatpush1.xpose.msra.mxu0 0.0
        %1022 = vmatprep.subr.mxu0 0.0
        %1023 = vmatpush1.xpose.msra.mxu0 0.0
        %1024 = vmatprep.subr.mxu0 0.0
        %1025 = vmatpush1.xpose.msra.mxu0 0.0
        %1026 = vmatprep.subr.mxu0 0.0
        %1027 = vmatpush1.xpose.msra.mxu0 0.0
        %1028 = vmatprep.subr.mxu0 0.0
        %1029 = vmatpush1.xpose.msra.mxu0 0.0
        %1030 = vmatprep.subr.mxu0 0.0
        %1031 = vmatpush1.xpose.msra.mxu0 %v1000
        %1032 = vmatprep.subr.mxu0 0.0
        %1033 = vmatpush1.xpose.msra.mxu0 %v998
        %1034 = vmatprep.subr.mxu0 0.0
        %1035 = vmatpush2.xpose.msra.mxu0 0.0
        %1036 = vmatprep.subr.mxu0 0.0
        %1037 = vmatpush2.xpose.msra.mxu0 0.0
        %1038 = vmatprep.subr.mxu0 0.0
        %1039 = vmatpush2.xpose.msra.mxu0 0.0
        %1040 = vmatprep.subr.mxu0 0.0
        %1041 = vmatpush2.xpose.msra.mxu0 0.0
        %1042 = vmatprep.subr.mxu0 0.0
        %1043 = vmatpush2.xpose.msra.mxu0 0.0
        %1044 = vmatprep.subr.mxu0 0.0
        %1045 = vmatpush2.xpose.msra.mxu0 0.0
        %1046 = vmatprep.subr.mxu0 0.0
        %1047 = vmatpush2.xpose.msra.mxu0 0.0
        %1048 = vmatprep.subr.mxu0 0.0
        %1049 = vmatpush2.xpose.msra.mxu0 0.0
        %1050 = vmatprep.subr.mxu0 0.0
        %1051 = vmatpush2.xpose.msra.mxu0 0.0
        %1052 = vmatprep.subr.mxu0 0.0
        %1053 = vmatpush2.xpose.msra.mxu0 0.0
        %1054 = vmatprep.subr.mxu0 0.0
        %1055 = vmatpush2.xpose.msra.mxu0 0.0
        %1056 = vmatprep.subr.mxu0 0.0
        %1057 = vmatpush2.xpose.msra.mxu0 0.0
        %1058 = vmatprep.subr.mxu0 0.0
        %1059 = vmatpush2.xpose.msra.mxu0 0.0
        %1060 = vmatprep.subr.mxu0 0.0
        %1061 = vmatpush2.xpose.msra.mxu0 0.0
        %1062 = vmatprep.subr.mxu0 0.0
        %1063 = vmatpush2.xpose.msra.mxu0 0.0
        %1064 = vmatprep.subr.mxu0 0.0
        %1065 = vmatpush2.xpose.msra.mxu0 0.0
        %1066 = vmatprep.mubr.f32.mxu0 0.0
        %1067 = vmatmul.mubr.f32.gmra.mxu0 %v994
        %v1068 = vpop.f32.mrf.mxu0
        %v1069 = vadd.f32 0.0, %v1068
        %v1070 = vpop.f32.mrf.mxu0
        %1071 = vmatprep.mubr.f32.mxu0 0.0
        %1072 = vmatmul.mubr.f32.gmra.mxu0 %v996
        %v1073 = vpop.f32.mrf.mxu0
        %v1074 = vadd.f32 0.0, %v1073
        %v1075 = vpop.f32.mrf.mxu0
        %1076 = vdwg.mxu0
        %v1077 = vsel %vm882, %v1069, -inf
        %1078 = vmax.xlane.f32.xlu0 %v1077
        %v1079 = vpop.xlane.xlu0 %1078
        %v1080 = vsel %vm882, %v1074, -inf
        %1081 = vmax.xlane.f32.xlu0 %v1080
        %v1082 = vpop.xlane.xlu0 %1081
        %v1083 = vsub.f32 %v1069, %v1079
        %v1084 = vsub.f32 %v1074, %v1082
        %v1085 = vmul.f32 %v1083, 1.442695
        %v1086 = vpow.pop %v1085
        %v1087 = vmul.f32 %v1084, 1.442695
        %v1088 = vpow.pop %v1087
        %v1089 = vsel %vm882, %v1086, 0.0
        %1090 = vadd.xlane.f32.xlu0 %v1089
        %v1091 = vpop.xlane.xlu0 %1090
        %v1092 = vsel %vm882, %v1088, 0.0
        %1093 = vadd.xlane.f32.xlu0 %v1092
        %v1094 = vpop.xlane.xlu0 %1093
        %v1095 = vrcp.pop %v1091
        %v1096 = vrcp.pop %v1094
        %v1097 = vmul.f32 %v1086, %v1095
        %v1098 = vmul.f32 %v1088, %v1096
        %1101 = vrot.lane.b32.xlu0 %v786, 120
        %v1102 = vpop.permute.xlu0 %1101
        %1103 = vrot.lane.b32.xlu0 %v791, 120
        %v1104 = vpop.permute.xlu0 %1103
        %v1108 = vsel %vm882, %v1097, 0
        %v1111 = vsel %vm882, %v1098, 0
        %1113 = vmatprep.subr.mxu0 0.0
        %1114 = vmatpush1.msra.mxu0 0.0
        %1115 = vmatprep.subr.mxu0 0.0
        %1116 = vmatpush1.msra.mxu0 0.0
        %1117 = vmatprep.subr.mxu0 0.0
        %1118 = vmatpush1.msra.mxu0 0.0
        %1119 = vmatprep.subr.mxu0 0.0
        %1120 = vmatpush1.msra.mxu0 0.0
        %1121 = vmatprep.subr.mxu0 0.0
        %1122 = vmatpush1.msra.mxu0 0.0
        %1123 = vmatprep.subr.mxu0 0.0
        %1124 = vmatpush1.msra.mxu0 0.0
        %1125 = vmatprep.subr.mxu0 0.0
        %1126 = vmatpush1.msra.mxu0 0.0
        %1127 = vmatprep.subr.mxu0 0.0
        %1128 = vmatpush1.msra.mxu0 0.0
        %1129 = vmatprep.subr.mxu0 0.0
        %1130 = vmatpush1.msra.mxu0 0.0
        %1131 = vmatprep.subr.mxu0 0.0
        %1132 = vmatpush1.msra.mxu0 0.0
        %1133 = vmatprep.subr.mxu0 0.0
        %1134 = vmatpush1.msra.mxu0 0.0
        %1135 = vmatprep.subr.mxu0 0.0
        %1136 = vmatpush1.msra.mxu0 0.0
        %1137 = vmatprep.subr.mxu0 0.0
        %1138 = vmatpush1.msra.mxu0 0.0
        %1139 = vmatprep.subr.mxu0 0.0
        %1140 = vmatpush1.msra.mxu0 0.0
        %1141 = vmatprep.subr.mxu0 0.0
        %1142 = vmatpush1.msra.mxu0 %v1104
        %1143 = vmatprep.subr.mxu0 0.0
        %1144 = vmatpush1.msra.mxu0 %v1102
        %1145 = vmatprep.subr.mxu0 0.0
        %1146 = vmatpush2.msra.mxu0 0.0
        %1147 = vmatprep.subr.mxu0 0.0
        %1148 = vmatpush2.msra.mxu0 0.0
        %1149 = vmatprep.subr.mxu0 0.0
        %1150 = vmatpush2.msra.mxu0 0.0
        %1151 = vmatprep.subr.mxu0 0.0
        %1152 = vmatpush2.msra.mxu0 0.0
        %1153 = vmatprep.subr.mxu0 0.0
        %1154 = vmatpush2.msra.mxu0 0.0
        %1155 = vmatprep.subr.mxu0 0.0
        %1156 = vmatpush2.msra.mxu0 0.0
        %1157 = vmatprep.subr.mxu0 0.0
        %1158 = vmatpush2.msra.mxu0 0.0
        %1159 = vmatprep.subr.mxu0 0.0
        %1160 = vmatpush2.msra.mxu0 0.0
        %1161 = vmatprep.subr.mxu0 0.0
        %1162 = vmatpush2.msra.mxu0 0.0
        %1163 = vmatprep.subr.mxu0 0.0
        %1164 = vmatpush2.msra.mxu0 0.0
        %1165 = vmatprep.subr.mxu0 0.0
        %1166 = vmatpush2.msra.mxu0 0.0
        %1167 = vmatprep.subr.mxu0 0.0
        %1168 = vmatpush2.msra.mxu0 0.0
        %1169 = vmatprep.subr.mxu0 0.0
        %1170 = vmatpush2.msra.mxu0 0.0
        %1171 = vmatprep.subr.mxu0 0.0
        %1172 = vmatpush2.msra.mxu0 0.0
        %1173 = vmatprep.subr.mxu0 0.0
        %1174 = vmatpush2.msra.mxu0 0.0
        %1175 = vmatprep.subr.mxu0 0.0
        %1176 = vmatpush2.msra.mxu0 0.0
        %1177 = vmatprep.mubr.f32.mxu0 0.0
        %1178 = vmatmul.mubr.f32.gmra.mxu0 %v1108
        %v1179 = vpop.f32.mrf.mxu0
        %v1180 = vadd.f32 0.0, %v1179
        %v1181 = vpop.f32.mrf.mxu0
        %1182 = vmatprep.mubr.f32.mxu0 0.0
        %1183 = vmatmul.mubr.f32.gmra.mxu0 %v1111
        %v1184 = vpop.f32.mrf.mxu0
        %v1185 = vadd.f32 0.0, %v1184
        %v1186 = vpop.f32.mrf.mxu0
        %1187 = vdwg.mxu0
        %1188 = vrot.lane.b32.xlu0 %v604, 112
        %v1189 = vpop.permute.xlu0 %1188
        %1190 = vrot.lane.b32.xlu0 %v609, 112
        %v1191 = vpop.permute.xlu0 %1190
        %1192 = vrot.lane.b32.xlu0 %v695, 112
        %v1193 = vpop.permute.xlu0 %1192
        %1194 = vrot.lane.b32.xlu0 %v700, 112
        %v1195 = vpop.permute.xlu0 %1194
        %v1196 = vsel %vm794, %v1189, 0
        %v1198 = vsel %vm794, %v1191, 0
        %v1200 = vsel %vm794, %v1193, 0
        %v1202 = vsel %vm794, %v1195, 0
        %1204 = vmatprep.subr.mxu0 0.0
        %1205 = vmatpush1.xpose.msra.mxu0 0.0
        %1206 = vmatprep.subr.mxu0 0.0
        %1207 = vmatpush1.xpose.msra.mxu0 0.0
        %1208 = vmatprep.subr.mxu0 0.0
        %1209 = vmatpush1.xpose.msra.mxu0 0.0
        %1210 = vmatprep.subr.mxu0 0.0
        %1211 = vmatpush1.xpose.msra.mxu0 0.0
        %1212 = vmatprep.subr.mxu0 0.0
        %1213 = vmatpush1.xpose.msra.mxu0 0.0
        %1214 = vmatprep.subr.mxu0 0.0
        %1215 = vmatpush1.xpose.msra.mxu0 0.0
        %1216 = vmatprep.subr.mxu0 0.0
        %1217 = vmatpush1.xpose.msra.mxu0 0.0
        %1218 = vmatprep.subr.mxu0 0.0
        %1219 = vmatpush1.xpose.msra.mxu0 0.0
        %1220 = vmatprep.subr.mxu0 0.0
        %1221 = vmatpush1.xpose.msra.mxu0 0.0
        %1222 = vmatprep.subr.mxu0 0.0
        %1223 = vmatpush1.xpose.msra.mxu0 0.0
        %1224 = vmatprep.subr.mxu0 0.0
        %1225 = vmatpush1.xpose.msra.mxu0 0.0
        %1226 = vmatprep.subr.mxu0 0.0
        %1227 = vmatpush1.xpose.msra.mxu0 0.0
        %1228 = vmatprep.subr.mxu0 0.0
        %1229 = vmatpush1.xpose.msra.mxu0 0.0
        %1230 = vmatprep.subr.mxu0 0.0
        %1231 = vmatpush1.xpose.msra.mxu0 0.0
        %1232 = vmatprep.subr.mxu0 0.0
        %1233 = vmatpush1.xpose.msra.mxu0 %v1202
        %1234 = vmatprep.subr.mxu0 0.0
        %1235 = vmatpush1.xpose.msra.mxu0 %v1200
        %1236 = vmatprep.subr.mxu0 0.0
        %1237 = vmatpush2.xpose.msra.mxu0 0.0
        %1238 = vmatprep.subr.mxu0 0.0
        %1239 = vmatpush2.xpose.msra.mxu0 0.0
        %1240 = vmatprep.subr.mxu0 0.0
        %1241 = vmatpush2.xpose.msra.mxu0 0.0
        %1242 = vmatprep.subr.mxu0 0.0
        %1243 = vmatpush2.xpose.msra.mxu0 0.0
        %1244 = vmatprep.subr.mxu0 0.0
        %1245 = vmatpush2.xpose.msra.mxu0 0.0
        %1246 = vmatprep.subr.mxu0 0.0
        %1247 = vmatpush2.xpose.msra.mxu0 0.0
        %1248 = vmatprep.subr.mxu0 0.0
        %1249 = vmatpush2.xpose.msra.mxu0 0.0
        %1250 = vmatprep.subr.mxu0 0.0
        %1251 = vmatpush2.xpose.msra.mxu0 0.0
        %1252 = vmatprep.subr.mxu0 0.0
        %1253 = vmatpush2.xpose.msra.mxu0 0.0
        %1254 = vmatprep.subr.mxu0 0.0
        %1255 = vmatpush2.xpose.msra.mxu0 0.0
        %1256 = vmatprep.subr.mxu0 0.0
        %1257 = vmatpush2.xpose.msra.mxu0 0.0
        %1258 = vmatprep.subr.mxu0 0.0
        %1259 = vmatpush2.xpose.msra.mxu0 0.0
        %1260 = vmatprep.subr.mxu0 0.0
        %1261 = vmatpush2.xpose.msra.mxu0 0.0
        %1262 = vmatprep.subr.mxu0 0.0
        %1263 = vmatpush2.xpose.msra.mxu0 0.0
        %1264 = vmatprep.subr.mxu0 0.0
        %1265 = vmatpush2.xpose.msra.mxu0 0.0
        %1266 = vmatprep.subr.mxu0 0.0
        %1267 = vmatpush2.xpose.msra.mxu0 0.0
        %1268 = vmatprep.mubr.f32.mxu0 0.0
        %1269 = vmatmul.mubr.f32.gmra.mxu0 %v1196
        %v1270 = vpop.f32.mrf.mxu0
        %v1271 = vadd.f32 0.0, %v1270
        %v1272 = vpop.f32.mrf.mxu0
        %1273 = vmatprep.mubr.f32.mxu0 0.0
        %1274 = vmatmul.mubr.f32.gmra.mxu0 %v1198
        %v1275 = vpop.f32.mrf.mxu0
        %v1276 = vadd.f32 0.0, %v1275
        %v1277 = vpop.f32.mrf.mxu0
        %1278 = vdwg.mxu0
        %v1279 = vsel %vm882, %v1271, -inf
        %1280 = vmax.xlane.f32.xlu0 %v1279
        %v1281 = vpop.xlane.xlu0 %1280
        %v1282 = vsel %vm882, %v1276, -inf
        %1283 = vmax.xlane.f32.xlu0 %v1282
        %v1284 = vpop.xlane.xlu0 %1283
        %v1285 = vsub.f32 %v1271, %v1281
        %v1286 = vsub.f32 %v1276, %v1284
        %v1287 = vmul.f32 %v1285, 1.442695
        %v1288 = vpow.pop %v1287
        %v1289 = vmul.f32 %v1286, 1.442695
        %v1290 = vpow.pop %v1289
        %v1291 = vsel %vm882, %v1288, 0.0
        %1292 = vadd.xlane.f32.xlu0 %v1291
        %v1293 = vpop.xlane.xlu0 %1292
        %v1294 = vsel %vm882, %v1290, 0.0
        %1295 = vadd.xlane.f32.xlu0 %v1294
        %v1296 = vpop.xlane.xlu0 %1295
        %v1297 = vrcp.pop %v1293
        %v1298 = vrcp.pop %v1296
        %v1299 = vmul.f32 %v1288, %v1297
        %v1300 = vmul.f32 %v1290, %v1298
        %1301 = vrot.lane.b32.xlu0 %v786, 112
        %v1302 = vpop.permute.xlu0 %1301
        %1303 = vrot.lane.b32.xlu0 %v791, 112
        %v1304 = vpop.permute.xlu0 %1303
        %v1308 = vsel %vm882, %v1299, 0
        %v1311 = vsel %vm882, %v1300, 0
        %1313 = vmatprep.subr.mxu0 0.0
        %1314 = vmatpush1.msra.mxu0 0.0
        %1315 = vmatprep.subr.mxu0 0.0
        %1316 = vmatpush1.msra.mxu0 0.0
        %1317 = vmatprep.subr.mxu0 0.0
        %1318 = vmatpush1.msra.mxu0 0.0
        %1319 = vmatprep.subr.mxu0 0.0
        %1320 = vmatpush1.msra.mxu0 0.0
        %1321 = vmatprep.subr.mxu0 0.0
        %1322 = vmatpush1.msra.mxu0 0.0
        %1323 = vmatprep.subr.mxu0 0.0
        %1324 = vmatpush1.msra.mxu0 0.0
        %1325 = vmatprep.subr.mxu0 0.0
        %1326 = vmatpush1.msra.mxu0 0.0
        %1327 = vmatprep.subr.mxu0 0.0
        %1328 = vmatpush1.msra.mxu0 0.0
        %1329 = vmatprep.subr.mxu0 0.0
        %1330 = vmatpush1.msra.mxu0 0.0
        %1331 = vmatprep.subr.mxu0 0.0
        %1332 = vmatpush1.msra.mxu0 0.0
        %1333 = vmatprep.subr.mxu0 0.0
        %1334 = vmatpush1.msra.mxu0 0.0
        %1335 = vmatprep.subr.mxu0 0.0
        %1336 = vmatpush1.msra.mxu0 0.0
        %1337 = vmatprep.subr.mxu0 0.0
        %1338 = vmatpush1.msra.mxu0 0.0
        %1339 = vmatprep.subr.mxu0 0.0
        %1340 = vmatpush1.msra.mxu0 0.0
        %1341 = vmatprep.subr.mxu0 0.0
        %1342 = vmatpush1.msra.mxu0 %v1304
        %1343 = vmatprep.subr.mxu0 0.0
        %1344 = vmatpush1.msra.mxu0 %v1302
        %1345 = vmatprep.subr.mxu0 0.0
        %1346 = vmatpush2.msra.mxu0 0.0
        %1347 = vmatprep.subr.mxu0 0.0
        %1348 = vmatpush2.msra.mxu0 0.0
        %1349 = vmatprep.subr.mxu0 0.0
        %1350 = vmatpush2.msra.mxu0 0.0
        %1351 = vmatprep.subr.mxu0 0.0
        %1352 = vmatpush2.msra.mxu0 0.0
        %1353 = vmatprep.subr.mxu0 0.0
        %1354 = vmatpush2.msra.mxu0 0.0
        %1355 = vmatprep.subr.mxu0 0.0
        %1356 = vmatpush2.msra.mxu0 0.0
        %1357 = vmatprep.subr.mxu0 0.0
        %1358 = vmatpush2.msra.mxu0 0.0
        %1359 = vmatprep.subr.mxu0 0.0
        %1360 = vmatpush2.msra.mxu0 0.0
        %1361 = vmatprep.subr.mxu0 0.0
        %1362 = vmatpush2.msra.mxu0 0.0
        %1363 = vmatprep.subr.mxu0 0.0
        %1364 = vmatpush2.msra.mxu0 0.0
        %1365 = vmatprep.subr.mxu0 0.0
        %1366 = vmatpush2.msra.mxu0 0.0
        %1367 = vmatprep.subr.mxu0 0.0
        %1368 = vmatpush2.msra.mxu0 0.0
        %1369 = vmatprep.subr.mxu0 0.0
        %1370 = vmatpush2.msra.mxu0 0.0
        %1371 = vmatprep.subr.mxu0 0.0
        %1372 = vmatpush2.msra.mxu0 0.0
        %1373 = vmatprep.subr.mxu0 0.0
        %1374 = vmatpush2.msra.mxu0 0.0
        %1375 = vmatprep.subr.mxu0 0.0
        %1376 = vmatpush2.msra.mxu0 0.0
        %1377 = vmatprep.mubr.f32.mxu0 0.0
        %1378 = vmatmul.mubr.f32.gmra.mxu0 %v1308
        %v1379 = vpop.f32.mrf.mxu0
        %v1380 = vadd.f32 0.0, %v1379
        %v1381 = vpop.f32.mrf.mxu0
        %1382 = vmatprep.mubr.f32.mxu0 0.0
        %1383 = vmatmul.mubr.f32.gmra.mxu0 %v1311
        %v1384 = vpop.f32.mrf.mxu0
        %v1385 = vadd.f32 0.0, %v1384
        %v1386 = vpop.f32.mrf.mxu0
        %1387 = vdwg.mxu0
        %1388 = vrot.lane.b32.xlu0 %v604, 104
        %v1389 = vpop.permute.xlu0 %1388
        %1390 = vrot.lane.b32.xlu0 %v609, 104
        %v1391 = vpop.permute.xlu0 %1390
        %1392 = vrot.lane.b32.xlu0 %v695, 104
        %v1393 = vpop.permute.xlu0 %1392
        %1394 = vrot.lane.b32.xlu0 %v700, 104
        %v1395 = vpop.permute.xlu0 %1394
        %v1396 = vsel %vm794, %v1389, 0
        %v1398 = vsel %vm794, %v1391, 0
        %v1400 = vsel %vm794, %v1393, 0
        %v1402 = vsel %vm794, %v1395, 0
        %1404 = vmatprep.subr.mxu0 0.0
        %1405 = vmatpush1.xpose.msra.mxu0 0.0
        %1406 = vmatprep.subr.mxu0 0.0
        %1407 = vmatpush1.xpose.msra.mxu0 0.0
        %1408 = vmatprep.subr.mxu0 0.0
        %1409 = vmatpush1.xpose.msra.mxu0 0.0
        %1410 = vmatprep.subr.mxu0 0.0
        %1411 = vmatpush1.xpose.msra.mxu0 0.0
        %1412 = vmatprep.subr.mxu0 0.0
        %1413 = vmatpush1.xpose.msra.mxu0 0.0
        %1414 = vmatprep.subr.mxu0 0.0
        %1415 = vmatpush1.xpose.msra.mxu0 0.0
        %1416 = vmatprep.subr.mxu0 0.0
        %1417 = vmatpush1.xpose.msra.mxu0 0.0
        %1418 = vmatprep.subr.mxu0 0.0
        %1419 = vmatpush1.xpose.msra.mxu0 0.0
        %1420 = vmatprep.subr.mxu0 0.0
        %1421 = vmatpush1.xpose.msra.mxu0 0.0
        %1422 = vmatprep.subr.mxu0 0.0
        %1423 = vmatpush1.xpose.msra.mxu0 0.0
        %1424 = vmatprep.subr.mxu0 0.0
        %1425 = vmatpush1.xpose.msra.mxu0 0.0
        %1426 = vmatprep.subr.mxu0 0.0
        %1427 = vmatpush1.xpose.msra.mxu0 0.0
        %1428 = vmatprep.subr.mxu0 0.0
        %1429 = vmatpush1.xpose.msra.mxu0 0.0
        %1430 = vmatprep.subr.mxu0 0.0
        %1431 = vmatpush1.xpose.msra.mxu0 0.0
        %1432 = vmatprep.subr.mxu0 0.0
        %1433 = vmatpush1.xpose.msra.mxu0 %v1402
        %1434 = vmatprep.subr.mxu0 0.0
        %1435 = vmatpush1.xpose.msra.mxu0 %v1400
        %1436 = vmatprep.subr.mxu0 0.0
        %1437 = vmatpush2.xpose.msra.mxu0 0.0
        %1438 = vmatprep.subr.mxu0 0.0
        %1439 = vmatpush2.xpose.msra.mxu0 0.0
        %1440 = vmatprep.subr.mxu0 0.0
        %1441 = vmatpush2.xpose.msra.mxu0 0.0
        %1442 = vmatprep.subr.mxu0 0.0
        %1443 = vmatpush2.xpose.msra.mxu0 0.0
        %1444 = vmatprep.subr.mxu0 0.0
        %1445 = vmatpush2.xpose.msra.mxu0 0.0
        %1446 = vmatprep.subr.mxu0 0.0
        %1447 = vmatpush2.xpose.msra.mxu0 0.0
        %1448 = vmatprep.subr.mxu0 0.0
        %1449 = vmatpush2.xpose.msra.mxu0 0.0
        %1450 = vmatprep.subr.mxu0 0.0
        %1451 = vmatpush2.xpose.msra.mxu0 0.0
        %1452 = vmatprep.subr.mxu0 0.0
        %1453 = vmatpush2.xpose.msra.mxu0 0.0
        %1454 = vmatprep.subr.mxu0 0.0
        %1455 = vmatpush2.xpose.msra.mxu0 0.0
        %1456 = vmatprep.subr.mxu0 0.0
        %1457 = vmatpush2.xpose.msra.mxu0 0.0
        %1458 = vmatprep.subr.mxu0 0.0
        %1459 = vmatpush2.xpose.msra.mxu0 0.0
        %1460 = vmatprep.subr.mxu0 0.0
        %1461 = vmatpush2.xpose.msra.mxu0 0.0
        %1462 = vmatprep.subr.mxu0 0.0
        %1463 = vmatpush2.xpose.msra.mxu0 0.0
        %1464 = vmatprep.subr.mxu0 0.0
        %1465 = vmatpush2.xpose.msra.mxu0 0.0
        %1466 = vmatprep.subr.mxu0 0.0
        %1467 = vmatpush2.xpose.msra.mxu0 0.0
        %1468 = vmatprep.mubr.f32.mxu0 0.0
        %1469 = vmatmul.mubr.f32.gmra.mxu0 %v1396
        %v1470 = vpop.f32.mrf.mxu0
        %v1471 = vadd.f32 0.0, %v1470
        %v1472 = vpop.f32.mrf.mxu0
        %1473 = vmatprep.mubr.f32.mxu0 0.0
        %1474 = vmatmul.mubr.f32.gmra.mxu0 %v1398
        %v1475 = vpop.f32.mrf.mxu0
        %v1476 = vadd.f32 0.0, %v1475
        %v1477 = vpop.f32.mrf.mxu0
        %1478 = vdwg.mxu0
        %v1479 = vsel %vm882, %v1471, -inf
        %1480 = vmax.xlane.f32.xlu0 %v1479
        %v1481 = vpop.xlane.xlu0 %1480
        %v1482 = vsel %vm882, %v1476, -inf
        %1483 = vmax.xlane.f32.xlu0 %v1482
        %v1484 = vpop.xlane.xlu0 %1483
        %v1485 = vsub.f32 %v1471, %v1481
        %v1486 = vsub.f32 %v1476, %v1484
        %v1487 = vmul.f32 %v1485, 1.442695
        %v1488 = vpow.pop %v1487
        %v1489 = vmul.f32 %v1486, 1.442695
        %v1490 = vpow.pop %v1489
        %v1491 = vsel %vm882, %v1488, 0.0
        %1492 = vadd.xlane.f32.xlu0 %v1491
        %v1493 = vpop.xlane.xlu0 %1492
        %v1494 = vsel %vm882, %v1490, 0.0
        %1495 = vadd.xlane.f32.xlu0 %v1494
        %v1496 = vpop.xlane.xlu0 %1495
        %v1497 = vrcp.pop %v1493
        %v1498 = vrcp.pop %v1496
        %v1499 = vmul.f32 %v1488, %v1497
        %v1500 = vmul.f32 %v1490, %v1498
        %1501 = vrot.lane.b32.xlu0 %v786, 104
        %v1502 = vpop.permute.xlu0 %1501
        %1503 = vrot.lane.b32.xlu0 %v791, 104
        %v1504 = vpop.permute.xlu0 %1503
        %v1508 = vsel %vm882, %v1499, 0
        %v1511 = vsel %vm882, %v1500, 0
        %1513 = vmatprep.subr.mxu0 0.0
        %1514 = vmatpush1.msra.mxu0 0.0
        %1515 = vmatprep.subr.mxu0 0.0
        %1516 = vmatpush1.msra.mxu0 0.0
        %1517 = vmatprep.subr.mxu0 0.0
        %1518 = vmatpush1.msra.mxu0 0.0
        %1519 = vmatprep.subr.mxu0 0.0
        %1520 = vmatpush1.msra.mxu0 0.0
        %1521 = vmatprep.subr.mxu0 0.0
        %1522 = vmatpush1.msra.mxu0 0.0
        %1523 = vmatprep.subr.mxu0 0.0
        %1524 = vmatpush1.msra.mxu0 0.0
        %1525 = vmatprep.subr.mxu0 0.0
        %1526 = vmatpush1.msra.mxu0 0.0
        %1527 = vmatprep.subr.mxu0 0.0
        %1528 = vmatpush1.msra.mxu0 0.0
        %1529 = vmatprep.subr.mxu0 0.0
        %1530 = vmatpush1.msra.mxu0 0.0
        %1531 = vmatprep.subr.mxu0 0.0
        %1532 = vmatpush1.msra.mxu0 0.0
        %1533 = vmatprep.subr.mxu0 0.0
        %1534 = vmatpush1.msra.mxu0 0.0
        %1535 = vmatprep.subr.mxu0 0.0
        %1536 = vmatpush1.msra.mxu0 0.0
        %1537 = vmatprep.subr.mxu0 0.0
        %1538 = vmatpush1.msra.mxu0 0.0
        %1539 = vmatprep.subr.mxu0 0.0
        %1540 = vmatpush1.msra.mxu0 0.0
        %1541 = vmatprep.subr.mxu0 0.0
        %1542 = vmatpush1.msra.mxu0 %v1504
        %1543 = vmatprep.subr.mxu0 0.0
        %1544 = vmatpush1.msra.mxu0 %v1502
        %1545 = vmatprep.subr.mxu0 0.0
        %1546 = vmatpush2.msra.mxu0 0.0
        %1547 = vmatprep.subr.mxu0 0.0
        %1548 = vmatpush2.msra.mxu0 0.0
        %1549 = vmatprep.subr.mxu0 0.0
        %1550 = vmatpush2.msra.mxu0 0.0
        %1551 = vmatprep.subr.mxu0 0.0
        %1552 = vmatpush2.msra.mxu0 0.0
        %1553 = vmatprep.subr.mxu0 0.0
        %1554 = vmatpush2.msra.mxu0 0.0
        %1555 = vmatprep.subr.mxu0 0.0
        %1556 = vmatpush2.msra.mxu0 0.0
        %1557 = vmatprep.subr.mxu0 0.0
        %1558 = vmatpush2.msra.mxu0 0.0
        %1559 = vmatprep.subr.mxu0 0.0
        %1560 = vmatpush2.msra.mxu0 0.0
        %1561 = vmatprep.subr.mxu0 0.0
        %1562 = vmatpush2.msra.mxu0 0.0
        %1563 = vmatprep.subr.mxu0 0.0
        %1564 = vmatpush2.msra.mxu0 0.0
        %1565 = vmatprep.subr.mxu0 0.0
        %1566 = vmatpush2.msra.mxu0 0.0
        %1567 = vmatprep.subr.mxu0 0.0
        %1568 = vmatpush2.msra.mxu0 0.0
        %1569 = vmatprep.subr.mxu0 0.0
        %1570 = vmatpush2.msra.mxu0 0.0
        %1571 = vmatprep.subr.mxu0 0.0
        %1572 = vmatpush2.msra.mxu0 0.0
        %1573 = vmatprep.subr.mxu0 0.0
        %1574 = vmatpush2.msra.mxu0 0.0
        %1575 = vmatprep.subr.mxu0 0.0
        %1576 = vmatpush2.msra.mxu0 0.0
        %1577 = vmatprep.mubr.f32.mxu0 0.0
        %1578 = vmatmul.mubr.f32.gmra.mxu0 %v1508
        %v1579 = vpop.f32.mrf.mxu0
        %v1580 = vadd.f32 0.0, %v1579
        %v1581 = vpop.f32.mrf.mxu0
        %1582 = vmatprep.mubr.f32.mxu0 0.0
        %1583 = vmatmul.mubr.f32.gmra.mxu0 %v1511
        %v1584 = vpop.f32.mrf.mxu0
        %v1585 = vadd.f32 0.0, %v1584
        %v1586 = vpop.f32.mrf.mxu0
        %1587 = vdwg.mxu0
        %1590 = vrot.lane.b32.xlu0 %v1180, 8
        %v1591 = vpop.permute.xlu0 %1590
        %1592 = vrot.lane.b32.xlu0 %v1185, 8
        %v1593 = vpop.permute.xlu0 %1592
        %1598 = vrot.lane.b32.xlu0 %v1380, 16
        %v1599 = vpop.permute.xlu0 %1598
        %1600 = vrot.lane.b32.xlu0 %v1385, 16
        %v1601 = vpop.permute.xlu0 %1600
        %1606 = vrot.lane.b32.xlu0 %v1580, 24
        %v1607 = vpop.permute.xlu0 %1606
        %1608 = vrot.lane.b32.xlu0 %v1585, 24
        %v1609 = vpop.permute.xlu0 %1608
        %v1612 = vsel %vm794, %v978, %v1591
        %v1613 = vsel %vm794, %v983, %v1593
        %v1614 = vsel %vm882, %v1612, %v1599
        %v1615 = vsel %vm882, %v1613, %v1601
        %vm1616 = vcmask 195584
        %v1617 = vsel %vm1616, %v1614, %v1607
        %v1618 = vsel %vm1616, %v1615, %v1609
        %s1619 = scalar_lea.vmem %s4, 96
        %v1620 = vld [vmem:[%s1619] sm:$0xff]
        %v1621 = vld [vmem:[%s1619 + $0x8] sm:$0xff]
        %v1622 = vld [vmem:[%s1619 + $0x10] sm:$0xff]
        %v1623 = vld [vmem:[%s1619 + $0x18] sm:$0xff]
        %v1624 = vld [vmem:[%s5 + $0x3] sm:$0x1]
        %v1625 = vlaneseq
        %v1626 = vshrl.u32 %v1625, 7
        %v1627 = vsub.s32 0, %v1626
        %v1628 = vrot.slane %v1624, %v1627
        %v1630 = vsel %vm530, %v1617, 0
        %v1633 = vsel %vm530, %v1618, 0
        %1635 = vmatprep.subr.mxu0 0.0
        %1636 = vmatpush1.msra.mxu0 0.0
        %1637 = vmatprep.subr.mxu0 0.0
        %1638 = vmatpush1.msra.mxu0 0.0
        %1639 = vmatprep.subr.mxu0 0.0
        %1640 = vmatpush1.msra.mxu0 0.0
        %1641 = vmatprep.subr.mxu0 0.0
        %1642 = vmatpush1.msra.mxu0 0.0
        %1643 = vmatprep.subr.mxu0 0.0
        %1644 = vmatpush1.msra.mxu0 0.0
        %1645 = vmatprep.subr.mxu0 0.0
        %1646 = vmatpush1.msra.mxu0 0.0
        %1647 = vmatprep.subr.mxu0 0.0
        %1648 = vmatpush1.msra.mxu0 0.0
        %1649 = vmatprep.subr.mxu0 0.0
        %1650 = vmatpush1.msra.mxu0 0.0
        %1651 = vmatprep.subr.mxu0 0.0
        %1652 = vmatpush1.msra.mxu0 0.0
        %1653 = vmatprep.subr.mxu0 0.0
        %1654 = vmatpush1.msra.mxu0 0.0
        %1655 = vmatprep.subr.mxu0 0.0
        %1656 = vmatpush1.msra.mxu0 0.0
        %1657 = vmatprep.subr.mxu0 0.0
        %1658 = vmatpush1.msra.mxu0 0.0
        %1659 = vmatprep.subr.mxu0 0.0
        %1660 = vmatpush1.msra.mxu0 %v1623
        %1661 = vmatprep.subr.mxu0 0.0
        %1662 = vmatpush1.msra.mxu0 %v1622
        %1663 = vmatprep.subr.mxu0 0.0
        %1664 = vmatpush1.msra.mxu0 %v1621
        %1665 = vmatprep.subr.mxu0 0.0
        %1666 = vmatpush1.msra.mxu0 %v1620
        %1667 = vmatprep.subr.mxu0 0.0
        %1668 = vmatpush2.msra.mxu0 0.0
        %1669 = vmatprep.subr.mxu0 0.0
        %1670 = vmatpush2.msra.mxu0 0.0
        %1671 = vmatprep.subr.mxu0 0.0
        %1672 = vmatpush2.msra.mxu0 0.0
        %1673 = vmatprep.subr.mxu0 0.0
        %1674 = vmatpush2.msra.mxu0 0.0
        %1675 = vmatprep.subr.mxu0 0.0
        %1676 = vmatpush2.msra.mxu0 0.0
        %1677 = vmatprep.subr.mxu0 0.0
        %1678 = vmatpush2.msra.mxu0 0.0
        %1679 = vmatprep.subr.mxu0 0.0
        %1680 = vmatpush2.msra.mxu0 0.0
        %1681 = vmatprep.subr.mxu0 0.0
        %1682 = vmatpush2.msra.mxu0 0.0
        %1683 = vmatprep.subr.mxu0 0.0
        %1684 = vmatpush2.msra.mxu0 0.0
        %1685 = vmatprep.subr.mxu0 0.0
        %1686 = vmatpush2.msra.mxu0 0.0
        %1687 = vmatprep.subr.mxu0 0.0
        %1688 = vmatpush2.msra.mxu0 0.0
        %1689 = vmatprep.subr.mxu0 0.0
        %1690 = vmatpush2.msra.mxu0 0.0
        %1691 = vmatprep.subr.mxu0 0.0
        %1692 = vmatpush2.msra.mxu0 0.0
        %1693 = vmatprep.subr.mxu0 0.0
        %1694 = vmatpush2.msra.mxu0 0.0
        %1695 = vmatprep.subr.mxu0 0.0
        %1696 = vmatpush2.msra.mxu0 0.0
        %1697 = vmatprep.subr.mxu0 0.0
        %1698 = vmatpush2.msra.mxu0 0.0
        %1699 = vmatprep.mubr.f32.mxu0 0.0
        %1700 = vmatmul.mubr.f32.gmra.mxu0 %v1630
        %v1701 = vpop.f32.mrf.mxu0
        %v1702 = vadd.f32 %v1628, %v1701
        %v1703 = vpop.f32.mrf.mxu0
        %1704 = vmatprep.mubr.f32.mxu0 0.0
        %1705 = vmatmul.mubr.f32.gmra.mxu0 %v1633
        %v1706 = vpop.f32.mrf.mxu0
        %v1707 = vadd.f32 %v1628, %v1706
        %v1708 = vpop.f32.mrf.mxu0
        %1709 = vdwg.mxu0
        %v1710 = vadd.f32 %v509, %v1702
        %v1711 = vadd.f32 %v510, %v1707
        %v1712 = vld [vmem:[%s12] sm:$0x1]
        %v1713 = vld [vmem:[%s12 + $0x1] sm:$0x1]
        %v1714 = vsel %vm530, %v1710, 0.0
        %1715 = vadd.xlane.f32.xlu0 %v1714
        %v1716 = vpop.xlane.xlu0 %1715
        %v1717 = vsel %vm530, %v1711, 0.0
        %1718 = vadd.xlane.f32.xlu0 %v1717
        %v1719 = vpop.xlane.xlu0 %1718
        %v1720 = vrcp.pop 32.0
        %v1721 = vmul.f32 %v1716, %v1720
        %v1722 = vmul.f32 %v1719, %v1720
        %v1723 = vsub.f32 %v1710, %v1721
        %v1724 = vsub.f32 %v1711, %v1722
        %v1725 = vmul.f32 %v1723, %v1723
        %v1726 = vmul.f32 %v1724, %v1724
        %v1727 = vsel %vm530, %v1725, 0.0
        %1728 = vadd.xlane.f32.xlu0 %v1727
        %v1729 = vpop.xlane.xlu0 %1728
        %v1730 = vsel %vm530, %v1726, 0.0
        %1731 = vadd.xlane.f32.xlu0 %v1730
        %v1732 = vpop.xlane.xlu0 %1731
        %v1733 = vmul.f32 %v1729, %v1720
        %v1734 = vmul.f32 %v1732, %v1720
        %v1735 = vadd.f32 %v1733, 1e-05
        %v1736 = vadd.f32 %v1734, 1e-05
        %v1737 = vrsqrt.pop %v1735
        %v1738 = vrsqrt.pop %v1736
        %v1739 = vmul.f32 %v1723, %v1737
        %v1740 = vmul.f32 %v1724, %v1738
        %v1741 = vlaneseq
        %v1742 = vshrl.u32 %v1741, 7
        %v1743 = vsub.s32 0, %v1742
        %v1744 = vrot.slane %v1712, %v1743
        %v1745 = vmul.f32 %v1739, %v1744
        %v1746 = vmul.f32 %v1740, %v1744
        %v1747 = vlaneseq
        %v1748 = vshrl.u32 %v1747, 7
        %v1749 = vsub.s32 0, %v1748
        %v1750 = vrot.slane %v1713, %v1749
        %v1751 = vadd.f32 %v1745, %v1750
        %v1752 = vadd.f32 %v1746, %v1750
        %v1753 = vadd.f32 %v1751, %v515
        %v1754 = vadd.f32 %v1752, %v516
        %v1755 = vadd.f32 %v513, %v515
        %v1756 = vadd.f32 %v514, %v516
        %v1757 = vld [vmem:[%s6] sm:$0xff]
        %v1758 = vld [vmem:[%s6 + $0x8] sm:$0xff]
        %v1759 = vld [vmem:[%s6 + $0x10] sm:$0xff]
        %v1760 = vld [vmem:[%s6 + $0x18] sm:$0xff]
        %v1761 = vld [vmem:[#allocation4] sm:$0x1]
        %v1762 = vlaneseq
        %v1763 = vshrl.u32 %v1762, 7
        %v1764 = vsub.s32 0, %v1763
        %v1765 = vrot.slane %v1761, %v1764
        %v1767 = vsel %vm530, %v1753, 0
        %v1770 = vsel %vm530, %v1754, 0
        %1772 = vmatprep.subr.mxu0 0.0
        %1773 = vmatpush1.msra.mxu0 0.0
        %1774 = vmatprep.subr.mxu0 0.0
        %1775 = vmatpush1.msra.mxu0 0.0
        %1776 = vmatprep.subr.mxu0 0.0
        %1777 = vmatpush1.msra.mxu0 0.0
        %1778 = vmatprep.subr.mxu0 0.0
        %1779 = vmatpush1.msra.mxu0 0.0
        %1780 = vmatprep.subr.mxu0 0.0
        %1781 = vmatpush1.msra.mxu0 0.0
        %1782 = vmatprep.subr.mxu0 0.0
        %1783 = vmatpush1.msra.mxu0 0.0
        %1784 = vmatprep.subr.mxu0 0.0
        %1785 = vmatpush1.msra.mxu0 0.0
        %1786 = vmatprep.subr.mxu0 0.0
        %1787 = vmatpush1.msra.mxu0 0.0
        %1788 = vmatprep.subr.mxu0 0.0
        %1789 = vmatpush1.msra.mxu0 0.0
        %1790 = vmatprep.subr.mxu0 0.0
        %1791 = vmatpush1.msra.mxu0 0.0
        %1792 = vmatprep.subr.mxu0 0.0
        %1793 = vmatpush1.msra.mxu0 0.0
        %1794 = vmatprep.subr.mxu0 0.0
        %1795 = vmatpush1.msra.mxu0 0.0
        %1796 = vmatprep.subr.mxu0 0.0
        %1797 = vmatpush1.msra.mxu0 %v1760
        %1798 = vmatprep.subr.mxu0 0.0
        %1799 = vmatpush1.msra.mxu0 %v1759
        %1800 = vmatprep.subr.mxu0 0.0
        %1801 = vmatpush1.msra.mxu0 %v1758
        %1802 = vmatprep.subr.mxu0 0.0
        %1803 = vmatpush1.msra.mxu0 %v1757
        %1804 = vmatprep.subr.mxu0 0.0
        %1805 = vmatpush2.msra.mxu0 0.0
        %1806 = vmatprep.subr.mxu0 0.0
        %1807 = vmatpush2.msra.mxu0 0.0
        %1808 = vmatprep.subr.mxu0 0.0
        %1809 = vmatpush2.msra.mxu0 0.0
        %1810 = vmatprep.subr.mxu0 0.0
        %1811 = vmatpush2.msra.mxu0 0.0
        %1812 = vmatprep.subr.mxu0 0.0
        %1813 = vmatpush2.msra.mxu0 0.0
        %1814 = vmatprep.subr.mxu0 0.0
        %1815 = vmatpush2.msra.mxu0 0.0
        %1816 = vmatprep.subr.mxu0 0.0
        %1817 = vmatpush2.msra.mxu0 0.0
        %1818 = vmatprep.subr.mxu0 0.0
        %1819 = vmatpush2.msra.mxu0 0.0
        %1820 = vmatprep.subr.mxu0 0.0
        %1821 = vmatpush2.msra.mxu0 0.0
        %1822 = vmatprep.subr.mxu0 0.0
        %1823 = vmatpush2.msra.mxu0 0.0
        %1824 = vmatprep.subr.mxu0 0.0
        %1825 = vmatpush2.msra.mxu0 0.0
        %1826 = vmatprep.subr.mxu0 0.0
        %1827 = vmatpush2.msra.mxu0 0.0
        %1828 = vmatprep.subr.mxu0 0.0
        %1829 = vmatpush2.msra.mxu0 0.0
        %1830 = vmatprep.subr.mxu0 0.0
        %1831 = vmatpush2.msra.mxu0 0.0
        %1832 = vmatprep.subr.mxu0 0.0
        %1833 = vmatpush2.msra.mxu0 0.0
        %1834 = vmatprep.subr.mxu0 0.0
        %1835 = vmatpush2.msra.mxu0 0.0
        %1836 = vmatprep.mubr.f32.mxu0 0.0
        %1837 = vmatmul.mubr.f32.gmra.mxu0 %v1767
        %v1838 = vpop.f32.mrf.mxu0
        %v1839 = vadd.f32 %v1765, %v1838
        %v1840 = vpop.f32.mrf.mxu0
        %1841 = vmatprep.mubr.f32.mxu0 0.0
        %1842 = vmatmul.mubr.f32.gmra.mxu0 %v1770
        %v1843 = vpop.f32.mrf.mxu0
        %v1844 = vadd.f32 %v1765, %v1843
        %v1845 = vpop.f32.mrf.mxu0
        %1846 = vdwg.mxu0
        %s1847 = scalar_lea.vmem %s6, 32
        %v1848 = vld [vmem:[%s1847] sm:$0xff]
        %v1849 = vld [vmem:[%s1847 + $0x8] sm:$0xff]
        %v1850 = vld [vmem:[%s1847 + $0x10] sm:$0xff]
        %v1851 = vld [vmem:[%s1847 + $0x18] sm:$0xff]
        %v1852 = vld [vmem:[#allocation4 + $0x1] sm:$0x1]
        %v1853 = vlaneseq
        %v1854 = vshrl.u32 %v1853, 7
        %v1855 = vsub.s32 0, %v1854
        %v1856 = vrot.slane %v1852, %v1855
        %v1858 = vsel %vm530, %v1755, 0
        %v1861 = vsel %vm530, %v1756, 0
        %1863 = vmatprep.subr.mxu0 0.0
        %1864 = vmatpush1.msra.mxu0 0.0
        %1865 = vmatprep.subr.mxu0 0.0
        %1866 = vmatpush1.msra.mxu0 0.0
        %1867 = vmatprep.subr.mxu0 0.0
        %1868 = vmatpush1.msra.mxu0 0.0
        %1869 = vmatprep.subr.mxu0 0.0
        %1870 = vmatpush1.msra.mxu0 0.0
        %1871 = vmatprep.subr.mxu0 0.0
        %1872 = vmatpush1.msra.mxu0 0.0
        %1873 = vmatprep.subr.mxu0 0.0
        %1874 = vmatpush1.msra.mxu0 0.0
        %1875 = vmatprep.subr.mxu0 0.0
        %1876 = vmatpush1.msra.mxu0 0.0
        %1877 = vmatprep.subr.mxu0 0.0
        %1878 = vmatpush1.msra.mxu0 0.0
        %1879 = vmatprep.subr.mxu0 0.0
        %1880 = vmatpush1.msra.mxu0 0.0
        %1881 = vmatprep.subr.mxu0 0.0
        %1882 = vmatpush1.msra.mxu0 0.0
        %1883 = vmatprep.subr.mxu0 0.0
        %1884 = vmatpush1.msra.mxu0 0.0
        %1885 = vmatprep.subr.mxu0 0.0
        %1886 = vmatpush1.msra.mxu0 0.0
        %1887 = vmatprep.subr.mxu0 0.0
        %1888 = vmatpush1.msra.mxu0 %v1851
        %1889 = vmatprep.subr.mxu0 0.0
        %1890 = vmatpush1.msra.mxu0 %v1850
        %1891 = vmatprep.subr.mxu0 0.0
        %1892 = vmatpush1.msra.mxu0 %v1849
        %1893 = vmatprep.subr.mxu0 0.0
        %1894 = vmatpush1.msra.mxu0 %v1848
        %1895 = vmatprep.subr.mxu0 0.0
        %1896 = vmatpush2.msra.mxu0 0.0
        %1897 = vmatprep.subr.mxu0 0.0
        %1898 = vmatpush2.msra.mxu0 0.0
        %1899 = vmatprep.subr.mxu0 0.0
        %1900 = vmatpush2.msra.mxu0 0.0
        %1901 = vmatprep.subr.mxu0 0.0
        %1902 = vmatpush2.msra.mxu0 0.0
        %1903 = vmatprep.subr.mxu0 0.0
        %1904 = vmatpush2.msra.mxu0 0.0
        %1905 = vmatprep.subr.mxu0 0.0
        %1906 = vmatpush2.msra.mxu0 0.0
        %1907 = vmatprep.subr.mxu0 0.0
        %1908 = vmatpush2.msra.mxu0 0.0
        %1909 = vmatprep.subr.mxu0 0.0
        %1910 = vmatpush2.msra.mxu0 0.0
        %1911 = vmatprep.subr.mxu0 0.0
        %1912 = vmatpush2.msra.mxu0 0.0
        %1913 = vmatprep.subr.mxu0 0.0
        %1914 = vmatpush2.msra.mxu0 0.0
        %1915 = vmatprep.subr.mxu0 0.0
        %1916 = vmatpush2.msra.mxu0 0.0
        %1917 = vmatprep.subr.mxu0 0.0
        %1918 = vmatpush2.msra.mxu0 0.0
        %1919 = vmatprep.subr.mxu0 0.0
        %1920 = vmatpush2.msra.mxu0 0.0
        %1921 = vmatprep.subr.mxu0 0.0
        %1922 = vmatpush2.msra.mxu0 0.0
        %1923 = vmatprep.subr.mxu0 0.0
        %1924 = vmatpush2.msra.mxu0 0.0
        %1925 = vmatprep.subr.mxu0 0.0
        %1926 = vmatpush2.msra.mxu0 0.0
        %1927 = vmatprep.mubr.f32.mxu0 0.0
        %1928 = vmatmul.mubr.f32.gmra.mxu0 %v1858
        %v1929 = vpop.f32.mrf.mxu0
        %v1930 = vadd.f32 %v1856, %v1929
        %v1931 = vpop.f32.mrf.mxu0
        %1932 = vmatprep.mubr.f32.mxu0 0.0
        %1933 = vmatmul.mubr.f32.gmra.mxu0 %v1861
        %v1934 = vpop.f32.mrf.mxu0
        %v1935 = vadd.f32 %v1856, %v1934
        %v1936 = vpop.f32.mrf.mxu0
        %1937 = vdwg.mxu0
        %s1938 = scalar_lea.vmem %s6, 64
        %v1939 = vld [vmem:[%s1938] sm:$0xff]
        %v1940 = vld [vmem:[%s1938 + $0x8] sm:$0xff]
        %v1941 = vld [vmem:[%s1938 + $0x10] sm:$0xff]
        %v1942 = vld [vmem:[%s1938 + $0x18] sm:$0xff]
        %v1943 = vld [vmem:[#allocation4 + $0x2] sm:$0x1]
        %v1944 = vlaneseq
        %v1945 = vshrl.u32 %v1944, 7
        %v1946 = vsub.s32 0, %v1945
        %v1947 = vrot.slane %v1943, %v1946
        %v1949 = vsel %vm530, %v513, 0
        %v1952 = vsel %vm530, %v514, 0
        %1954 = vmatprep.subr.mxu0 0.0
        %1955 = vmatpush1.msra.mxu0 0.0
        %1956 = vmatprep.subr.mxu0 0.0
        %1957 = vmatpush1.msra.mxu0 0.0
        %1958 = vmatprep.subr.mxu0 0.0
        %1959 = vmatpush1.msra.mxu0 0.0
        %1960 = vmatprep.subr.mxu0 0.0
        %1961 = vmatpush1.msra.mxu0 0.0
        %1962 = vmatprep.subr.mxu0 0.0
        %1963 = vmatpush1.msra.mxu0 0.0
        %1964 = vmatprep.subr.mxu0 0.0
        %1965 = vmatpush1.msra.mxu0 0.0
        %1966 = vmatprep.subr.mxu0 0.0
        %1967 = vmatpush1.msra.mxu0 0.0
        %1968 = vmatprep.subr.mxu0 0.0
        %1969 = vmatpush1.msra.mxu0 0.0
        %1970 = vmatprep.subr.mxu0 0.0
        %1971 = vmatpush1.msra.mxu0 0.0
        %1972 = vmatprep.subr.mxu0 0.0
        %1973 = vmatpush1.msra.mxu0 0.0
        %1974 = vmatprep.subr.mxu0 0.0
        %1975 = vmatpush1.msra.mxu0 0.0
        %1976 = vmatprep.subr.mxu0 0.0
        %1977 = vmatpush1.msra.mxu0 0.0
        %1978 = vmatprep.subr.mxu0 0.0
        %1979 = vmatpush1.msra.mxu0 %v1942
        %1980 = vmatprep.subr.mxu0 0.0
        %1981 = vmatpush1.msra.mxu0 %v1941
        %1982 = vmatprep.subr.mxu0 0.0
        %1983 = vmatpush1.msra.mxu0 %v1940
        %1984 = vmatprep.subr.mxu0 0.0
        %1985 = vmatpush1.msra.mxu0 %v1939
        %1986 = vmatprep.subr.mxu0 0.0
        %1987 = vmatpush2.msra.mxu0 0.0
        %1988 = vmatprep.subr.mxu0 0.0
        %1989 = vmatpush2.msra.mxu0 0.0
        %1990 = vmatprep.subr.mxu0 0.0
        %1991 = vmatpush2.msra.mxu0 0.0
        %1992 = vmatprep.subr.mxu0 0.0
        %1993 = vmatpush2.msra.mxu0 0.0
        %1994 = vmatprep.subr.mxu0 0.0
        %1995 = vmatpush2.msra.mxu0 0.0
        %1996 = vmatprep.subr.mxu0 0.0
        %1997 = vmatpush2.msra.mxu0 0.0
        %1998 = vmatprep.subr.mxu0 0.0
        %1999 = vmatpush2.msra.mxu0 0.0
        %2000 = vmatprep.subr.mxu0 0.0
        %2001 = vmatpush2.msra.mxu0 0.0
        %2002 = vmatprep.subr.mxu0 0.0
        %2003 = vmatpush2.msra.mxu0 0.0
        %2004 = vmatprep.subr.mxu0 0.0
        %2005 = vmatpush2.msra.mxu0 0.0
        %2006 = vmatprep.subr.mxu0 0.0
        %2007 = vmatpush2.msra.mxu0 0.0
        %2008 = vmatprep.subr.mxu0 0.0
        %2009 = vmatpush2.msra.mxu0 0.0
        %2010 = vmatprep.subr.mxu0 0.0
        %2011 = vmatpush2.msra.mxu0 0.0
        %2012 = vmatprep.subr.mxu0 0.0
        %2013 = vmatpush2.msra.mxu0 0.0
        %2014 = vmatprep.subr.mxu0 0.0
        %2015 = vmatpush2.msra.mxu0 0.0
        %2016 = vmatprep.subr.mxu0 0.0
        %2017 = vmatpush2.msra.mxu0 0.0
        %2018 = vmatprep.mubr.f32.mxu0 0.0
        %2019 = vmatmul.mubr.f32.gmra.mxu0 %v1949
        %v2020 = vpop.f32.mrf.mxu0
        %v2021 = vadd.f32 %v1947, %v2020
        %v2022 = vpop.f32.mrf.mxu0
        %2023 = vmatprep.mubr.f32.mxu0 0.0
        %2024 = vmatmul.mubr.f32.gmra.mxu0 %v1952
        %v2025 = vpop.f32.mrf.mxu0
        %v2026 = vadd.f32 %v1947, %v2025
        %v2027 = vpop.f32.mrf.mxu0
        %2028 = vdwg.mxu0
        %v2030 = vsel %vm794, %v1839, 0
        %v2033 = vsel %vm794, %v1844, 0
        %v2036 = vsel %vm794, %v1930, 0
        %v2039 = vsel %vm794, %v1935, 0
        %2041 = vmatprep.subr.mxu0 0.0
        %2042 = vmatpush1.xpose.msra.mxu0 0.0
        %2043 = vmatprep.subr.mxu0 0.0
        %2044 = vmatpush1.xpose.msra.mxu0 0.0
        %2045 = vmatprep.subr.mxu0 0.0
        %2046 = vmatpush1.xpose.msra.mxu0 0.0
        %2047 = vmatprep.subr.mxu0 0.0
        %2048 = vmatpush1.xpose.msra.mxu0 0.0
        %2049 = vmatprep.subr.mxu0 0.0
        %2050 = vmatpush1.xpose.msra.mxu0 0.0
        %2051 = vmatprep.subr.mxu0 0.0
        %2052 = vmatpush1.xpose.msra.mxu0 0.0
        %2053 = vmatprep.subr.mxu0 0.0
        %2054 = vmatpush1.xpose.msra.mxu0 0.0
        %2055 = vmatprep.subr.mxu0 0.0
        %2056 = vmatpush1.xpose.msra.mxu0 0.0
        %2057 = vmatprep.subr.mxu0 0.0
        %2058 = vmatpush1.xpose.msra.mxu0 0.0
        %2059 = vmatprep.subr.mxu0 0.0
        %2060 = vmatpush1.xpose.msra.mxu0 0.0
        %2061 = vmatprep.subr.mxu0 0.0
        %2062 = vmatpush1.xpose.msra.mxu0 0.0
        %2063 = vmatprep.subr.mxu0 0.0
        %2064 = vmatpush1.xpose.msra.mxu0 0.0
        %2065 = vmatprep.subr.mxu0 0.0
        %2066 = vmatpush1.xpose.msra.mxu0 0.0
        %2067 = vmatprep.subr.mxu0 0.0
        %2068 = vmatpush1.xpose.msra.mxu0 0.0
        %2069 = vmatprep.subr.mxu0 0.0
        %2070 = vmatpush1.xpose.msra.mxu0 %v2039
        %2071 = vmatprep.subr.mxu0 0.0
        %2072 = vmatpush1.xpose.msra.mxu0 %v2036
        %2073 = vmatprep.subr.mxu0 0.0
        %2074 = vmatpush2.xpose.msra.mxu0 0.0
        %2075 = vmatprep.subr.mxu0 0.0
        %2076 = vmatpush2.xpose.msra.mxu0 0.0
        %2077 = vmatprep.subr.mxu0 0.0
        %2078 = vmatpush2.xpose.msra.mxu0 0.0
        %2079 = vmatprep.subr.mxu0 0.0
        %2080 = vmatpush2.xpose.msra.mxu0 0.0
        %2081 = vmatprep.subr.mxu0 0.0
        %2082 = vmatpush2.xpose.msra.mxu0 0.0
        %2083 = vmatprep.subr.mxu0 0.0
        %2084 = vmatpush2.xpose.msra.mxu0 0.0
        %2085 = vmatprep.subr.mxu0 0.0
        %2086 = vmatpush2.xpose.msra.mxu0 0.0
        %2087 = vmatprep.subr.mxu0 0.0
        %2088 = vmatpush2.xpose.msra.mxu0 0.0
        %2089 = vmatprep.subr.mxu0 0.0
        %2090 = vmatpush2.xpose.msra.mxu0 0.0
        %2091 = vmatprep.subr.mxu0 0.0
        %2092 = vmatpush2.xpose.msra.mxu0 0.0
        %2093 = vmatprep.subr.mxu0 0.0
        %2094 = vmatpush2.xpose.msra.mxu0 0.0
        %2095 = vmatprep.subr.mxu0 0.0
        %2096 = vmatpush2.xpose.msra.mxu0 0.0
        %2097 = vmatprep.subr.mxu0 0.0
        %2098 = vmatpush2.xpose.msra.mxu0 0.0
        %2099 = vmatprep.subr.mxu0 0.0
        %2100 = vmatpush2.xpose.msra.mxu0 0.0
        %2101 = vmatprep.subr.mxu0 0.0
        %2102 = vmatpush2.xpose.msra.mxu0 0.0
        %2103 = vmatprep.subr.mxu0 0.0
        %2104 = vmatpush2.xpose.msra.mxu0 0.0
        %2105 = vmatprep.mubr.f32.mxu0 0.0
        %2106 = vmatmul.mubr.f32.gmra.mxu0 %v2030
        %v2107 = vpop.f32.mrf.mxu0
        %v2108 = vadd.f32 0.0, %v2107
        %v2109 = vpop.f32.mrf.mxu0
        %2110 = vmatprep.mubr.f32.mxu0 0.0
        %2111 = vmatmul.mubr.f32.gmra.mxu0 %v2033
        %v2112 = vpop.f32.mrf.mxu0
        %v2113 = vadd.f32 0.0, %v2112
        %v2114 = vpop.f32.mrf.mxu0
        %2115 = vdwg.mxu0
        %v2116 = vsel %vm882, %v2108, -inf
        %2117 = vmax.xlane.f32.xlu0 %v2116
        %v2118 = vpop.xlane.xlu0 %2117
        %v2119 = vsel %vm882, %v2113, -inf
        %2120 = vmax.xlane.f32.xlu0 %v2119
        %v2121 = vpop.xlane.xlu0 %2120
        %v2122 = vsub.f32 %v2108, %v2118
        %v2123 = vsub.f32 %v2113, %v2121
        %v2124 = vmul.f32 %v2122, 1.442695
        %v2125 = vpow.pop %v2124
        %v2126 = vmul.f32 %v2123, 1.442695
        %v2127 = vpow.pop %v2126
        %v2128 = vsel %vm882, %v2125, 0.0
        %2129 = vadd.xlane.f32.xlu0 %v2128
        %v2130 = vpop.xlane.xlu0 %2129
        %v2131 = vsel %vm882, %v2127, 0.0
        %2132 = vadd.xlane.f32.xlu0 %v2131
        %v2133 = vpop.xlane.xlu0 %2132
        %v2134 = vrcp.pop %v2130
        %v2135 = vrcp.pop %v2133
        %v2136 = vmul.f32 %v2125, %v2134
        %v2137 = vmul.f32 %v2127, %v2135
        %v2139 = vsel %vm882, %v2136, 0
        %v2142 = vsel %vm882, %v2137, 0
        %2144 = vmatprep.subr.mxu0 0.0
        %2145 = vmatpush1.msra.mxu0 0.0
        %2146 = vmatprep.subr.mxu0 0.0
        %2147 = vmatpush1.msra.mxu0 0.0
        %2148 = vmatprep.subr.mxu0 0.0
        %2149 = vmatpush1.msra.mxu0 0.0
        %2150 = vmatprep.subr.mxu0 0.0
        %2151 = vmatpush1.msra.mxu0 0.0
        %2152 = vmatprep.subr.mxu0 0.0
        %2153 = vmatpush1.msra.mxu0 0.0
        %2154 = vmatprep.subr.mxu0 0.0
        %2155 = vmatpush1.msra.mxu0 0.0
        %2156 = vmatprep.subr.mxu0 0.0
        %2157 = vmatpush1.msra.mxu0 0.0
        %2158 = vmatprep.subr.mxu0 0.0
        %2159 = vmatpush1.msra.mxu0 0.0
        %2160 = vmatprep.subr.mxu0 0.0
        %2161 = vmatpush1.msra.mxu0 0.0
        %2162 = vmatprep.subr.mxu0 0.0
        %2163 = vmatpush1.msra.mxu0 0.0
        %2164 = vmatprep.subr.mxu0 0.0
        %2165 = vmatpush1.msra.mxu0 0.0
        %2166 = vmatprep.subr.mxu0 0.0
        %2167 = vmatpush1.msra.mxu0 0.0
        %2168 = vmatprep.subr.mxu0 0.0
        %2169 = vmatpush1.msra.mxu0 0.0
        %2170 = vmatprep.subr.mxu0 0.0
        %2171 = vmatpush1.msra.mxu0 0.0
        %2172 = vmatprep.subr.mxu0 0.0
        %2173 = vmatpush1.msra.mxu0 %v2026
        %2174 = vmatprep.subr.mxu0 0.0
        %2175 = vmatpush1.msra.mxu0 %v2021
        %2176 = vmatprep.subr.mxu0 0.0
        %2177 = vmatpush2.msra.mxu0 0.0
        %2178 = vmatprep.subr.mxu0 0.0
        %2179 = vmatpush2.msra.mxu0 0.0
        %2180 = vmatprep.subr.mxu0 0.0
        %2181 = vmatpush2.msra.mxu0 0.0
        %2182 = vmatprep.subr.mxu0 0.0
        %2183 = vmatpush2.msra.mxu0 0.0
        %2184 = vmatprep.subr.mxu0 0.0
        %2185 = vmatpush2.msra.mxu0 0.0
        %2186 = vmatprep.subr.mxu0 0.0
        %2187 = vmatpush2.msra.mxu0 0.0
        %2188 = vmatprep.subr.mxu0 0.0
        %2189 = vmatpush2.msra.mxu0 0.0
        %2190 = vmatprep.subr.mxu0 0.0
        %2191 = vmatpush2.msra.mxu0 0.0
        %2192 = vmatprep.subr.mxu0 0.0
        %2193 = vmatpush2.msra.mxu0 0.0
        %2194 = vmatprep.subr.mxu0 0.0
        %2195 = vmatpush2.msra.mxu0 0.0
        %2196 = vmatprep.subr.mxu0 0.0
        %2197 = vmatpush2.msra.mxu0 0.0
        %2198 = vmatprep.subr.mxu0 0.0
        %2199 = vmatpush2.msra.mxu0 0.0
        %2200 = vmatprep.subr.mxu0 0.0
        %2201 = vmatpush2.msra.mxu0 0.0
        %2202 = vmatprep.subr.mxu0 0.0
        %2203 = vmatpush2.msra.mxu0 0.0
        %2204 = vmatprep.subr.mxu0 0.0
        %2205 = vmatpush2.msra.mxu0 0.0
        %2206 = vmatprep.subr.mxu0 0.0
        %2207 = vmatpush2.msra.mxu0 0.0
        %2208 = vmatprep.mubr.f32.mxu0 0.0
        %2209 = vmatmul.mubr.f32.gmra.mxu0 %v2139
        %v2210 = vpop.f32.mrf.mxu0
        %v2211 = vadd.f32 0.0, %v2210
        %v2212 = vpop.f32.mrf.mxu0
        %2213 = vmatprep.mubr.f32.mxu0 0.0
        %2214 = vmatmul.mubr.f32.gmra.mxu0 %v2142
        %v2215 = vpop.f32.mrf.mxu0
        %v2216 = vadd.f32 0.0, %v2215
        %v2217 = vpop.f32.mrf.mxu0
        %2218 = vdwg.mxu0
        %2219 = vrot.lane.b32.xlu0 %v1839, 120
        %v2220 = vpop.permute.xlu0 %2219
        %2221 = vrot.lane.b32.xlu0 %v1844, 120
        %v2222 = vpop.permute.xlu0 %2221
        %2223 = vrot.lane.b32.xlu0 %v1930, 120
        %v2224 = vpop.permute.xlu0 %2223
        %2225 = vrot.lane.b32.xlu0 %v1935, 120
        %v2226 = vpop.permute.xlu0 %2225
        %v2227 = vsel %vm794, %v2220, 0
        %v2229 = vsel %vm794, %v2222, 0
        %v2231 = vsel %vm794, %v2224, 0
        %v2233 = vsel %vm794, %v2226, 0
        %2235 = vmatprep.subr.mxu0 0.0
        %2236 = vmatpush1.xpose.msra.mxu0 0.0
        %2237 = vmatprep.subr.mxu0 0.0
        %2238 = vmatpush1.xpose.msra.mxu0 0.0
        %2239 = vmatprep.subr.mxu0 0.0
        %2240 = vmatpush1.xpose.msra.mxu0 0.0
        %2241 = vmatprep.subr.mxu0 0.0
        %2242 = vmatpush1.xpose.msra.mxu0 0.0
        %2243 = vmatprep.subr.mxu0 0.0
        %2244 = vmatpush1.xpose.msra.mxu0 0.0
        %2245 = vmatprep.subr.mxu0 0.0
        %2246 = vmatpush1.xpose.msra.mxu0 0.0
        %2247 = vmatprep.subr.mxu0 0.0
        %2248 = vmatpush1.xpose.msra.mxu0 0.0
        %2249 = vmatprep.subr.mxu0 0.0
        %2250 = vmatpush1.xpose.msra.mxu0 0.0
        %2251 = vmatprep.subr.mxu0 0.0
        %2252 = vmatpush1.xpose.msra.mxu0 0.0
        %2253 = vmatprep.subr.mxu0 0.0
        %2254 = vmatpush1.xpose.msra.mxu0 0.0
        %2255 = vmatprep.subr.mxu0 0.0
        %2256 = vmatpush1.xpose.msra.mxu0 0.0
        %2257 = vmatprep.subr.mxu0 0.0
        %2258 = vmatpush1.xpose.msra.mxu0 0.0
        %2259 = vmatprep.subr.mxu0 0.0
        %2260 = vmatpush1.xpose.msra.mxu0 0.0
        %2261 = vmatprep.subr.mxu0 0.0
        %2262 = vmatpush1.xpose.msra.mxu0 0.0
        %2263 = vmatprep.subr.mxu0 0.0
        %2264 = vmatpush1.xpose.msra.mxu0 %v2233
        %2265 = vmatprep.subr.mxu0 0.0
        %2266 = vmatpush1.xpose.msra.mxu0 %v2231
        %2267 = vmatprep.subr.mxu0 0.0
        %2268 = vmatpush2.xpose.msra.mxu0 0.0
        %2269 = vmatprep.subr.mxu0 0.0
        %2270 = vmatpush2.xpose.msra.mxu0 0.0
        %2271 = vmatprep.subr.mxu0 0.0
        %2272 = vmatpush2.xpose.msra.mxu0 0.0
        %2273 = vmatprep.subr.mxu0 0.0
        %2274 = vmatpush2.xpose.msra.mxu0 0.0
        %2275 = vmatprep.subr.mxu0 0.0
        %2276 = vmatpush2.xpose.msra.mxu0 0.0
        %2277 = vmatprep.subr.mxu0 0.0
        %2278 = vmatpush2.xpose.msra.mxu0 0.0
        %2279 = vmatprep.subr.mxu0 0.0
        %2280 = vmatpush2.xpose.msra.mxu0 0.0
        %2281 = vmatprep.subr.mxu0 0.0
        %2282 = vmatpush2.xpose.msra.mxu0 0.0
        %2283 = vmatprep.subr.mxu0 0.0
        %2284 = vmatpush2.xpose.msra.mxu0 0.0
        %2285 = vmatprep.subr.mxu0 0.0
        %2286 = vmatpush2.xpose.msra.mxu0 0.0
        %2287 = vmatprep.subr.mxu0 0.0
        %2288 = vmatpush2.xpose.msra.mxu0 0.0
        %2289 = vmatprep.subr.mxu0 0.0
        %2290 = vmatpush2.xpose.msra.mxu0 0.0
        %2291 = vmatprep.subr.mxu0 0.0
        %2292 = vmatpush2.xpose.msra.mxu0 0.0
        %2293 = vmatprep.subr.mxu0 0.0
        %2294 = vmatpush2.xpose.msra.mxu0 0.0
        %2295 = vmatprep.subr.mxu0 0.0
        %2296 = vmatpush2.xpose.msra.mxu0 0.0
        %2297 = vmatprep.subr.mxu0 0.0
        %2298 = vmatpush2.xpose.msra.mxu0 0.0
        %2299 = vmatprep.mubr.f32.mxu0 0.0
        %2300 = vmatmul.mubr.f32.gmra.mxu0 %v2227
        %v2301 = vpop.f32.mrf.mxu0
        %v2302 = vadd.f32 0.0, %v2301
        %v2303 = vpop.f32.mrf.mxu0
        %2304 = vmatprep.mubr.f32.mxu0 0.0
        %2305 = vmatmul.mubr.f32.gmra.mxu0 %v2229
        %v2306 = vpop.f32.mrf.mxu0
        %v2307 = vadd.f32 0.0, %v2306
        %v2308 = vpop.f32.mrf.mxu0
        %2309 = vdwg.mxu0
        %v2310 = vsel %vm882, %v2302, -inf
        %2311 = vmax.xlane.f32.xlu0 %v2310
        %v2312 = vpop.xlane.xlu0 %2311
        %v2313 = vsel %vm882, %v2307, -inf
        %2314 = vmax.xlane.f32.xlu0 %v2313
        %v2315 = vpop.xlane.xlu0 %2314
        %v2316 = vsub.f32 %v2302, %v2312
        %v2317 = vsub.f32 %v2307, %v2315
        %v2318 = vmul.f32 %v2316, 1.442695
        %v2319 = vpow.pop %v2318
        %v2320 = vmul.f32 %v2317, 1.442695
        %v2321 = vpow.pop %v2320
        %v2322 = vsel %vm882, %v2319, 0.0
        %2323 = vadd.xlane.f32.xlu0 %v2322
        %v2324 = vpop.xlane.xlu0 %2323
        %v2325 = vsel %vm882, %v2321, 0.0
        %2326 = vadd.xlane.f32.xlu0 %v2325
        %v2327 = vpop.xlane.xlu0 %2326
        %v2328 = vrcp.pop %v2324
        %v2329 = vrcp.pop %v2327
        %v2330 = vmul.f32 %v2319, %v2328
        %v2331 = vmul.f32 %v2321, %v2329
        %2334 = vrot.lane.b32.xlu0 %v2021, 120
        %v2335 = vpop.permute.xlu0 %2334
        %2336 = vrot.lane.b32.xlu0 %v2026, 120
        %v2337 = vpop.permute.xlu0 %2336
        %v2341 = vsel %vm882, %v2330, 0
        %v2344 = vsel %vm882, %v2331, 0
        %2346 = vmatprep.subr.mxu0 0.0
        %2347 = vmatpush1.msra.mxu0 0.0
        %2348 = vmatprep.subr.mxu0 0.0
        %2349 = vmatpush1.msra.mxu0 0.0
        %2350 = vmatprep.subr.mxu0 0.0
        %2351 = vmatpush1.msra.mxu0 0.0
        %2352 = vmatprep.subr.mxu0 0.0
        %2353 = vmatpush1.msra.mxu0 0.0
        %2354 = vmatprep.subr.mxu0 0.0
        %2355 = vmatpush1.msra.mxu0 0.0
        %2356 = vmatprep.subr.mxu0 0.0
        %2357 = vmatpush1.msra.mxu0 0.0
        %2358 = vmatprep.subr.mxu0 0.0
        %2359 = vmatpush1.msra.mxu0 0.0
        %2360 = vmatprep.subr.mxu0 0.0
        %2361 = vmatpush1.msra.mxu0 0.0
        %2362 = vmatprep.subr.mxu0 0.0
        %2363 = vmatpush1.msra.mxu0 0.0
        %2364 = vmatprep.subr.mxu0 0.0
        %2365 = vmatpush1.msra.mxu0 0.0
        %2366 = vmatprep.subr.mxu0 0.0
        %2367 = vmatpush1.msra.mxu0 0.0
        %2368 = vmatprep.subr.mxu0 0.0
        %2369 = vmatpush1.msra.mxu0 0.0
        %2370 = vmatprep.subr.mxu0 0.0
        %2371 = vmatpush1.msra.mxu0 0.0
        %2372 = vmatprep.subr.mxu0 0.0
        %2373 = vmatpush1.msra.mxu0 0.0
        %2374 = vmatprep.subr.mxu0 0.0
        %2375 = vmatpush1.msra.mxu0 %v2337
        %2376 = vmatprep.subr.mxu0 0.0
        %2377 = vmatpush1.msra.mxu0 %v2335
        %2378 = vmatprep.subr.mxu0 0.0
        %2379 = vmatpush2.msra.mxu0 0.0
        %2380 = vmatprep.subr.mxu0 0.0
        %2381 = vmatpush2.msra.mxu0 0.0
        %2382 = vmatprep.subr.mxu0 0.0
        %2383 = vmatpush2.msra.mxu0 0.0
        %2384 = vmatprep.subr.mxu0 0.0
        %2385 = vmatpush2.msra.mxu0 0.0
        %2386 = vmatprep.subr.mxu0 0.0
        %2387 = vmatpush2.msra.mxu0 0.0
        %2388 = vmatprep.subr.mxu0 0.0
        %2389 = vmatpush2.msra.mxu0 0.0
        %2390 = vmatprep.subr.mxu0 0.0
        %2391 = vmatpush2.msra.mxu0 0.0
        %2392 = vmatprep.subr.mxu0 0.0
        %2393 = vmatpush2.msra.mxu0 0.0
        %2394 = vmatprep.subr.mxu0 0.0
        %2395 = vmatpush2.msra.mxu0 0.0
        %2396 = vmatprep.subr.mxu0 0.0
        %2397 = vmatpush2.msra.mxu0 0.0
        %2398 = vmatprep.subr.mxu0 0.0
        %2399 = vmatpush2.msra.mxu0 0.0
        %2400 = vmatprep.subr.mxu0 0.0
        %2401 = vmatpush2.msra.mxu0 0.0
        %2402 = vmatprep.subr.mxu0 0.0
        %2403 = vmatpush2.msra.mxu0 0.0
        %2404 = vmatprep.subr.mxu0 0.0
        %2405 = vmatpush2.msra.mxu0 0.0
        %2406 = vmatprep.subr.mxu0 0.0
        %2407 = vmatpush2.msra.mxu0 0.0
        %2408 = vmatprep.subr.mxu0 0.0
        %2409 = vmatpush2.msra.mxu0 0.0
        %2410 = vmatprep.mubr.f32.mxu0 0.0
        %2411 = vmatmul.mubr.f32.gmra.mxu0 %v2341
        %v2412 = vpop.f32.mrf.mxu0
        %v2413 = vadd.f32 0.0, %v2412
        %v2414 = vpop.f32.mrf.mxu0
        %2415 = vmatprep.mubr.f32.mxu0 0.0
        %2416 = vmatmul.mubr.f32.gmra.mxu0 %v2344
        %v2417 = vpop.f32.mrf.mxu0
        %v2418 = vadd.f32 0.0, %v2417
        %v2419 = vpop.f32.mrf.mxu0
        %2420 = vdwg.mxu0
        %2421 = vrot.lane.b32.xlu0 %v1839, 112
        %v2422 = vpop.permute.xlu0 %2421
        %2423 = vrot.lane.b32.xlu0 %v1844, 112
        %v2424 = vpop.permute.xlu0 %2423
        %2425 = vrot.lane.b32.xlu0 %v1930, 112
        %v2426 = vpop.permute.xlu0 %2425
        %2427 = vrot.lane.b32.xlu0 %v1935, 112
        %v2428 = vpop.permute.xlu0 %2427
        %v2429 = vsel %vm794, %v2422, 0
        %v2431 = vsel %vm794, %v2424, 0
        %v2433 = vsel %vm794, %v2426, 0
        %v2435 = vsel %vm794, %v2428, 0
        %2437 = vmatprep.subr.mxu0 0.0
        %2438 = vmatpush1.xpose.msra.mxu0 0.0
        %2439 = vmatprep.subr.mxu0 0.0
        %2440 = vmatpush1.xpose.msra.mxu0 0.0
        %2441 = vmatprep.subr.mxu0 0.0
        %2442 = vmatpush1.xpose.msra.mxu0 0.0
        %2443 = vmatprep.subr.mxu0 0.0
        %2444 = vmatpush1.xpose.msra.mxu0 0.0
        %2445 = vmatprep.subr.mxu0 0.0
        %2446 = vmatpush1.xpose.msra.mxu0 0.0
        %2447 = vmatprep.subr.mxu0 0.0
        %2448 = vmatpush1.xpose.msra.mxu0 0.0
        %2449 = vmatprep.subr.mxu0 0.0
        %2450 = vmatpush1.xpose.msra.mxu0 0.0
        %2451 = vmatprep.subr.mxu0 0.0
        %2452 = vmatpush1.xpose.msra.mxu0 0.0
        %2453 = vmatprep.subr.mxu0 0.0
        %2454 = vmatpush1.xpose.msra.mxu0 0.0
        %2455 = vmatprep.subr.mxu0 0.0
        %2456 = vmatpush1.xpose.msra.mxu0 0.0
        %2457 = vmatprep.subr.mxu0 0.0
        %2458 = vmatpush1.xpose.msra.mxu0 0.0
        %2459 = vmatprep.subr.mxu0 0.0
        %2460 = vmatpush1.xpose.msra.mxu0 0.0
        %2461 = vmatprep.subr.mxu0 0.0
        %2462 = vmatpush1.xpose.msra.mxu0 0.0
        %2463 = vmatprep.subr.mxu0 0.0
        %2464 = vmatpush1.xpose.msra.mxu0 0.0
        %2465 = vmatprep.subr.mxu0 0.0
        %2466 = vmatpush1.xpose.msra.mxu0 %v2435
        %2467 = vmatprep.subr.mxu0 0.0
        %2468 = vmatpush1.xpose.msra.mxu0 %v2433
        %2469 = vmatprep.subr.mxu0 0.0
        %2470 = vmatpush2.xpose.msra.mxu0 0.0
        %2471 = vmatprep.subr.mxu0 0.0
        %2472 = vmatpush2.xpose.msra.mxu0 0.0
        %2473 = vmatprep.subr.mxu0 0.0
        %2474 = vmatpush2.xpose.msra.mxu0 0.0
        %2475 = vmatprep.subr.mxu0 0.0
        %2476 = vmatpush2.xpose.msra.mxu0 0.0
        %2477 = vmatprep.subr.mxu0 0.0
        %2478 = vmatpush2.xpose.msra.mxu0 0.0
        %2479 = vmatprep.subr.mxu0 0.0
        %2480 = vmatpush2.xpose.msra.mxu0 0.0
        %2481 = vmatprep.subr.mxu0 0.0
        %2482 = vmatpush2.xpose.msra.mxu0 0.0
        %2483 = vmatprep.subr.mxu0 0.0
        %2484 = vmatpush2.xpose.msra.mxu0 0.0
        %2485 = vmatprep.subr.mxu0 0.0
        %2486 = vmatpush2.xpose.msra.mxu0 0.0
        %2487 = vmatprep.subr.mxu0 0.0
        %2488 = vmatpush2.xpose.msra.mxu0 0.0
        %2489 = vmatprep.subr.mxu0 0.0
        %2490 = vmatpush2.xpose.msra.mxu0 0.0
        %2491 = vmatprep.subr.mxu0 0.0
        %2492 = vmatpush2.xpose.msra.mxu0 0.0
        %2493 = vmatprep.subr.mxu0 0.0
        %2494 = vmatpush2.xpose.msra.mxu0 0.0
        %2495 = vmatprep.subr.mxu0 0.0
        %2496 = vmatpush2.xpose.msra.mxu0 0.0
        %2497 = vmatprep.subr.mxu0 0.0
        %2498 = vmatpush2.xpose.msra.mxu0 0.0
        %2499 = vmatprep.subr.mxu0 0.0
        %2500 = vmatpush2.xpose.msra.mxu0 0.0
        %2501 = vmatprep.mubr.f32.mxu0 0.0
        %2502 = vmatmul.mubr.f32.gmra.mxu0 %v2429
        %v2503 = vpop.f32.mrf.mxu0
        %v2504 = vadd.f32 0.0, %v2503
        %v2505 = vpop.f32.mrf.mxu0
        %2506 = vmatprep.mubr.f32.mxu0 0.0
        %2507 = vmatmul.mubr.f32.gmra.mxu0 %v2431
        %v2508 = vpop.f32.mrf.mxu0
        %v2509 = vadd.f32 0.0, %v2508
        %v2510 = vpop.f32.mrf.mxu0
        %2511 = vdwg.mxu0
        %v2512 = vsel %vm882, %v2504, -inf
        %2513 = vmax.xlane.f32.xlu0 %v2512
        %v2514 = vpop.xlane.xlu0 %2513
        %v2515 = vsel %vm882, %v2509, -inf
        %2516 = vmax.xlane.f32.xlu0 %v2515
        %v2517 = vpop.xlane.xlu0 %2516
        %v2518 = vsub.f32 %v2504, %v2514
        %v2519 = vsub.f32 %v2509, %v2517
        %v2520 = vmul.f32 %v2518, 1.442695
        %v2521 = vpow.pop %v2520
        %v2522 = vmul.f32 %v2519, 1.442695
        %v2523 = vpow.pop %v2522
        %v2524 = vsel %vm882, %v2521, 0.0
        %2525 = vadd.xlane.f32.xlu0 %v2524
        %v2526 = vpop.xlane.xlu0 %2525
        %v2527 = vsel %vm882, %v2523, 0.0
        %2528 = vadd.xlane.f32.xlu0 %v2527
        %v2529 = vpop.xlane.xlu0 %2528
        %v2530 = vrcp.pop %v2526
        %v2531 = vrcp.pop %v2529
        %v2532 = vmul.f32 %v2521, %v2530
        %v2533 = vmul.f32 %v2523, %v2531
        %2534 = vrot.lane.b32.xlu0 %v2021, 112
        %v2535 = vpop.permute.xlu0 %2534
        %2536 = vrot.lane.b32.xlu0 %v2026, 112
        %v2537 = vpop.permute.xlu0 %2536
        %v2541 = vsel %vm882, %v2532, 0
        %v2544 = vsel %vm882, %v2533, 0
        %2546 = vmatprep.subr.mxu0 0.0
        %2547 = vmatpush1.msra.mxu0 0.0
        %2548 = vmatprep.subr.mxu0 0.0
        %2549 = vmatpush1.msra.mxu0 0.0
        %2550 = vmatprep.subr.mxu0 0.0
        %2551 = vmatpush1.msra.mxu0 0.0
        %2552 = vmatprep.subr.mxu0 0.0
        %2553 = vmatpush1.msra.mxu0 0.0
        %2554 = vmatprep.subr.mxu0 0.0
        %2555 = vmatpush1.msra.mxu0 0.0
        %2556 = vmatprep.subr.mxu0 0.0
        %2557 = vmatpush1.msra.mxu0 0.0
        %2558 = vmatprep.subr.mxu0 0.0
        %2559 = vmatpush1.msra.mxu0 0.0
        %2560 = vmatprep.subr.mxu0 0.0
        %2561 = vmatpush1.msra.mxu0 0.0
        %2562 = vmatprep.subr.mxu0 0.0
        %2563 = vmatpush1.msra.mxu0 0.0
        %2564 = vmatprep.subr.mxu0 0.0
        %2565 = vmatpush1.msra.mxu0 0.0
        %2566 = vmatprep.subr.mxu0 0.0
        %2567 = vmatpush1.msra.mxu0 0.0
        %2568 = vmatprep.subr.mxu0 0.0
        %2569 = vmatpush1.msra.mxu0 0.0
        %2570 = vmatprep.subr.mxu0 0.0
        %2571 = vmatpush1.msra.mxu0 0.0
        %2572 = vmatprep.subr.mxu0 0.0
        %2573 = vmatpush1.msra.mxu0 0.0
        %2574 = vmatprep.subr.mxu0 0.0
        %2575 = vmatpush1.msra.mxu0 %v2537
        %2576 = vmatprep.subr.mxu0 0.0
        %2577 = vmatpush1.msra.mxu0 %v2535
        %2578 = vmatprep.subr.mxu0 0.0
        %2579 = vmatpush2.msra.mxu0 0.0
        %2580 = vmatprep.subr.mxu0 0.0
        %2581 = vmatpush2.msra.mxu0 0.0
        %2582 = vmatprep.subr.mxu0 0.0
        %2583 = vmatpush2.msra.mxu0 0.0
        %2584 = vmatprep.subr.mxu0 0.0
        %2585 = vmatpush2.msra.mxu0 0.0
        %2586 = vmatprep.subr.mxu0 0.0
        %2587 = vmatpush2.msra.mxu0 0.0
        %2588 = vmatprep.subr.mxu0 0.0
        %2589 = vmatpush2.msra.mxu0 0.0
        %2590 = vmatprep.subr.mxu0 0.0
        %2591 = vmatpush2.msra.mxu0 0.0
        %2592 = vmatprep.subr.mxu0 0.0
        %2593 = vmatpush2.msra.mxu0 0.0
        %2594 = vmatprep.subr.mxu0 0.0
        %2595 = vmatpush2.msra.mxu0 0.0
        %2596 = vmatprep.subr.mxu0 0.0
        %2597 = vmatpush2.msra.mxu0 0.0
        %2598 = vmatprep.subr.mxu0 0.0
        %2599 = vmatpush2.msra.mxu0 0.0
        %2600 = vmatprep.subr.mxu0 0.0
        %2601 = vmatpush2.msra.mxu0 0.0
        %2602 = vmatprep.subr.mxu0 0.0
        %2603 = vmatpush2.msra.mxu0 0.0
        %2604 = vmatprep.subr.mxu0 0.0
        %2605 = vmatpush2.msra.mxu0 0.0
        %2606 = vmatprep.subr.mxu0 0.0
        %2607 = vmatpush2.msra.mxu0 0.0
        %2608 = vmatprep.subr.mxu0 0.0
        %2609 = vmatpush2.msra.mxu0 0.0
        %2610 = vmatprep.mubr.f32.mxu0 0.0
        %2611 = vmatmul.mubr.f32.gmra.mxu0 %v2541
        %v2612 = vpop.f32.mrf.mxu0
        %v2613 = vadd.f32 0.0, %v2612
        %v2614 = vpop.f32.mrf.mxu0
        %2615 = vmatprep.mubr.f32.mxu0 0.0
        %2616 = vmatmul.mubr.f32.gmra.mxu0 %v2544
        %v2617 = vpop.f32.mrf.mxu0
        %v2618 = vadd.f32 0.0, %v2617
        %v2619 = vpop.f32.mrf.mxu0
        %2620 = vdwg.mxu0
        %2621 = vrot.lane.b32.xlu0 %v1839, 104
        %v2622 = vpop.permute.xlu0 %2621
        %2623 = vrot.lane.b32.xlu0 %v1844, 104
        %v2624 = vpop.permute.xlu0 %2623
        %2625 = vrot.lane.b32.xlu0 %v1930, 104
        %v2626 = vpop.permute.xlu0 %2625
        %2627 = vrot.lane.b32.xlu0 %v1935, 104
        %v2628 = vpop.permute.xlu0 %2627
        %v2629 = vsel %vm794, %v2622, 0
        %v2631 = vsel %vm794, %v2624, 0
        %v2633 = vsel %vm794, %v2626, 0
        %v2635 = vsel %vm794, %v2628, 0
        %2637 = vmatprep.subr.mxu0 0.0
        %2638 = vmatpush1.xpose.msra.mxu0 0.0
        %2639 = vmatprep.subr.mxu0 0.0
        %2640 = vmatpush1.xpose.msra.mxu0 0.0
        %2641 = vmatprep.subr.mxu0 0.0
        %2642 = vmatpush1.xpose.msra.mxu0 0.0
        %2643 = vmatprep.subr.mxu0 0.0
        %2644 = vmatpush1.xpose.msra.mxu0 0.0
        %2645 = vmatprep.subr.mxu0 0.0
        %2646 = vmatpush1.xpose.msra.mxu0 0.0
        %2647 = vmatprep.subr.mxu0 0.0
        %2648 = vmatpush1.xpose.msra.mxu0 0.0
        %2649 = vmatprep.subr.mxu0 0.0
        %2650 = vmatpush1.xpose.msra.mxu0 0.0
        %2651 = vmatprep.subr.mxu0 0.0
        %2652 = vmatpush1.xpose.msra.mxu0 0.0
        %2653 = vmatprep.subr.mxu0 0.0
        %2654 = vmatpush1.xpose.msra.mxu0 0.0
        %2655 = vmatprep.subr.mxu0 0.0
        %2656 = vmatpush1.xpose.msra.mxu0 0.0
        %2657 = vmatprep.subr.mxu0 0.0
        %2658 = vmatpush1.xpose.msra.mxu0 0.0
        %2659 = vmatprep.subr.mxu0 0.0
        %2660 = vmatpush1.xpose.msra.mxu0 0.0
        %2661 = vmatprep.subr.mxu0 0.0
        %2662 = vmatpush1.xpose.msra.mxu0 0.0
        %2663 = vmatprep.subr.mxu0 0.0
        %2664 = vmatpush1.xpose.msra.mxu0 0.0
        %2665 = vmatprep.subr.mxu0 0.0
        %2666 = vmatpush1.xpose.msra.mxu0 %v2635
        %2667 = vmatprep.subr.mxu0 0.0
        %2668 = vmatpush1.xpose.msra.mxu0 %v2633
        %2669 = vmatprep.subr.mxu0 0.0
        %2670 = vmatpush2.xpose.msra.mxu0 0.0
        %2671 = vmatprep.subr.mxu0 0.0
        %2672 = vmatpush2.xpose.msra.mxu0 0.0
        %2673 = vmatprep.subr.mxu0 0.0
        %2674 = vmatpush2.xpose.msra.mxu0 0.0
        %2675 = vmatprep.subr.mxu0 0.0
        %2676 = vmatpush2.xpose.msra.mxu0 0.0
        %2677 = vmatprep.subr.mxu0 0.0
        %2678 = vmatpush2.xpose.msra.mxu0 0.0
        %2679 = vmatprep.subr.mxu0 0.0
        %2680 = vmatpush2.xpose.msra.mxu0 0.0
        %2681 = vmatprep.subr.mxu0 0.0
        %2682 = vmatpush2.xpose.msra.mxu0 0.0
        %2683 = vmatprep.subr.mxu0 0.0
        %2684 = vmatpush2.xpose.msra.mxu0 0.0
        %2685 = vmatprep.subr.mxu0 0.0
        %2686 = vmatpush2.xpose.msra.mxu0 0.0
        %2687 = vmatprep.subr.mxu0 0.0
        %2688 = vmatpush2.xpose.msra.mxu0 0.0
        %2689 = vmatprep.subr.mxu0 0.0
        %2690 = vmatpush2.xpose.msra.mxu0 0.0
        %2691 = vmatprep.subr.mxu0 0.0
        %2692 = vmatpush2.xpose.msra.mxu0 0.0
        %2693 = vmatprep.subr.mxu0 0.0
        %2694 = vmatpush2.xpose.msra.mxu0 0.0
        %2695 = vmatprep.subr.mxu0 0.0
        %2696 = vmatpush2.xpose.msra.mxu0 0.0
        %2697 = vmatprep.subr.mxu0 0.0
        %2698 = vmatpush2.xpose.msra.mxu0 0.0
        %2699 = vmatprep.subr.mxu0 0.0
        %2700 = vmatpush2.xpose.msra.mxu0 0.0
        %2701 = vmatprep.mubr.f32.mxu0 0.0
        %2702 = vmatmul.mubr.f32.gmra.mxu0 %v2629
        %v2703 = vpop.f32.mrf.mxu0
        %v2704 = vadd.f32 0.0, %v2703
        %v2705 = vpop.f32.mrf.mxu0
        %2706 = vmatprep.mubr.f32.mxu0 0.0
        %2707 = vmatmul.mubr.f32.gmra.mxu0 %v2631
        %v2708 = vpop.f32.mrf.mxu0
        %v2709 = vadd.f32 0.0, %v2708
        %v2710 = vpop.f32.mrf.mxu0
        %2711 = vdwg.mxu0
        %v2712 = vsel %vm882, %v2704, -inf
        %2713 = vmax.xlane.f32.xlu0 %v2712
        %v2714 = vpop.xlane.xlu0 %2713
        %v2715 = vsel %vm882, %v2709, -inf
        %2716 = vmax.xlane.f32.xlu0 %v2715
        %v2717 = vpop.xlane.xlu0 %2716
        %v2718 = vsub.f32 %v2704, %v2714
        %v2719 = vsub.f32 %v2709, %v2717
        %v2720 = vmul.f32 %v2718, 1.442695
        %v2721 = vpow.pop %v2720
        %v2722 = vmul.f32 %v2719, 1.442695
        %v2723 = vpow.pop %v2722
        %v2724 = vsel %vm882, %v2721, 0.0
        %2725 = vadd.xlane.f32.xlu0 %v2724
        %v2726 = vpop.xlane.xlu0 %2725
        %v2727 = vsel %vm882, %v2723, 0.0
        %2728 = vadd.xlane.f32.xlu0 %v2727
        %v2729 = vpop.xlane.xlu0 %2728
        %v2730 = vrcp.pop %v2726
        %v2731 = vrcp.pop %v2729
        %v2732 = vmul.f32 %v2721, %v2730
        %v2733 = vmul.f32 %v2723, %v2731
        %2734 = vrot.lane.b32.xlu0 %v2021, 104
        %v2735 = vpop.permute.xlu0 %2734
        %2736 = vrot.lane.b32.xlu0 %v2026, 104
        %v2737 = vpop.permute.xlu0 %2736
        %v2741 = vsel %vm882, %v2732, 0
        %v2744 = vsel %vm882, %v2733, 0
        %2746 = vmatprep.subr.mxu0 0.0
        %2747 = vmatpush1.msra.mxu0 0.0
        %2748 = vmatprep.subr.mxu0 0.0
        %2749 = vmatpush1.msra.mxu0 0.0
        %2750 = vmatprep.subr.mxu0 0.0
        %2751 = vmatpush1.msra.mxu0 0.0
        %2752 = vmatprep.subr.mxu0 0.0
        %2753 = vmatpush1.msra.mxu0 0.0
        %2754 = vmatprep.subr.mxu0 0.0
        %2755 = vmatpush1.msra.mxu0 0.0
        %2756 = vmatprep.subr.mxu0 0.0
        %2757 = vmatpush1.msra.mxu0 0.0
        %2758 = vmatprep.subr.mxu0 0.0
        %2759 = vmatpush1.msra.mxu0 0.0
        %2760 = vmatprep.subr.mxu0 0.0
        %2761 = vmatpush1.msra.mxu0 0.0
        %2762 = vmatprep.subr.mxu0 0.0
        %2763 = vmatpush1.msra.mxu0 0.0
        %2764 = vmatprep.subr.mxu0 0.0
        %2765 = vmatpush1.msra.mxu0 0.0
        %2766 = vmatprep.subr.mxu0 0.0
        %2767 = vmatpush1.msra.mxu0 0.0
        %2768 = vmatprep.subr.mxu0 0.0
        %2769 = vmatpush1.msra.mxu0 0.0
        %2770 = vmatprep.subr.mxu0 0.0
        %2771 = vmatpush1.msra.mxu0 0.0
        %2772 = vmatprep.subr.mxu0 0.0
        %2773 = vmatpush1.msra.mxu0 0.0
        %2774 = vmatprep.subr.mxu0 0.0
        %2775 = vmatpush1.msra.mxu0 %v2737
        %2776 = vmatprep.subr.mxu0 0.0
        %2777 = vmatpush1.msra.mxu0 %v2735
        %2778 = vmatprep.subr.mxu0 0.0
        %2779 = vmatpush2.msra.mxu0 0.0
        %2780 = vmatprep.subr.mxu0 0.0
        %2781 = vmatpush2.msra.mxu0 0.0
        %2782 = vmatprep.subr.mxu0 0.0
        %2783 = vmatpush2.msra.mxu0 0.0
        %2784 = vmatprep.subr.mxu0 0.0
        %2785 = vmatpush2.msra.mxu0 0.0
        %2786 = vmatprep.subr.mxu0 0.0
        %2787 = vmatpush2.msra.mxu0 0.0
        %2788 = vmatprep.subr.mxu0 0.0
        %2789 = vmatpush2.msra.mxu0 0.0
        %2790 = vmatprep.subr.mxu0 0.0
        %2791 = vmatpush2.msra.mxu0 0.0
        %2792 = vmatprep.subr.mxu0 0.0
        %2793 = vmatpush2.msra.mxu0 0.0
        %2794 = vmatprep.subr.mxu0 0.0
        %2795 = vmatpush2.msra.mxu0 0.0
        %2796 = vmatprep.subr.mxu0 0.0
        %2797 = vmatpush2.msra.mxu0 0.0
        %2798 = vmatprep.subr.mxu0 0.0
        %2799 = vmatpush2.msra.mxu0 0.0
        %2800 = vmatprep.subr.mxu0 0.0
        %2801 = vmatpush2.msra.mxu0 0.0
        %2802 = vmatprep.subr.mxu0 0.0
        %2803 = vmatpush2.msra.mxu0 0.0
        %2804 = vmatprep.subr.mxu0 0.0
        %2805 = vmatpush2.msra.mxu0 0.0
        %2806 = vmatprep.subr.mxu0 0.0
        %2807 = vmatpush2.msra.mxu0 0.0
        %2808 = vmatprep.subr.mxu0 0.0
        %2809 = vmatpush2.msra.mxu0 0.0
        %2810 = vmatprep.mubr.f32.mxu0 0.0
        %2811 = vmatmul.mubr.f32.gmra.mxu0 %v2741
        %v2812 = vpop.f32.mrf.mxu0
        %v2813 = vadd.f32 0.0, %v2812
        %v2814 = vpop.f32.mrf.mxu0
        %2815 = vmatprep.mubr.f32.mxu0 0.0
        %2816 = vmatmul.mubr.f32.gmra.mxu0 %v2744
        %v2817 = vpop.f32.mrf.mxu0
        %v2818 = vadd.f32 0.0, %v2817
        %v2819 = vpop.f32.mrf.mxu0
        %2820 = vdwg.mxu0
        %2823 = vrot.lane.b32.xlu0 %v2413, 8
        %v2824 = vpop.permute.xlu0 %2823
        %2825 = vrot.lane.b32.xlu0 %v2418, 8
        %v2826 = vpop.permute.xlu0 %2825
        %2831 = vrot.lane.b32.xlu0 %v2613, 16
        %v2832 = vpop.permute.xlu0 %2831
        %2833 = vrot.lane.b32.xlu0 %v2618, 16
        %v2834 = vpop.permute.xlu0 %2833
        %2839 = vrot.lane.b32.xlu0 %v2813, 24
        %v2840 = vpop.permute.xlu0 %2839
        %2841 = vrot.lane.b32.xlu0 %v2818, 24
        %v2842 = vpop.permute.xlu0 %2841
        %v2845 = vsel %vm794, %v2211, %v2824
        %v2846 = vsel %vm794, %v2216, %v2826
        %v2847 = vsel %vm882, %v2845, %v2832
        %v2848 = vsel %vm882, %v2846, %v2834
        %v2849 = vsel %vm1616, %v2847, %v2840
        %v2850 = vsel %vm1616, %v2848, %v2842
        %s2851 = scalar_lea.vmem %s6, 96
        %v2852 = vld [vmem:[%s2851] sm:$0xff]
        %v2853 = vld [vmem:[%s2851 + $0x8] sm:$0xff]
        %v2854 = vld [vmem:[%s2851 + $0x10] sm:$0xff]
        %v2855 = vld [vmem:[%s2851 + $0x18] sm:$0xff]
        %v2856 = vld [vmem:[#allocation4 + $0x3] sm:$0x1]
        %v2857 = vlaneseq
        %v2858 = vshrl.u32 %v2857, 7
        %v2859 = vsub.s32 0, %v2858
        %v2860 = vrot.slane %v2856, %v2859
        %v2862 = vsel %vm530, %v2849, 0
        %v2865 = vsel %vm530, %v2850, 0
        %2867 = vmatprep.subr.mxu0 0.0
        %2868 = vmatpush1.msra.mxu0 0.0
        %2869 = vmatprep.subr.mxu0 0.0
        %2870 = vmatpush1.msra.mxu0 0.0
        %2871 = vmatprep.subr.mxu0 0.0
        %2872 = vmatpush1.msra.mxu0 0.0
        %2873 = vmatprep.subr.mxu0 0.0
        %2874 = vmatpush1.msra.mxu0 0.0
        %2875 = vmatprep.subr.mxu0 0.0
        %2876 = vmatpush1.msra.mxu0 0.0
        %2877 = vmatprep.subr.mxu0 0.0
        %2878 = vmatpush1.msra.mxu0 0.0
        %2879 = vmatprep.subr.mxu0 0.0
        %2880 = vmatpush1.msra.mxu0 0.0
        %2881 = vmatprep.subr.mxu0 0.0
        %2882 = vmatpush1.msra.mxu0 0.0
        %2883 = vmatprep.subr.mxu0 0.0
        %2884 = vmatpush1.msra.mxu0 0.0
        %2885 = vmatprep.subr.mxu0 0.0
        %2886 = vmatpush1.msra.mxu0 0.0
        %2887 = vmatprep.subr.mxu0 0.0
        %2888 = vmatpush1.msra.mxu0 0.0
        %2889 = vmatprep.subr.mxu0 0.0
        %2890 = vmatpush1.msra.mxu0 0.0
        %2891 = vmatprep.subr.mxu0 0.0
        %2892 = vmatpush1.msra.mxu0 %v2855
        %2893 = vmatprep.subr.mxu0 0.0
        %2894 = vmatpush1.msra.mxu0 %v2854
        %2895 = vmatprep.subr.mxu0 0.0
        %2896 = vmatpush1.msra.mxu0 %v2853
        %2897 = vmatprep.subr.mxu0 0.0
        %2898 = vmatpush1.msra.mxu0 %v2852
        %2899 = vmatprep.subr.mxu0 0.0
        %2900 = vmatpush2.msra.mxu0 0.0
        %2901 = vmatprep.subr.mxu0 0.0
        %2902 = vmatpush2.msra.mxu0 0.0
        %2903 = vmatprep.subr.mxu0 0.0
        %2904 = vmatpush2.msra.mxu0 0.0
        %2905 = vmatprep.subr.mxu0 0.0
        %2906 = vmatpush2.msra.mxu0 0.0
        %2907 = vmatprep.subr.mxu0 0.0
        %2908 = vmatpush2.msra.mxu0 0.0
        %2909 = vmatprep.subr.mxu0 0.0
        %2910 = vmatpush2.msra.mxu0 0.0
        %2911 = vmatprep.subr.mxu0 0.0
        %2912 = vmatpush2.msra.mxu0 0.0
        %2913 = vmatprep.subr.mxu0 0.0
        %2914 = vmatpush2.msra.mxu0 0.0
        %2915 = vmatprep.subr.mxu0 0.0
        %2916 = vmatpush2.msra.mxu0 0.0
        %2917 = vmatprep.subr.mxu0 0.0
        %2918 = vmatpush2.msra.mxu0 0.0
        %2919 = vmatprep.subr.mxu0 0.0
        %2920 = vmatpush2.msra.mxu0 0.0
        %2921 = vmatprep.subr.mxu0 0.0
        %2922 = vmatpush2.msra.mxu0 0.0
        %2923 = vmatprep.subr.mxu0 0.0
        %2924 = vmatpush2.msra.mxu0 0.0
        %2925 = vmatprep.subr.mxu0 0.0
        %2926 = vmatpush2.msra.mxu0 0.0
        %2927 = vmatprep.subr.mxu0 0.0
        %2928 = vmatpush2.msra.mxu0 0.0
        %2929 = vmatprep.subr.mxu0 0.0
        %2930 = vmatpush2.msra.mxu0 0.0
        %2931 = vmatprep.mubr.f32.mxu0 0.0
        %2932 = vmatmul.mubr.f32.gmra.mxu0 %v2862
        %v2933 = vpop.f32.mrf.mxu0
        %v2934 = vadd.f32 %v2860, %v2933
        %v2935 = vpop.f32.mrf.mxu0
        %2936 = vmatprep.mubr.f32.mxu0 0.0
        %2937 = vmatmul.mubr.f32.gmra.mxu0 %v2865
        %v2938 = vpop.f32.mrf.mxu0
        %v2939 = vadd.f32 %v2860, %v2938
        %v2940 = vpop.f32.mrf.mxu0
        %2941 = vdwg.mxu0
        %v2942 = vadd.f32 %v1751, %v2934
        %v2943 = vadd.f32 %v1752, %v2939
        %v2944 = vld [vmem:[%s12 + $0x2] sm:$0x1]
        %v2945 = vld [vmem:[%s12 + $0x3] sm:$0x1]
        %v2946 = vsel %vm530, %v2942, 0.0
        %2947 = vadd.xlane.f32.xlu0 %v2946
        %v2948 = vpop.xlane.xlu0 %2947
        %v2949 = vsel %vm530, %v2943, 0.0
        %2950 = vadd.xlane.f32.xlu0 %v2949
        %v2951 = vpop.xlane.xlu0 %2950
        %v2952 = vmul.f32 %v2948, %v1720
        %v2953 = vmul.f32 %v2951, %v1720
        %v2954 = vsub.f32 %v2942, %v2952
        %v2955 = vsub.f32 %v2943, %v2953
        %v2956 = vmul.f32 %v2954, %v2954
        %v2957 = vmul.f32 %v2955, %v2955
        %v2958 = vsel %vm530, %v2956, 0.0
        %2959 = vadd.xlane.f32.xlu0 %v2958
        %v2960 = vpop.xlane.xlu0 %2959
        %v2961 = vsel %vm530, %v2957, 0.0
        %2962 = vadd.xlane.f32.xlu0 %v2961
        %v2963 = vpop.xlane.xlu0 %2962
        %v2964 = vmul.f32 %v2960, %v1720
        %v2965 = vmul.f32 %v2963, %v1720
        %v2966 = vadd.f32 %v2964, 1e-05
        %v2967 = vadd.f32 %v2965, 1e-05
        %v2968 = vrsqrt.pop %v2966
        %v2969 = vrsqrt.pop %v2967
        %v2970 = vmul.f32 %v2954, %v2968
        %v2971 = vmul.f32 %v2955, %v2969
        %v2972 = vlaneseq
        %v2973 = vshrl.u32 %v2972, 7
        %v2974 = vsub.s32 0, %v2973
        %v2975 = vrot.slane %v2944, %v2974
        %v2976 = vmul.f32 %v2970, %v2975
        %v2977 = vmul.f32 %v2971, %v2975
        %v2978 = vlaneseq
        %v2979 = vshrl.u32 %v2978, 7
        %v2980 = vsub.s32 0, %v2979
        %v2981 = vrot.slane %v2945, %v2980
        %v2982 = vadd.f32 %v2976, %v2981
        %v2983 = vadd.f32 %v2977, %v2981
        %v2984 = vld [vmem:[%s8] sm:$0xff]
        %v2985 = vld [vmem:[%s8 + $0x8] sm:$0xff]
        %v2986 = vld [vmem:[%s8 + $0x10] sm:$0xff]
        %v2987 = vld [vmem:[%s8 + $0x18] sm:$0xff]
        %v2988 = vld [vmem:[%s9] sm:$0x1]
        %v2990 = vlaneseq
        %v2991 = vshrl.u32 %v2990, 7
        %v2992 = vsub.s32 0, %v2991
        %v2993 = vrot.slane %v2988, %v2992
        %v2996 = vsel %vm530, %v2982, 0
        %v2999 = vsel %vm530, %v2983, 0
        %3001 = vmatprep.subr.mxu0 0.0
        %3002 = vmatpush1.msra.mxu0 0.0
        %3003 = vmatprep.subr.mxu0 0.0
        %3004 = vmatpush1.msra.mxu0 0.0
        %3005 = vmatprep.subr.mxu0 0.0
        %3006 = vmatpush1.msra.mxu0 0.0
        %3007 = vmatprep.subr.mxu0 0.0
        %3008 = vmatpush1.msra.mxu0 0.0
        %3009 = vmatprep.subr.mxu0 0.0
        %3010 = vmatpush1.msra.mxu0 0.0
        %3011 = vmatprep.subr.mxu0 0.0
        %3012 = vmatpush1.msra.mxu0 0.0
        %3013 = vmatprep.subr.mxu0 0.0
        %3014 = vmatpush1.msra.mxu0 0.0
        %3015 = vmatprep.subr.mxu0 0.0
        %3016 = vmatpush1.msra.mxu0 0.0
        %3017 = vmatprep.subr.mxu0 0.0
        %3018 = vmatpush1.msra.mxu0 0.0
        %3019 = vmatprep.subr.mxu0 0.0
        %3020 = vmatpush1.msra.mxu0 0.0
        %3021 = vmatprep.subr.mxu0 0.0
        %3022 = vmatpush1.msra.mxu0 0.0
        %3023 = vmatprep.subr.mxu0 0.0
        %3024 = vmatpush1.msra.mxu0 0.0
        %3025 = vmatprep.subr.mxu0 0.0
        %3026 = vmatpush1.msra.mxu0 %v2987
        %3027 = vmatprep.subr.mxu0 0.0
        %3028 = vmatpush1.msra.mxu0 %v2986
        %3029 = vmatprep.subr.mxu0 0.0
        %3030 = vmatpush1.msra.mxu0 %v2985
        %3031 = vmatprep.subr.mxu0 0.0
        %3032 = vmatpush1.msra.mxu0 %v2984
        %3033 = vmatprep.subr.mxu0 0.0
        %3034 = vmatpush2.msra.mxu0 0.0
        %3035 = vmatprep.subr.mxu0 0.0
        %3036 = vmatpush2.msra.mxu0 0.0
        %3037 = vmatprep.subr.mxu0 0.0
        %3038 = vmatpush2.msra.mxu0 0.0
        %3039 = vmatprep.subr.mxu0 0.0
        %3040 = vmatpush2.msra.mxu0 0.0
        %3041 = vmatprep.subr.mxu0 0.0
        %3042 = vmatpush2.msra.mxu0 0.0
        %3043 = vmatprep.subr.mxu0 0.0
        %3044 = vmatpush2.msra.mxu0 0.0
        %3045 = vmatprep.subr.mxu0 0.0
        %3046 = vmatpush2.msra.mxu0 0.0
        %3047 = vmatprep.subr.mxu0 0.0
        %3048 = vmatpush2.msra.mxu0 0.0
        %3049 = vmatprep.subr.mxu0 0.0
        %3050 = vmatpush2.msra.mxu0 0.0
        %3051 = vmatprep.subr.mxu0 0.0
        %3052 = vmatpush2.msra.mxu0 0.0
        %3053 = vmatprep.subr.mxu0 0.0
        %3054 = vmatpush2.msra.mxu0 0.0
        %3055 = vmatprep.subr.mxu0 0.0
        %3056 = vmatpush2.msra.mxu0 0.0
        %3057 = vmatprep.subr.mxu0 0.0
        %3058 = vmatpush2.msra.mxu0 0.0
        %3059 = vmatprep.subr.mxu0 0.0
        %3060 = vmatpush2.msra.mxu0 0.0
        %3061 = vmatprep.subr.mxu0 0.0
        %3062 = vmatpush2.msra.mxu0 0.0
        %3063 = vmatprep.subr.mxu0 0.0
        %3064 = vmatpush2.msra.mxu0 0.0
        %3065 = vmatprep.mubr.f32.mxu0 0.0
        %3066 = vmatmul.mubr.f32.gmra.mxu0 %v2996
        %v3067 = vpop.f32.mrf.mxu0
        %v3068 = vadd.f32 %v2993, %v3067
        %v3069 = vpop.f32.mrf.mxu0
        %3070 = vmatprep.mubr.f32.mxu0 0.0
        %3071 = vmatmul.mubr.f32.gmra.mxu0 %v2999
        %v3072 = vpop.f32.mrf.mxu0
        %v3073 = vadd.f32 %v2993, %v3072
        %v3074 = vpop.f32.mrf.mxu0
        %3075 = vdwg.mxu0
        %v3076 = vmax.f32 %v3068, 0.0
        %v3077 = vmax.f32 %v3073, 0.0
        %v3078 = vld [vmem:[%s10] sm:$0xff]
        %v3079 = vld [vmem:[%s10 + $0x8] sm:$0xff]
        %v3080 = vld [vmem:[%s10 + $0x10] sm:$0xff]
        %v3081 = vld [vmem:[%s10 + $0x18] sm:$0xff]
        %v3082 = vld [vmem:[%s10 + $0x20] sm:$0xff]
        %v3083 = vld [vmem:[%s10 + $0x28] sm:$0xff]
        %v3084 = vld [vmem:[%s10 + $0x30] sm:$0xff]
        %v3085 = vld [vmem:[%s10 + $0x38] sm:$0xff]
        %v3086 = vld [vmem:[%s11] sm:$0x1]
        %v3088 = vlaneseq
        %v3089 = vshrl.u32 %v3088, 7
        %v3090 = vsub.s32 0, %v3089
        %v3091 = vrot.slane %v3086, %v3090
        %vm3093 = vcmask 523264
        %v3095 = vsel %vm3093, %v3076, 0
        %v3098 = vsel %vm3093, %v3077, 0
        %3100 = vmatprep.subr.mxu0 0.0
        %3101 = vmatpush1.msra.mxu0 0.0
        %3102 = vmatprep.subr.mxu0 0.0
        %3103 = vmatpush1.msra.mxu0 0.0
        %3104 = vmatprep.subr.mxu0 0.0
        %3105 = vmatpush1.msra.mxu0 0.0
        %3106 = vmatprep.subr.mxu0 0.0
        %3107 = vmatpush1.msra.mxu0 0.0
        %3108 = vmatprep.subr.mxu0 0.0
        %3109 = vmatpush1.msra.mxu0 0.0
        %3110 = vmatprep.subr.mxu0 0.0
        %3111 = vmatpush1.msra.mxu0 0.0
        %3112 = vmatprep.subr.mxu0 0.0
        %3113 = vmatpush1.msra.mxu0 0.0
        %3114 = vmatprep.subr.mxu0 0.0
        %3115 = vmatpush1.msra.mxu0 0.0
        %3116 = vmatprep.subr.mxu0 0.0
        %3117 = vmatpush1.msra.mxu0 %v3085
        %3118 = vmatprep.subr.mxu0 0.0
        %3119 = vmatpush1.msra.mxu0 %v3084
        %3120 = vmatprep.subr.mxu0 0.0
        %3121 = vmatpush1.msra.mxu0 %v3083
        %3122 = vmatprep.subr.mxu0 0.0
        %3123 = vmatpush1.msra.mxu0 %v3082
        %3124 = vmatprep.subr.mxu0 0.0
        %3125 = vmatpush1.msra.mxu0 %v3081
        %3126 = vmatprep.subr.mxu0 0.0
        %3127 = vmatpush1.msra.mxu0 %v3080
        %3128 = vmatprep.subr.mxu0 0.0
        %3129 = vmatpush1.msra.mxu0 %v3079
        %3130 = vmatprep.subr.mxu0 0.0
        %3131 = vmatpush1.msra.mxu0 %v3078
        %3132 = vmatprep.subr.mxu0 0.0
        %3133 = vmatpush2.msra.mxu0 0.0
        %3134 = vmatprep.subr.mxu0 0.0
        %3135 = vmatpush2.msra.mxu0 0.0
        %3136 = vmatprep.subr.mxu0 0.0
        %3137 = vmatpush2.msra.mxu0 0.0
        %3138 = vmatprep.subr.mxu0 0.0
        %3139 = vmatpush2.msra.mxu0 0.0
        %3140 = vmatprep.subr.mxu0 0.0
        %3141 = vmatpush2.msra.mxu0 0.0
        %3142 = vmatprep.subr.mxu0 0.0
        %3143 = vmatpush2.msra.mxu0 0.0
        %3144 = vmatprep.subr.mxu0 0.0
        %3145 = vmatpush2.msra.mxu0 0.0
        %3146 = vmatprep.subr.mxu0 0.0
        %3147 = vmatpush2.msra.mxu0 0.0
        %3148 = vmatprep.subr.mxu0 0.0
        %3149 = vmatpush2.msra.mxu0 0.0
        %3150 = vmatprep.subr.mxu0 0.0
        %3151 = vmatpush2.msra.mxu0 0.0
        %3152 = vmatprep.subr.mxu0 0.0
        %3153 = vmatpush2.msra.mxu0 0.0
        %3154 = vmatprep.subr.mxu0 0.0
        %3155 = vmatpush2.msra.mxu0 0.0
        %3156 = vmatprep.subr.mxu0 0.0
        %3157 = vmatpush2.msra.mxu0 0.0
        %3158 = vmatprep.subr.mxu0 0.0
        %3159 = vmatpush2.msra.mxu0 0.0
        %3160 = vmatprep.subr.mxu0 0.0
        %3161 = vmatpush2.msra.mxu0 0.0
        %3162 = vmatprep.subr.mxu0 0.0
        %3163 = vmatpush2.msra.mxu0 0.0
        %3164 = vmatprep.mubr.f32.mxu0 0.0
        %3165 = vmatmul.mubr.f32.gmra.mxu0 %v3095
        %v3166 = vpop.f32.mrf.mxu0
        %v3167 = vadd.f32 %v3091, %v3166
        %v3168 = vpop.f32.mrf.mxu0
        %3169 = vmatprep.mubr.f32.mxu0 0.0
        %3170 = vmatmul.mubr.f32.gmra.mxu0 %v3098
        %v3171 = vpop.f32.mrf.mxu0
        %v3172 = vadd.f32 %v3091, %v3171
        %v3173 = vpop.f32.mrf.mxu0
        %3174 = vdwg.mxu0
        %v3175 = vadd.f32 %v2982, %v3167
        %v3176 = vadd.f32 %v2983, %v3172
        %v3177 = vld [vmem:[%s12 + $0x4] sm:$0x1]
        %v3178 = vld [vmem:[%s12 + $0x5] sm:$0x1]
        %v3179 = vsel %vm530, %v3175, 0.0
        %3180 = vadd.xlane.f32.xlu0 %v3179
        %v3181 = vpop.xlane.xlu0 %3180
        %v3182 = vsel %vm530, %v3176, 0.0
        %3183 = vadd.xlane.f32.xlu0 %v3182
        %v3184 = vpop.xlane.xlu0 %3183
        %v3185 = vmul.f32 %v3181, %v1720
        %v3186 = vmul.f32 %v3184, %v1720
        %v3187 = vsub.f32 %v3175, %v3185
        %v3188 = vsub.f32 %v3176, %v3186
        %v3189 = vmul.f32 %v3187, %v3187
        %v3190 = vmul.f32 %v3188, %v3188
        %v3191 = vsel %vm530, %v3189, 0.0
        %3192 = vadd.xlane.f32.xlu0 %v3191
        %v3193 = vpop.xlane.xlu0 %3192
        %v3194 = vsel %vm530, %v3190, 0.0
        %3195 = vadd.xlane.f32.xlu0 %v3194
        %v3196 = vpop.xlane.xlu0 %3195
        %v3197 = vmul.f32 %v3193, %v1720
        %v3198 = vmul.f32 %v3196, %v1720
        %v3199 = vadd.f32 %v3197, 1e-05
        %v3200 = vadd.f32 %v3198, 1e-05
        %v3201 = vrsqrt.pop %v3199
        %v3202 = vrsqrt.pop %v3200
        %v3203 = vmul.f32 %v3187, %v3201
        %v3204 = vmul.f32 %v3188, %v3202
        %v3205 = vlaneseq
        %v3206 = vshrl.u32 %v3205, 7
        %v3207 = vsub.s32 0, %v3206
        %v3208 = vrot.slane %v3177, %v3207
        %v3209 = vmul.f32 %v3203, %v3208
        %v3210 = vmul.f32 %v3204, %v3208
        %v3211 = vlaneseq
        %v3212 = vshrl.u32 %v3211, 7
        %v3213 = vsub.s32 0, %v3212
        %v3214 = vrot.slane %v3178, %v3213
        %v3215 = vadd.f32 %v3209, %v3214
        %v3216 = vadd.f32 %v3210, %v3214
        %3217 = vst.msk [vmem:[%s508] sm:$0xff] %vm530, %v3215
        %3218 = vst.msk [vmem:[%s508 + $0x8] sm:$0xff] %vm530, %v3216
        %p3219 = scmp.lt.s32.totalorder %s26, 1
        %s3220 = scalar_select %p3219, %s26, 1
        %s3221 = smul.addr %s3220, 2
        %s3222 = smul.addr %s3221, 8
        %s3223 = scalar_lea.vmem %s13, %s3222
        // Predicated region
        $region81: #{decoder_layer_forward.1} parent=71 // pred_check
          %p3224 = pneg %p332
        $region82: #{decoder_layer_forward.1} parent=71 // pred_check_branch
          %3226 = sbr.rel (%p3224) target = $region84
        $region83: #{decoder_layer_forward.1} parent=71 // pred_region
          _
        $region84: #{decoder_layer_forward.1} parent=71 // pred_fallthru
          _
      $region72: #{decoder_layer_forward.1} parent=5 // pred_fallthru
        _
      %p3227 = scmp.le.s32.totalorder 2, %s21
      // Predicated region
      $region85: #{decoder_layer_forward.1} parent=5 // pred_check
        %p3228 = pneg %p3227
      $region86: #{decoder_layer_forward.1} parent=5 // pred_check_branch
        %3230 = sbr.rel (%p3228) target = $region88
      $region87: #{decoder_layer_forward.1} parent=5 // pred_region
        %s3231 = ssub.s32 %s21, 2
        // Predicated region
        $region89: #{decoder_layer_forward.1} parent=87 // pred_check
          %p3232 = pneg %p338
        $region90: #{decoder_layer_forward.1} parent=87 // pred_check_branch
          %3234 = sbr.rel (%p3232) target = $region92
        $region91: #{decoder_layer_forward.1} parent=87 // pred_region
          %p3235 = scmp.lt.s32.totalorder %s27, 1
          %s3236 = scalar_select %p3235, %s27, 1
          %s3237 = smul.addr %s3236, 2
          %s3238 = smul.addr %s3237, 8
          %s3239 = scalar_lea.vmem %s13, %s3238
        $region92: #{decoder_layer_forward.1} parent=87 // pred_fallthru
          _
      $region88: #{decoder_layer_forward.1} parent=5 // pred_fallthru
        _
    $region6: #{decoder_layer_forward.1} parent=1 // loop_footer
      %s25 = sadd.s32 1, %s21
    $region7: #{decoder_layer_forward.1} parent=1 // loop_footer_branch
      %20 = sbr.rel target = $region3
    $region8: #{decoder_layer_forward.1} parent=1 // loop_exit
      _
    %3240 = vsyncpa [#allocation3], 1
    %s3241 = scalar_lea.sflag [#allocation3], 1
    %3242 = vsyncpa %s3241, 1
    %3243 = vsyncpa [#allocation5], 1

</llo_original>
